<compile_context>
chip_gen: v7x
topology: tpu7x:2x2x1
jax: 0.10.0
libtpu: 0.0.40
codegen_flags: <defaults>
</compile_context>

<pallas_src>
import functools
import math

import jax
import jax.numpy as jnp
from jax.experimental import pallas as pl
from jax.experimental.pallas import tpu as pltpu


KH = 64          # conv taps along L
STRIDE = 2
PAD = 32
C_OUT = 16
POOL = 8
EPS = 1e-5

PHASES = STRIDE * POOL                                            # 16 input samples per pooled row
HALO = 128                                                        # lane-aligned halo block (4 cols used)
NUM_SHIFTS = (STRIDE * (POOL - 1) + KH + PHASES - 1) // PHASES    # 5
M_ROWS = NUM_SHIFTS * PHASES                                      # 80 >= 2*(POOL-1) + KH = 78
CHUNK = 512                                                       # max in-kernel lane chunk


def _soundnet_head_kernel(main_ref, halo_ref, w_hi_ref, w_lo_ref, shift_ref, o_ref, *, ch):
    """One (batch, pooled-length tile) grid step.

    main_ref : (1, 16, TP)   phase-deinterleaved padded signal for this tile's TP pooled rows
                             main[p, j] = x_pad[16*(tile_start + j) + p]
    halo_ref : (1, 16, 128)  next 128 deinterleaved columns (only 4 are actually needed)
    w_hi_ref : (128, 80)     hi bf16 half of the BN-folded, pool-phase-replicated conv weights
                             w[16*v + c, 2*v + k] = conv_w[c, k] * bn_scale[c]
    w_lo_ref : (128, 80)     lo bf16 half (w_hi + w_lo ~= w_f32)
    shift_ref: (16, 1)       fused bias: (conv_b - running_mean) * bn_scale + beta
    o_ref    : (1, 16, TP)   pooled output tile, channels x pooled length (lane-dense)
    """
    tp = o_ref.shape[2]
    n_chunks = tp // ch
    w_hi = w_hi_ref[...]
    w_lo = w_lo_ref[...]
    shift = shift_ref[...]

    for c in range(n_chunks):                       # static unroll; ch is a multiple of 128
        c0 = c * ch
        if c + 1 < n_chunks:
            # Interior chunk: the 4 extra columns needed come straight from the main block.
            base = main_ref[0, :, c0:c0 + ch + HALO]                              # (16, ch+128) f32
        else:
            # Last chunk of the tile: extra columns come from the (small) halo block.
            base = jnp.concatenate([main_ref[0, :, c0:c0 + ch], halo_ref[0]], axis=1)
        # hi/lo bf16 split -> three single-pass bf16 MXU matmuls reproduce the f32 result
        # to ~1e-5 abs (only the w_lo @ m_lo term is dropped); pins the precision path.
        hi = base.astype(jnp.bfloat16)
        lo = (base - hi.astype(jnp.float32)).astype(jnp.bfloat16)
        # Patch matrix built on-chip: m[16*s + p, u] = x_pad[16*(row0 + u) + 16*s + p].
        m_hi = jnp.concatenate([hi[:, s:s + ch] for s in range(NUM_SHIFTS)], axis=0)   # (80, ch)
        m_lo = jnp.concatenate([lo[:, s:s + ch] for s in range(NUM_SHIFTS)], axis=0)   # (80, ch)
        y = (jnp.dot(w_hi, m_hi, preferred_element_type=jnp.float32)
             + jnp.dot(w_lo, m_hi, preferred_element_type=jnp.float32)
             + jnp.dot(w_hi, m_lo, preferred_element_type=jnp.float32))                # (128, ch)
        # Max-pool = max over the 8 phase groups: pairwise tree of sublane-aligned slices.
        m0 = jnp.maximum(y[0 * C_OUT:1 * C_OUT], y[1 * C_OUT:2 * C_OUT])
        m1 = jnp.maximum(y[2 * C_OUT:3 * C_OUT], y[3 * C_OUT:4 * C_OUT])
        m2 = jnp.maximum(y[4 * C_OUT:5 * C_OUT], y[5 * C_OUT:6 * C_OUT])
        m3 = jnp.maximum(y[6 * C_OUT:7 * C_OUT], y[7 * C_OUT:8 * C_OUT])
        acc = jnp.maximum(jnp.maximum(m0, m1), jnp.maximum(m2, m3))
        # relu(max_v(z_v) + shift) == max_v(relu(z_v + shift))  (ReLU monotone, shift const in v)
        o_ref[0, :, c0:c0 + ch] = jnp.maximum(acc + shift, 0.0)


def _round_up(x, m):
    return (x + m - 1) // m * m


def soundnet_head_forward(x_nchw, conv_w, conv_b, gamma, beta, run_mean, run_var,
                          *, tile_pooled=2048):
    """x_nchw: (N, 1, L, 1) float32.  Returns (N, 16, P, 1) float32 (NCHW)."""
    n, cin, length, w = x_nchw.shape
    assert cin == 1 and w == 1

    l_out = (length + 2 * PAD - KH) // STRIDE + 1
    p_out = l_out // POOL
    assert p_out >= 1, "input too short for conv1 + maxpool1"

    # Pooled-length tile: multiple of 128 -> lane-dense input/output blocks, aligned halo.
    tp = max(HALO, min(_round_up(tile_pooled, HALO), _round_up(p_out, HALO)))
    n_tiles = pl.cdiv(p_out, tp)
    # v7x shards "parallel" grid axes across its 2 TensorCores: keep >= 2 grid steps
    # whenever the problem allows instead of one giant tile.
    if n * n_tiles < 2 and p_out > HALO:
        tp = _round_up(pl.cdiv(p_out, 2), HALO)
        n_tiles = pl.cdiv(p_out, tp)
    ch = math.gcd(tp, CHUNK)            # in-kernel lane chunk (128/256/512), divides tp

    # Deinterleave the padded signal into 16 phases: xs16[b, p, j] = x_pad[b, 16*j + p].
    # TODO(synk): this host-side transpose is one extra read+write of the signal through XLA;
    # on v5e it is comparable to the kernel's HBM time -- fold into the kernel if it shows
    # up in profiles.
    r16 = n_tiles * tp + HALO
    total = PHASES * r16
    x = x_nchw[:, 0, :, 0].astype(jnp.float32)                    # (N, L)
    xp = jnp.pad(x, ((0, 0), (PAD, PAD)))                         # (N, L + 64)
    pad_right = total - xp.shape[1]
    assert pad_right >= 0
    xp = jnp.pad(xp, ((0, 0), (0, pad_right)))                    # (N, 16*r16)
    xs16 = jnp.transpose(xp.reshape(n, r16, PHASES), (0, 2, 1))   # (N, 16, r16)

    # Fold BatchNorm (eval mode) into conv weights / bias at trace time.
    inv_std = 1.0 / jnp.sqrt(run_var.astype(jnp.float32) + EPS)
    scale = gamma.astype(jnp.float32) * inv_std                              # (16,)
    w_scaled = conv_w[:, 0, :, 0].astype(jnp.float32) * scale[:, None]       # (16, 64)
    shift = ((conv_b.astype(jnp.float32) - run_mean.astype(jnp.float32)) * scale
             + beta.astype(jnp.float32)).reshape(C_OUT, 1)                   # (16, 1)

    # Replicate scaled weights once per pool phase with a 2-sample offset so a single
    # (128, 80) x (80, chunk) matmul covers all 8 conv rows of every pool window.
    w_all = jnp.zeros((POOL * C_OUT, M_ROWS), jnp.float32)
    for v in range(POOL):
        w_all = w_all.at[v * C_OUT:(v + 1) * C_OUT,
                         STRIDE * v:STRIDE * v + KH].set(w_scaled)
    # hi/lo bf16 split of the weights (done once, at trace time).
    w_hi = w_all.astype(jnp.bfloat16)
    w_lo = (w_all - w_hi.astype(jnp.float32)).astype(jnp.bfloat16)

    halo_blocks = tp // HALO

    out = pl.pallas_call(
        functools.partial(_soundnet_head_kernel, ch=ch),
        out_shape=jax.ShapeDtypeStruct((n, C_OUT, n_tiles * tp), jnp.float32),
        grid=(n, n_tiles),
        in_specs=[
            pl.BlockSpec((1, PHASES, tp), lambda b, t: (b, 0, t)),
            pl.BlockSpec((1, PHASES, HALO), lambda b, t: (b, 0, (t + 1) * halo_blocks)),
            pl.BlockSpec((POOL * C_OUT, M_ROWS), lambda b, t: (0, 0)),
            pl.BlockSpec((POOL * C_OUT, M_ROWS), lambda b, t: (0, 0)),
            pl.BlockSpec((C_OUT, 1), lambda b, t: (0, 0)),
        ],
        out_specs=pl.BlockSpec((1, C_OUT, tp), lambda b, t: (b, 0, t)),
        compiler_params=pltpu.CompilerParams(
            dimension_semantics=("parallel", "parallel"),
            # ~1-2 MiB actually used per step; 32 MiB is v7x's default scoped limit (no-op
            # there) and a deliberate raise on v5e (default 16 MiB of 128 MiB physical).
            vmem_limit_bytes=32 * 1024 * 1024),
    )(xs16, xs16, w_hi, w_lo, shift)

    # Drop the padded pooled tail; output is already channel-major -> just add the W=1 axis.
    return out[:, :, :p_out, None]                                # (N, 16, P, 1) NCHW


def soundnet_head_reference(x_nchw, conv_w, conv_b, gamma, beta, run_mean, run_var):
    """Pure-JAX reference matching PyTorch NCHW conv / BN(eval) / ReLU / maxpool."""
    y = jax.lax.conv_general_dilated(
        x_nchw, conv_w, window_strides=(STRIDE, 1),
        padding=((PAD, PAD), (0, 0)),
        dimension_numbers=("NCHW", "OIHW", "NCHW"),
        precision=jax.lax.Precision.HIGHEST)
    y = y + conv_b[None, :, None, None]
    y = gamma[None, :, None, None] * (y - run_mean[None, :, None, None]) / \
        jnp.sqrt(run_var + EPS)[None, :, None, None] + beta[None, :, None, None]
    y = jnp.maximum(y, 0.0)
    y = jax.lax.reduce_window(
        y, -jnp.inf, jax.lax.max,
        window_dimensions=(1, 1, POOL, 1),
        window_strides=(1, 1, POOL, 1),
        padding="VALID")
    return y


if __name__ == "__main__":
    # TODO(synk): forward()'s print() debug logging and .data.numpy() host conversion have no
    # kernel equivalent and are omitted; only conv1/batchnorm1/relu1/maxpool1 (the layers
    # forward() actually uses) are implemented.  BatchNorm runs in eval mode (running stats).
    key = jax.random.PRNGKey(0)
    k_x, k_w, k_b, k_g, k_beta, k_m, k_v = jax.random.split(key, 7)

    N, L = 2, 20000                              # small "waveform": 1 tile/batch, 5 in-kernel chunks
    x = jax.random.normal(k_x, (N, 1, L, 1), dtype=jnp.float32)

    conv_w = 0.05 * jax.random.normal(k_w, (C_OUT, 1, KH, 1), dtype=jnp.float32)
    conv_b = 0.05 * jax.random.normal(k_b, (C_OUT,), dtype=jnp.float32)
    gamma = 1.0 + 0.1 * jax.random.normal(k_g, (C_OUT,), dtype=jnp.float32)
    beta = 0.1 * jax.random.normal(k_beta, (C_OUT,), dtype=jnp.float32)
    run_mean = 0.1 * jax.random.normal(k_m, (C_OUT,), dtype=jnp.float32)
    run_var = 1.0 + 0.2 * jax.random.uniform(k_v, (C_OUT,), dtype=jnp.float32)

    out = soundnet_head_forward(x, conv_w, conv_b, gamma, beta, run_mean, run_var)
    out = jax.block_until_ready(out)

    ref = soundnet_head_reference(x, conv_w, conv_b, gamma, beta, run_mean, run_var)
    ref = jax.block_until_ready(ref)

    assert out.shape == ref.shape, (out.shape, ref.shape)
    max_err = float(jnp.max(jnp.abs(out - ref)))
    assert jnp.allclose(out, ref, atol=1e-4, rtol=1e-4), f"mismatch vs reference, max abs err={max_err}"

    print("KERNEL_OK")
</pallas_src>

<mosaic_0001>
module attributes {stable_mosaic.version = 11 : i64} {
  func.func @_soundnet_head_kernel(%arg0: i32, %arg1: i32, %arg2: memref<1x16x1280xf32, #tpu.memory_space<vmem>>, %arg3: memref<1x16x128xf32, #tpu.memory_space<vmem>>, %arg4: memref<128x80xbf16, #tpu.memory_space<vmem>>, %arg5: memref<128x80xbf16, #tpu.memory_space<vmem>>, %arg6: memref<16x1xf32, #tpu.memory_space<vmem>>, %arg7: memref<1x16x1280xf32, #tpu.memory_space<vmem>>) attributes {dimension_semantics = [#tpu.dimension_semantics<parallel>, #tpu.dimension_semantics<parallel>], iteration_bounds = array<i64: 2, 1>, scalar_prefetch = 0 : i64, scratch_operands = 0 : i64, tpu.core_type = #tpu.core_type<tc>, window_params = [{transform_indices = @transform_0, window_bounds = array<i64: 1, 16, 1280>}, {transform_indices = @transform_1, window_bounds = array<i64: 1, 16, 128>}, {pipeline_mode = #tpu.pipeline_mode<synchronous>, transform_indices = @transform_2, window_bounds = array<i64: 128, 80>}, {pipeline_mode = #tpu.pipeline_mode<synchronous>, transform_indices = @transform_3, window_bounds = array<i64: 128, 80>}, {pipeline_mode = #tpu.pipeline_mode<synchronous>, transform_indices = @transform_4, window_bounds = array<i64: 16, 1>}, {transform_indices = @transform_5, window_bounds = array<i64: 1, 16, 1280>}]} {
    %c0 = arith.constant 0 : index
    %c0_0 = arith.constant 0 : index
    %0 = vector.load %arg4[%c0, %c0_0] : memref<128x80xbf16, #tpu.memory_space<vmem>>, vector<128x80xbf16>
    %c0_1 = arith.constant 0 : index
    %c0_2 = arith.constant 0 : index
    %1 = vector.load %arg5[%c0_1, %c0_2] : memref<128x80xbf16, #tpu.memory_space<vmem>>, vector<128x80xbf16>
    %c0_3 = arith.constant 0 : index
    %c0_4 = arith.constant 0 : index
    %2 = vector.load %arg6[%c0_3, %c0_4] : memref<16x1xf32, #tpu.memory_space<vmem>>, vector<16x1xf32>
    %c0_5 = arith.constant 0 : index
    %c0_6 = arith.constant 0 : index
    %c0_7 = arith.constant 0 : index
    %3 = vector.load %arg2[%c0_5, %c0_6, %c0_7] : memref<1x16x1280xf32, #tpu.memory_space<vmem>>, vector<1x16x384xf32>
    %4 = vector.shape_cast %3 : vector<1x16x384xf32> to vector<16x384xf32>
    %5 = arith.truncf %4 : vector<16x384xf32> to vector<16x384xbf16>
    %6 = arith.extf %5 : vector<16x384xbf16> to vector<16x384xf32>
    %7 = arith.subf %4, %6 : vector<16x384xf32>
    %8 = arith.truncf %7 : vector<16x384xf32> to vector<16x384xbf16>
    %9 = vector.extract_strided_slice %5 {offsets = [0, 0], sizes = [16, 256], strides = [1, 1]} : vector<16x384xbf16> to vector<16x256xbf16>
    %10 = vector.extract_strided_slice %5 {offsets = [0, 1], sizes = [16, 256], strides = [1, 1]} : vector<16x384xbf16> to vector<16x256xbf16>
    %11 = vector.extract_strided_slice %5 {offsets = [0, 2], sizes = [16, 256], strides = [1, 1]} : vector<16x384xbf16> to vector<16x256xbf16>
    %12 = vector.extract_strided_slice %5 {offsets = [0, 3], sizes = [16, 256], strides = [1, 1]} : vector<16x384xbf16> to vector<16x256xbf16>
    %13 = vector.extract_strided_slice %5 {offsets = [0, 4], sizes = [16, 256], strides = [1, 1]} : vector<16x384xbf16> to vector<16x256xbf16>
    %14 = tpu.concatenate %9, %10, %11, %12, %13 in 0 : vector<16x256xbf16>, vector<16x256xbf16>, vector<16x256xbf16>, vector<16x256xbf16>, vector<16x256xbf16> -> vector<80x256xbf16>
    %15 = vector.extract_strided_slice %8 {offsets = [0, 0], sizes = [16, 256], strides = [1, 1]} : vector<16x384xbf16> to vector<16x256xbf16>
    %16 = vector.extract_strided_slice %8 {offsets = [0, 1], sizes = [16, 256], strides = [1, 1]} : vector<16x384xbf16> to vector<16x256xbf16>
    %17 = vector.extract_strided_slice %8 {offsets = [0, 2], sizes = [16, 256], strides = [1, 1]} : vector<16x384xbf16> to vector<16x256xbf16>
    %18 = vector.extract_strided_slice %8 {offsets = [0, 3], sizes = [16, 256], strides = [1, 1]} : vector<16x384xbf16> to vector<16x256xbf16>
    %19 = vector.extract_strided_slice %8 {offsets = [0, 4], sizes = [16, 256], strides = [1, 1]} : vector<16x384xbf16> to vector<16x256xbf16>
    %20 = tpu.concatenate %15, %16, %17, %18, %19 in 0 : vector<16x256xbf16>, vector<16x256xbf16>, vector<16x256xbf16>, vector<16x256xbf16>, vector<16x256xbf16> -> vector<80x256xbf16>
    %cst = arith.constant dense<0.000000e+00> : vector<128x256xf32>
    %21 = tpu.matmul %0, %14, %cst {dimension_numbers = #tpu.dot_dimension_numbers<[1], [0], [0], [1], [0, 0, 1, 1], [], []>} : vector<128x80xbf16>, vector<80x256xbf16>, vector<128x256xf32> -> vector<128x256xf32>
    %cst_8 = arith.constant dense<0.000000e+00> : vector<128x256xf32>
    %22 = tpu.matmul %1, %14, %cst_8 {dimension_numbers = #tpu.dot_dimension_numbers<[1], [0], [0], [1], [0, 0, 1, 1], [], []>} : vector<128x80xbf16>, vector<80x256xbf16>, vector<128x256xf32> -> vector<128x256xf32>
    %23 = arith.addf %21, %22 : vector<128x256xf32>
    %cst_9 = arith.constant dense<0.000000e+00> : vector<128x256xf32>
    %24 = tpu.matmul %0, %20, %cst_9 {dimension_numbers = #tpu.dot_dimension_numbers<[1], [0], [0], [1], [0, 0, 1, 1], [], []>} : vector<128x80xbf16>, vector<80x256xbf16>, vector<128x256xf32> -> vector<128x256xf32>
    %25 = arith.addf %23, %24 : vector<128x256xf32>
    %26 = vector.extract_strided_slice %25 {offsets = [0, 0], sizes = [16, 256], strides = [1, 1]} : vector<128x256xf32> to vector<16x256xf32>
    %27 = vector.extract_strided_slice %25 {offsets = [16, 0], sizes = [16, 256], strides = [1, 1]} : vector<128x256xf32> to vector<16x256xf32>
    %28 = arith.maximumf %26, %27 : vector<16x256xf32>
    %29 = vector.extract_strided_slice %25 {offsets = [32, 0], sizes = [16, 256], strides = [1, 1]} : vector<128x256xf32> to vector<16x256xf32>
    %30 = vector.extract_strided_slice %25 {offsets = [48, 0], sizes = [16, 256], strides = [1, 1]} : vector<128x256xf32> to vector<16x256xf32>
    %31 = arith.maximumf %29, %30 : vector<16x256xf32>
    %32 = vector.extract_strided_slice %25 {offsets = [64, 0], sizes = [16, 256], strides = [1, 1]} : vector<128x256xf32> to vector<16x256xf32>
    %33 = vector.extract_strided_slice %25 {offsets = [80, 0], sizes = [16, 256], strides = [1, 1]} : vector<128x256xf32> to vector<16x256xf32>
    %34 = arith.maximumf %32, %33 : vector<16x256xf32>
    %35 = vector.extract_strided_slice %25 {offsets = [96, 0], sizes = [16, 256], strides = [1, 1]} : vector<128x256xf32> to vector<16x256xf32>
    %36 = vector.extract_strided_slice %25 {offsets = [112, 0], sizes = [16, 256], strides = [1, 1]} : vector<128x256xf32> to vector<16x256xf32>
    %37 = arith.maximumf %35, %36 : vector<16x256xf32>
    %38 = arith.maximumf %28, %31 : vector<16x256xf32>
    %39 = arith.maximumf %34, %37 : vector<16x256xf32>
    %40 = arith.maximumf %38, %39 : vector<16x256xf32>
    %41 = vector.broadcast %2 : vector<16x1xf32> to vector<16x256xf32>
    %42 = arith.addf %40, %41 : vector<16x256xf32>
    %cst_10 = arith.constant 0.000000e+00 : f32
    %43 = vector.broadcast %cst_10 : f32 to vector<16x256xf32>
    %44 = arith.maximumf %42, %43 : vector<16x256xf32>
    %c0_11 = arith.constant 0 : index
    %c0_12 = arith.constant 0 : index
    %c0_13 = arith.constant 0 : index
    %45 = vector.load %arg7[%c0_11, %c0_12, %c0_13] : memref<1x16x1280xf32, #tpu.memory_space<vmem>>, vector<1x16x256xf32>
    %46 = vector.shape_cast %45 : vector<1x16x256xf32> to vector<16x256xf32>
    %47 = vector.shape_cast %44 : vector<16x256xf32> to vector<1x16x256xf32>
    tpu.vector_store %arg7[%c0_11, %c0_12, %c0_13], %47 {strides = array<i32>} : memref<1x16x1280xf32, #tpu.memory_space<vmem>>, vector<1x16x256xf32>,
    %c0_14 = arith.constant 0 : index
    %c0_15 = arith.constant 0 : index
    %c256 = arith.constant 256 : index
    %48 = vector.load %arg2[%c0_14, %c0_15, %c256] : memref<1x16x1280xf32, #tpu.memory_space<vmem>>, vector<1x16x384xf32>
    %49 = vector.shape_cast %48 : vector<1x16x384xf32> to vector<16x384xf32>
    %50 = arith.truncf %49 : vector<16x384xf32> to vector<16x384xbf16>
    %51 = arith.extf %50 : vector<16x384xbf16> to vector<16x384xf32>
    %52 = arith.subf %49, %51 : vector<16x384xf32>
    %53 = arith.truncf %52 : vector<16x384xf32> to vector<16x384xbf16>
    %54 = vector.extract_strided_slice %50 {offsets = [0, 0], sizes = [16, 256], strides = [1, 1]} : vector<16x384xbf16> to vector<16x256xbf16>
    %55 = vector.extract_strided_slice %50 {offsets = [0, 1], sizes = [16, 256], strides = [1, 1]} : vector<16x384xbf16> to vector<16x256xbf16>
    %56 = vector.extract_strided_slice %50 {offsets = [0, 2], sizes = [16, 256], strides = [1, 1]} : vector<16x384xbf16> to vector<16x256xbf16>
    %57 = vector.extract_strided_slice %50 {offsets = [0, 3], sizes = [16, 256], strides = [1, 1]} : vector<16x384xbf16> to vector<16x256xbf16>
    %58 = vector.extract_strided_slice %50 {offsets = [0, 4], sizes = [16, 256], strides = [1, 1]} : vector<16x384xbf16> to vector<16x256xbf16>
    %59 = tpu.concatenate %54, %55, %56, %57, %58 in 0 : vector<16x256xbf16>, vector<16x256xbf16>, vector<16x256xbf16>, vector<16x256xbf16>, vector<16x256xbf16> -> vector<80x256xbf16>
    %60 = vector.extract_strided_slice %53 {offsets = [0, 0], sizes = [16, 256], strides = [1, 1]} : vector<16x384xbf16> to vector<16x256xbf16>
    %61 = vector.extract_strided_slice %53 {offsets = [0, 1], sizes = [16, 256], strides = [1, 1]} : vector<16x384xbf16> to vector<16x256xbf16>
    %62 = vector.extract_strided_slice %53 {offsets = [0, 2], sizes = [16, 256], strides = [1, 1]} : vector<16x384xbf16> to vector<16x256xbf16>
    %63 = vector.extract_strided_slice %53 {offsets = [0, 3], sizes = [16, 256], strides = [1, 1]} : vector<16x384xbf16> to vector<16x256xbf16>
    %64 = vector.extract_strided_slice %53 {offsets = [0, 4], sizes = [16, 256], strides = [1, 1]} : vector<16x384xbf16> to vector<16x256xbf16>
    %65 = tpu.concatenate %60, %61, %62, %63, %64 in 0 : vector<16x256xbf16>, vector<16x256xbf16>, vector<16x256xbf16>, vector<16x256xbf16>, vector<16x256xbf16> -> vector<80x256xbf16>
    %cst_16 = arith.constant dense<0.000000e+00> : vector<128x256xf32>
    %66 = tpu.matmul %0, %59, %cst_16 {dimension_numbers = #tpu.dot_dimension_numbers<[1], [0], [0], [1], [0, 0, 1, 1], [], []>} : vector<128x80xbf16>, vector<80x256xbf16>, vector<128x256xf32> -> vector<128x256xf32>
    %cst_17 = arith.constant dense<0.000000e+00> : vector<128x256xf32>
    %67 = tpu.matmul %1, %59, %cst_17 {dimension_numbers = #tpu.dot_dimension_numbers<[1], [0], [0], [1], [0, 0, 1, 1], [], []>} : vector<128x80xbf16>, vector<80x256xbf16>, vector<128x256xf32> -> vector<128x256xf32>
    %68 = arith.addf %66, %67 : vector<128x256xf32>
    %cst_18 = arith.constant dense<0.000000e+00> : vector<128x256xf32>
    %69 = tpu.matmul %0, %65, %cst_18 {dimension_numbers = #tpu.dot_dimension_numbers<[1], [0], [0], [1], [0, 0, 1, 1], [], []>} : vector<128x80xbf16>, vector<80x256xbf16>, vector<128x256xf32> -> vector<128x256xf32>
    %70 = arith.addf %68, %69 : vector<128x256xf32>
    %71 = vector.extract_strided_slice %70 {offsets = [0, 0], sizes = [16, 256], strides = [1, 1]} : vector<128x256xf32> to vector<16x256xf32>
    %72 = vector.extract_strided_slice %70 {offsets = [16, 0], sizes = [16, 256], strides = [1, 1]} : vector<128x256xf32> to vector<16x256xf32>
    %73 = arith.maximumf %71, %72 : vector<16x256xf32>
    %74 = vector.extract_strided_slice %70 {offsets = [32, 0], sizes = [16, 256], strides = [1, 1]} : vector<128x256xf32> to vector<16x256xf32>
    %75 = vector.extract_strided_slice %70 {offsets = [48, 0], sizes = [16, 256], strides = [1, 1]} : vector<128x256xf32> to vector<16x256xf32>
    %76 = arith.maximumf %74, %75 : vector<16x256xf32>
    %77 = vector.extract_strided_slice %70 {offsets = [64, 0], sizes = [16, 256], strides = [1, 1]} : vector<128x256xf32> to vector<16x256xf32>
    %78 = vector.extract_strided_slice %70 {offsets = [80, 0], sizes = [16, 256], strides = [1, 1]} : vector<128x256xf32> to vector<16x256xf32>
    %79 = arith.maximumf %77, %78 : vector<16x256xf32>
    %80 = vector.extract_strided_slice %70 {offsets = [96, 0], sizes = [16, 256], strides = [1, 1]} : vector<128x256xf32> to vector<16x256xf32>
    %81 = vector.extract_strided_slice %70 {offsets = [112, 0], sizes = [16, 256], strides = [1, 1]} : vector<128x256xf32> to vector<16x256xf32>
    %82 = arith.maximumf %80, %81 : vector<16x256xf32>
    %83 = arith.maximumf %73, %76 : vector<16x256xf32>
    %84 = arith.maximumf %79, %82 : vector<16x256xf32>
    %85 = arith.maximumf %83, %84 : vector<16x256xf32>
    %86 = vector.broadcast %2 : vector<16x1xf32> to vector<16x256xf32>
    %87 = arith.addf %85, %86 : vector<16x256xf32>
    %cst_19 = arith.constant 0.000000e+00 : f32
    %88 = vector.broadcast %cst_19 : f32 to vector<16x256xf32>
    %89 = arith.maximumf %87, %88 : vector<16x256xf32>
    %c0_20 = arith.constant 0 : index
    %c0_21 = arith.constant 0 : index
    %c256_22 = arith.constant 256 : index
    %90 = vector.load %arg7[%c0_20, %c0_21, %c256_22] : memref<1x16x1280xf32, #tpu.memory_space<vmem>>, vector<1x16x256xf32>
    %91 = vector.shape_cast %90 : vector<1x16x256xf32> to vector<16x256xf32>
    %92 = vector.shape_cast %89 : vector<16x256xf32> to vector<1x16x256xf32>
    tpu.vector_store %arg7[%c0_20, %c0_21, %c256_22], %92 {strides = array<i32>} : memref<1x16x1280xf32, #tpu.memory_space<vmem>>, vector<1x16x256xf32>,
    %c0_23 = arith.constant 0 : index
    %c0_24 = arith.constant 0 : index
    %c512 = arith.constant 512 : index
    %93 = vector.load %arg2[%c0_23, %c0_24, %c512] : memref<1x16x1280xf32, #tpu.memory_space<vmem>>, vector<1x16x384xf32>
    %94 = vector.shape_cast %93 : vector<1x16x384xf32> to vector<16x384xf32>
    %95 = arith.truncf %94 : vector<16x384xf32> to vector<16x384xbf16>
    %96 = arith.extf %95 : vector<16x384xbf16> to vector<16x384xf32>
    %97 = arith.subf %94, %96 : vector<16x384xf32>
    %98 = arith.truncf %97 : vector<16x384xf32> to vector<16x384xbf16>
    %99 = vector.extract_strided_slice %95 {offsets = [0, 0], sizes = [16, 256], strides = [1, 1]} : vector<16x384xbf16> to vector<16x256xbf16>
    %100 = vector.extract_strided_slice %95 {offsets = [0, 1], sizes = [16, 256], strides = [1, 1]} : vector<16x384xbf16> to vector<16x256xbf16>
    %101 = vector.extract_strided_slice %95 {offsets = [0, 2], sizes = [16, 256], strides = [1, 1]} : vector<16x384xbf16> to vector<16x256xbf16>
    %102 = vector.extract_strided_slice %95 {offsets = [0, 3], sizes = [16, 256], strides = [1, 1]} : vector<16x384xbf16> to vector<16x256xbf16>
    %103 = vector.extract_strided_slice %95 {offsets = [0, 4], sizes = [16, 256], strides = [1, 1]} : vector<16x384xbf16> to vector<16x256xbf16>
    %104 = tpu.concatenate %99, %100, %101, %102, %103 in 0 : vector<16x256xbf16>, vector<16x256xbf16>, vector<16x256xbf16>, vector<16x256xbf16>, vector<16x256xbf16> -> vector<80x256xbf16>
    %105 = vector.extract_strided_slice %98 {offsets = [0, 0], sizes = [16, 256], strides = [1, 1]} : vector<16x384xbf16> to vector<16x256xbf16>
    %106 = vector.extract_strided_slice %98 {offsets = [0, 1], sizes = [16, 256], strides = [1, 1]} : vector<16x384xbf16> to vector<16x256xbf16>
    %107 = vector.extract_strided_slice %98 {offsets = [0, 2], sizes = [16, 256], strides = [1, 1]} : vector<16x384xbf16> to vector<16x256xbf16>
    %108 = vector.extract_strided_slice %98 {offsets = [0, 3], sizes = [16, 256], strides = [1, 1]} : vector<16x384xbf16> to vector<16x256xbf16>
    %109 = vector.extract_strided_slice %98 {offsets = [0, 4], sizes = [16, 256], strides = [1, 1]} : vector<16x384xbf16> to vector<16x256xbf16>
    %110 = tpu.concatenate %105, %106, %107, %108, %109 in 0 : vector<16x256xbf16>, vector<16x256xbf16>, vector<16x256xbf16>, vector<16x256xbf16>, vector<16x256xbf16> -> vector<80x256xbf16>
    %cst_25 = arith.constant dense<0.000000e+00> : vector<128x256xf32>
    %111 = tpu.matmul %0, %104, %cst_25 {dimension_numbers = #tpu.dot_dimension_numbers<[1], [0], [0], [1], [0, 0, 1, 1], [], []>} : vector<128x80xbf16>, vector<80x256xbf16>, vector<128x256xf32> -> vector<128x256xf32>
    %cst_26 = arith.constant dense<0.000000e+00> : vector<128x256xf32>
    %112 = tpu.matmul %1, %104, %cst_26 {dimension_numbers = #tpu.dot_dimension_numbers<[1], [0], [0], [1], [0, 0, 1, 1], [], []>} : vector<128x80xbf16>, vector<80x256xbf16>, vector<128x256xf32> -> vector<128x256xf32>
    %113 = arith.addf %111, %112 : vector<128x256xf32>
    %cst_27 = arith.constant dense<0.000000e+00> : vector<128x256xf32>
    %114 = tpu.matmul %0, %110, %cst_27 {dimension_numbers = #tpu.dot_dimension_numbers<[1], [0], [0], [1], [0, 0, 1, 1], [], []>} : vector<128x80xbf16>, vector<80x256xbf16>, vector<128x256xf32> -> vector<128x256xf32>
    %115 = arith.addf %113, %114 : vector<128x256xf32>
    %116 = vector.extract_strided_slice %115 {offsets = [0, 0], sizes = [16, 256], strides = [1, 1]} : vector<128x256xf32> to vector<16x256xf32>
    %117 = vector.extract_strided_slice %115 {offsets = [16, 0], sizes = [16, 256], strides = [1, 1]} : vector<128x256xf32> to vector<16x256xf32>
    %118 = arith.maximumf %116, %117 : vector<16x256xf32>
    %119 = vector.extract_strided_slice %115 {offsets = [32, 0], sizes = [16, 256], strides = [1, 1]} : vector<128x256xf32> to vector<16x256xf32>
    %120 = vector.extract_strided_slice %115 {offsets = [48, 0], sizes = [16, 256], strides = [1, 1]} : vector<128x256xf32> to vector<16x256xf32>
    %121 = arith.maximumf %119, %120 : vector<16x256xf32>
    %122 = vector.extract_strided_slice %115 {offsets = [64, 0], sizes = [16, 256], strides = [1, 1]} : vector<128x256xf32> to vector<16x256xf32>
    %123 = vector.extract_strided_slice %115 {offsets = [80, 0], sizes = [16, 256], strides = [1, 1]} : vector<128x256xf32> to vector<16x256xf32>
    %124 = arith.maximumf %122, %123 : vector<16x256xf32>
    %125 = vector.extract_strided_slice %115 {offsets = [96, 0], sizes = [16, 256], strides = [1, 1]} : vector<128x256xf32> to vector<16x256xf32>
    %126 = vector.extract_strided_slice %115 {offsets = [112, 0], sizes = [16, 256], strides = [1, 1]} : vector<128x256xf32> to vector<16x256xf32>
    %127 = arith.maximumf %125, %126 : vector<16x256xf32>
    %128 = arith.maximumf %118, %121 : vector<16x256xf32>
    %129 = arith.maximumf %124, %127 : vector<16x256xf32>
    %130 = arith.maximumf %128, %129 : vector<16x256xf32>
    %131 = vector.broadcast %2 : vector<16x1xf32> to vector<16x256xf32>
    %132 = arith.addf %130, %131 : vector<16x256xf32>
    %cst_28 = arith.constant 0.000000e+00 : f32
    %133 = vector.broadcast %cst_28 : f32 to vector<16x256xf32>
    %134 = arith.maximumf %132, %133 : vector<16x256xf32>
    %c0_29 = arith.constant 0 : index
    %c0_30 = arith.constant 0 : index
    %c512_31 = arith.constant 512 : index
    %135 = vector.load %arg7[%c0_29, %c0_30, %c512_31] : memref<1x16x1280xf32, #tpu.memory_space<vmem>>, vector<1x16x256xf32>
    %136 = vector.shape_cast %135 : vector<1x16x256xf32> to vector<16x256xf32>
    %137 = vector.shape_cast %134 : vector<16x256xf32> to vector<1x16x256xf32>
    tpu.vector_store %arg7[%c0_29, %c0_30, %c512_31], %137 {strides = array<i32>} : memref<1x16x1280xf32, #tpu.memory_space<vmem>>, vector<1x16x256xf32>,
    %c0_32 = arith.constant 0 : index
    %c0_33 = arith.constant 0 : index
    %c768 = arith.constant 768 : index
    %138 = vector.load %arg2[%c0_32, %c0_33, %c768] : memref<1x16x1280xf32, #tpu.memory_space<vmem>>, vector<1x16x384xf32>
    %139 = vector.shape_cast %138 : vector<1x16x384xf32> to vector<16x384xf32>
    %140 = arith.truncf %139 : vector<16x384xf32> to vector<16x384xbf16>
    %141 = arith.extf %140 : vector<16x384xbf16> to vector<16x384xf32>
    %142 = arith.subf %139, %141 : vector<16x384xf32>
    %143 = arith.truncf %142 : vector<16x384xf32> to vector<16x384xbf16>
    %144 = vector.extract_strided_slice %140 {offsets = [0, 0], sizes = [16, 256], strides = [1, 1]} : vector<16x384xbf16> to vector<16x256xbf16>
    %145 = vector.extract_strided_slice %140 {offsets = [0, 1], sizes = [16, 256], strides = [1, 1]} : vector<16x384xbf16> to vector<16x256xbf16>
    %146 = vector.extract_strided_slice %140 {offsets = [0, 2], sizes = [16, 256], strides = [1, 1]} : vector<16x384xbf16> to vector<16x256xbf16>
    %147 = vector.extract_strided_slice %140 {offsets = [0, 3], sizes = [16, 256], strides = [1, 1]} : vector<16x384xbf16> to vector<16x256xbf16>
    %148 = vector.extract_strided_slice %140 {offsets = [0, 4], sizes = [16, 256], strides = [1, 1]} : vector<16x384xbf16> to vector<16x256xbf16>
    %149 = tpu.concatenate %144, %145, %146, %147, %148 in 0 : vector<16x256xbf16>, vector<16x256xbf16>, vector<16x256xbf16>, vector<16x256xbf16>, vector<16x256xbf16> -> vector<80x256xbf16>
    %150 = vector.extract_strided_slice %143 {offsets = [0, 0], sizes = [16, 256], strides = [1, 1]} : vector<16x384xbf16> to vector<16x256xbf16>
    %151 = vector.extract_strided_slice %143 {offsets = [0, 1], sizes = [16, 256], strides = [1, 1]} : vector<16x384xbf16> to vector<16x256xbf16>
    %152 = vector.extract_strided_slice %143 {offsets = [0, 2], sizes = [16, 256], strides = [1, 1]} : vector<16x384xbf16> to vector<16x256xbf16>
    %153 = vector.extract_strided_slice %143 {offsets = [0, 3], sizes = [16, 256], strides = [1, 1]} : vector<16x384xbf16> to vector<16x256xbf16>
    %154 = vector.extract_strided_slice %143 {offsets = [0, 4], sizes = [16, 256], strides = [1, 1]} : vector<16x384xbf16> to vector<16x256xbf16>
    %155 = tpu.concatenate %150, %151, %152, %153, %154 in 0 : vector<16x256xbf16>, vector<16x256xbf16>, vector<16x256xbf16>, vector<16x256xbf16>, vector<16x256xbf16> -> vector<80x256xbf16>
    %cst_34 = arith.constant dense<0.000000e+00> : vector<128x256xf32>
    %156 = tpu.matmul %0, %149, %cst_34 {dimension_numbers = #tpu.dot_dimension_numbers<[1], [0], [0], [1], [0, 0, 1, 1], [], []>} : vector<128x80xbf16>, vector<80x256xbf16>, vector<128x256xf32> -> vector<128x256xf32>
    %cst_35 = arith.constant dense<0.000000e+00> : vector<128x256xf32>
    %157 = tpu.matmul %1, %149, %cst_35 {dimension_numbers = #tpu.dot_dimension_numbers<[1], [0], [0], [1], [0, 0, 1, 1], [], []>} : vector<128x80xbf16>, vector<80x256xbf16>, vector<128x256xf32> -> vector<128x256xf32>
    %158 = arith.addf %156, %157 : vector<128x256xf32>
    %cst_36 = arith.constant dense<0.000000e+00> : vector<128x256xf32>
    %159 = tpu.matmul %0, %155, %cst_36 {dimension_numbers = #tpu.dot_dimension_numbers<[1], [0], [0], [1], [0, 0, 1, 1], [], []>} : vector<128x80xbf16>, vector<80x256xbf16>, vector<128x256xf32> -> vector<128x256xf32>
    %160 = arith.addf %158, %159 : vector<128x256xf32>
    %161 = vector.extract_strided_slice %160 {offsets = [0, 0], sizes = [16, 256], strides = [1, 1]} : vector<128x256xf32> to vector<16x256xf32>
    %162 = vector.extract_strided_slice %160 {offsets = [16, 0], sizes = [16, 256], strides = [1, 1]} : vector<128x256xf32> to vector<16x256xf32>
    %163 = arith.maximumf %161, %162 : vector<16x256xf32>
    %164 = vector.extract_strided_slice %160 {offsets = [32, 0], sizes = [16, 256], strides = [1, 1]} : vector<128x256xf32> to vector<16x256xf32>
    %165 = vector.extract_strided_slice %160 {offsets = [48, 0], sizes = [16, 256], strides = [1, 1]} : vector<128x256xf32> to vector<16x256xf32>
    %166 = arith.maximumf %164, %165 : vector<16x256xf32>
    %167 = vector.extract_strided_slice %160 {offsets = [64, 0], sizes = [16, 256], strides = [1, 1]} : vector<128x256xf32> to vector<16x256xf32>
    %168 = vector.extract_strided_slice %160 {offsets = [80, 0], sizes = [16, 256], strides = [1, 1]} : vector<128x256xf32> to vector<16x256xf32>
    %169 = arith.maximumf %167, %168 : vector<16x256xf32>
    %170 = vector.extract_strided_slice %160 {offsets = [96, 0], sizes = [16, 256], strides = [1, 1]} : vector<128x256xf32> to vector<16x256xf32>
    %171 = vector.extract_strided_slice %160 {offsets = [112, 0], sizes = [16, 256], strides = [1, 1]} : vector<128x256xf32> to vector<16x256xf32>
    %172 = arith.maximumf %170, %171 : vector<16x256xf32>
    %173 = arith.maximumf %163, %166 : vector<16x256xf32>
    %174 = arith.maximumf %169, %172 : vector<16x256xf32>
    %175 = arith.maximumf %173, %174 : vector<16x256xf32>
    %176 = vector.broadcast %2 : vector<16x1xf32> to vector<16x256xf32>
    %177 = arith.addf %175, %176 : vector<16x256xf32>
    %cst_37 = arith.constant 0.000000e+00 : f32
    %178 = vector.broadcast %cst_37 : f32 to vector<16x256xf32>
    %179 = arith.maximumf %177, %178 : vector<16x256xf32>
    %c0_38 = arith.constant 0 : index
    %c0_39 = arith.constant 0 : index
    %c768_40 = arith.constant 768 : index
    %180 = vector.load %arg7[%c0_38, %c0_39, %c768_40] : memref<1x16x1280xf32, #tpu.memory_space<vmem>>, vector<1x16x256xf32>
    %181 = vector.shape_cast %180 : vector<1x16x256xf32> to vector<16x256xf32>
    %182 = vector.shape_cast %179 : vector<16x256xf32> to vector<1x16x256xf32>
    tpu.vector_store %arg7[%c0_38, %c0_39, %c768_40], %182 {strides = array<i32>} : memref<1x16x1280xf32, #tpu.memory_space<vmem>>, vector<1x16x256xf32>,
    %c0_41 = arith.constant 0 : index
    %c0_42 = arith.constant 0 : index
    %c1024 = arith.constant 1024 : index
    %183 = vector.load %arg2[%c0_41, %c0_42, %c1024] : memref<1x16x1280xf32, #tpu.memory_space<vmem>>, vector<1x16x256xf32>
    %184 = vector.shape_cast %183 : vector<1x16x256xf32> to vector<16x256xf32>
    %c0_43 = arith.constant 0 : index
    %c0_44 = arith.constant 0 : index
    %c0_45 = arith.constant 0 : index
    %185 = vector.load %arg3[%c0_43, %c0_44, %c0_45] : memref<1x16x128xf32, #tpu.memory_space<vmem>>, vector<1x16x128xf32>
    %186 = vector.shape_cast %185 : vector<1x16x128xf32> to vector<16x128xf32>
    %187 = tpu.concatenate %184, %186 in 1 : vector<16x256xf32>, vector<16x128xf32> -> vector<16x384xf32>
    %188 = arith.truncf %187 : vector<16x384xf32> to vector<16x384xbf16>
    %189 = arith.extf %188 : vector<16x384xbf16> to vector<16x384xf32>
    %190 = arith.subf %187, %189 : vector<16x384xf32>
    %191 = arith.truncf %190 : vector<16x384xf32> to vector<16x384xbf16>
    %192 = vector.extract_strided_slice %188 {offsets = [0, 0], sizes = [16, 256], strides = [1, 1]} : vector<16x384xbf16> to vector<16x256xbf16>
    %193 = vector.extract_strided_slice %188 {offsets = [0, 1], sizes = [16, 256], strides = [1, 1]} : vector<16x384xbf16> to vector<16x256xbf16>
    %194 = vector.extract_strided_slice %188 {offsets = [0, 2], sizes = [16, 256], strides = [1, 1]} : vector<16x384xbf16> to vector<16x256xbf16>
    %195 = vector.extract_strided_slice %188 {offsets = [0, 3], sizes = [16, 256], strides = [1, 1]} : vector<16x384xbf16> to vector<16x256xbf16>
    %196 = vector.extract_strided_slice %188 {offsets = [0, 4], sizes = [16, 256], strides = [1, 1]} : vector<16x384xbf16> to vector<16x256xbf16>
    %197 = tpu.concatenate %192, %193, %194, %195, %196 in 0 : vector<16x256xbf16>, vector<16x256xbf16>, vector<16x256xbf16>, vector<16x256xbf16>, vector<16x256xbf16> -> vector<80x256xbf16>
    %198 = vector.extract_strided_slice %191 {offsets = [0, 0], sizes = [16, 256], strides = [1, 1]} : vector<16x384xbf16> to vector<16x256xbf16>
    %199 = vector.extract_strided_slice %191 {offsets = [0, 1], sizes = [16, 256], strides = [1, 1]} : vector<16x384xbf16> to vector<16x256xbf16>
    %200 = vector.extract_strided_slice %191 {offsets = [0, 2], sizes = [16, 256], strides = [1, 1]} : vector<16x384xbf16> to vector<16x256xbf16>
    %201 = vector.extract_strided_slice %191 {offsets = [0, 3], sizes = [16, 256], strides = [1, 1]} : vector<16x384xbf16> to vector<16x256xbf16>
    %202 = vector.extract_strided_slice %191 {offsets = [0, 4], sizes = [16, 256], strides = [1, 1]} : vector<16x384xbf16> to vector<16x256xbf16>
    %203 = tpu.concatenate %198, %199, %200, %201, %202 in 0 : vector<16x256xbf16>, vector<16x256xbf16>, vector<16x256xbf16>, vector<16x256xbf16>, vector<16x256xbf16> -> vector<80x256xbf16>
    %cst_46 = arith.constant dense<0.000000e+00> : vector<128x256xf32>
    %204 = tpu.matmul %0, %197, %cst_46 {dimension_numbers = #tpu.dot_dimension_numbers<[1], [0], [0], [1], [0, 0, 1, 1], [], []>} : vector<128x80xbf16>, vector<80x256xbf16>, vector<128x256xf32> -> vector<128x256xf32>
    %cst_47 = arith.constant dense<0.000000e+00> : vector<128x256xf32>
    %205 = tpu.matmul %1, %197, %cst_47 {dimension_numbers = #tpu.dot_dimension_numbers<[1], [0], [0], [1], [0, 0, 1, 1], [], []>} : vector<128x80xbf16>, vector<80x256xbf16>, vector<128x256xf32> -> vector<128x256xf32>
    %206 = arith.addf %204, %205 : vector<128x256xf32>
    %cst_48 = arith.constant dense<0.000000e+00> : vector<128x256xf32>
    %207 = tpu.matmul %0, %203, %cst_48 {dimension_numbers = #tpu.dot_dimension_numbers<[1], [0], [0], [1], [0, 0, 1, 1], [], []>} : vector<128x80xbf16>, vector<80x256xbf16>, vector<128x256xf32> -> vector<128x256xf32>
    %208 = arith.addf %206, %207 : vector<128x256xf32>
    %209 = vector.extract_strided_slice %208 {offsets = [0, 0], sizes = [16, 256], strides = [1, 1]} : vector<128x256xf32> to vector<16x256xf32>
    %210 = vector.extract_strided_slice %208 {offsets = [16, 0], sizes = [16, 256], strides = [1, 1]} : vector<128x256xf32> to vector<16x256xf32>
    %211 = arith.maximumf %209, %210 : vector<16x256xf32>
    %212 = vector.extract_strided_slice %208 {offsets = [32, 0], sizes = [16, 256], strides = [1, 1]} : vector<128x256xf32> to vector<16x256xf32>
    %213 = vector.extract_strided_slice %208 {offsets = [48, 0], sizes = [16, 256], strides = [1, 1]} : vector<128x256xf32> to vector<16x256xf32>
    %214 = arith.maximumf %212, %213 : vector<16x256xf32>
    %215 = vector.extract_strided_slice %208 {offsets = [64, 0], sizes = [16, 256], strides = [1, 1]} : vector<128x256xf32> to vector<16x256xf32>
    %216 = vector.extract_strided_slice %208 {offsets = [80, 0], sizes = [16, 256], strides = [1, 1]} : vector<128x256xf32> to vector<16x256xf32>
    %217 = arith.maximumf %215, %216 : vector<16x256xf32>
    %218 = vector.extract_strided_slice %208 {offsets = [96, 0], sizes = [16, 256], strides = [1, 1]} : vector<128x256xf32> to vector<16x256xf32>
    %219 = vector.extract_strided_slice %208 {offsets = [112, 0], sizes = [16, 256], strides = [1, 1]} : vector<128x256xf32> to vector<16x256xf32>
    %220 = arith.maximumf %218, %219 : vector<16x256xf32>
    %221 = arith.maximumf %211, %214 : vector<16x256xf32>
    %222 = arith.maximumf %217, %220 : vector<16x256xf32>
    %223 = arith.maximumf %221, %222 : vector<16x256xf32>
    %224 = vector.broadcast %2 : vector<16x1xf32> to vector<16x256xf32>
    %225 = arith.addf %223, %224 : vector<16x256xf32>
    %cst_49 = arith.constant 0.000000e+00 : f32
    %226 = vector.broadcast %cst_49 : f32 to vector<16x256xf32>
    %227 = arith.maximumf %225, %226 : vector<16x256xf32>
    %c0_50 = arith.constant 0 : index
    %c0_51 = arith.constant 0 : index
    %c1024_52 = arith.constant 1024 : index
    %228 = vector.load %arg7[%c0_50, %c0_51, %c1024_52] : memref<1x16x1280xf32, #tpu.memory_space<vmem>>, vector<1x16x256xf32>
    %229 = vector.shape_cast %228 : vector<1x16x256xf32> to vector<16x256xf32>
    %230 = vector.shape_cast %227 : vector<16x256xf32> to vector<1x16x256xf32>
    tpu.vector_store %arg7[%c0_50, %c0_51, %c1024_52], %230 {strides = array<i32>} : memref<1x16x1280xf32, #tpu.memory_space<vmem>>, vector<1x16x256xf32>,
    return
  }
  func.func @transform_0(%arg0: i32, %arg1: i32) -> (i32, i32, i32) {
    %c0_i32 = arith.constant 0 : i32
    %c0_i32_0 = arith.constant 0 : i32
    return %arg0, %c0_i32, %arg1 : i32, i32, i32
  }
  func.func @transform_1(%arg0: i32, %arg1: i32) -> (i32, i32, i32) {
    %c1_i32 = arith.constant 1 : i32
    %0 = arith.addi %arg1, %c1_i32 : i32
    %c10_i32 = arith.constant 10 : i32
    %1 = arith.muli %0, %c10_i32 : i32
    %c0_i32 = arith.constant 0 : i32
    %c0_i32_0 = arith.constant 0 : i32
    return %arg0, %c0_i32, %1 : i32, i32, i32
  }
  func.func @transform_2(%arg0: i32, %arg1: i32) -> (i32, i32) {
    %c0_i32 = arith.constant 0 : i32
    %c0_i32_0 = arith.constant 0 : i32
    %c0_i32_1 = arith.constant 0 : i32
    return %c0_i32, %c0_i32_0 : i32, i32
  }
  func.func @transform_3(%arg0: i32, %arg1: i32) -> (i32, i32) {
    %c0_i32 = arith.constant 0 : i32
    %c0_i32_0 = arith.constant 0 : i32
    %c0_i32_1 = arith.constant 0 : i32
    return %c0_i32, %c0_i32_0 : i32, i32
  }
  func.func @transform_4(%arg0: i32, %arg1: i32) -> (i32, i32) {
    %c0_i32 = arith.constant 0 : i32
    %c0_i32_0 = arith.constant 0 : i32
    %c0_i32_1 = arith.constant 0 : i32
    return %c0_i32, %c0_i32_0 : i32, i32
  }
  func.func @transform_5(%arg0: i32, %arg1: i32) -> (i32, i32, i32) {
    %c0_i32 = arith.constant 0 : i32
    %c0_i32_0 = arith.constant 0 : i32
    return %arg0, %c0_i32, %arg1 : i32, i32, i32
  }
}

</mosaic_0001>

<llo_original>
// kernel: tpu_custom_call.1
$region0: #{tpu_custom_call.1}
  #allocation0 [shape = 'u32[]', space=smem, size = 0x4, offset = 0x4, fixed_abs, tag = 'smem constant byte address 0x4 - core index']
  #allocation1 [shape = 'u32[144,128]{1,0:T(1,128)}', space=vmem, size = 0x12000, scoped, tag = 'internal scratch']
  %s0 = inlined_call_operand.hbm [shape: f32[2,16,1408], index: 0, kind: input, shape index: {}]
  %s1 = inlined_call_operand.hbm [shape: f32[2,16,1408], index: 1, kind: input, shape index: {}]
  %s2 = inlined_call_operand.vmem [shape: bf16[128,80], index: 2, kind: input, shape index: {}]
  %s3 = inlined_call_operand.vmem [shape: bf16[128,80], index: 3, kind: input, shape index: {}]
  %s4 = inlined_call_operand.vmem [shape: f32[16,1], index: 4, kind: input, shape index: {}]
  %s5 = inlined_call_operand.hbm [shape: f32[2,16,1280], index: 5, kind: output, shape index: {}]
  %s6 = sld [smem:[#allocation0]]
  $region61: #{tpu_custom_call.1} parent=0
    _
  %s8 = ssub.s32 1, %s6
  %s9 = scalar_select 0, %s8, %s6
  $region1: #{tpu_custom_call.1} parent=0
    #allocation2 [shape = 'u8[163840]{0}', space=vmem, size = 0x28000, scoped, tag = 'input window, operand 0']
    #allocation3 [shape = 's32[2]{0}', space=sflag, size = 0x8, scoped, tag = 'scoped memory for tpu_custom_call.1']
    #allocation4 [shape = 's32[2]{0}', space=sflag, size = 0x8, scoped, tag = 'scoped memory for tpu_custom_call.1']
    #allocation5 [shape = 'u8[16384]{0}', space=vmem, size = 0x4000, scoped, tag = 'input window, operand 1']
    #allocation6 [shape = 's32[2]{0}', space=sflag, size = 0x8, scoped, tag = 'scoped memory for tpu_custom_call.1']
    #allocation7 [shape = 'u8[163840]{0}', space=vmem, size = 0x28000, scoped, tag = 'output window, operand 0']
    %10 = vsyncpa [#allocation3], 0
    %s11 = scalar_lea.sflag [#allocation3], 1
    %12 = vsyncpa %s11, 0
    %13 = vsyncpa [#allocation6], 0
    %s14 = scalar_lea.sflag [#allocation6], 1
    %15 = vsyncpa %s14, 0
    %16 = vsyncpa [#allocation4], 0
    %s17 = scalar_lea.sflag [#allocation4], 1
    %18 = vsyncpa %s17, 0
    loop: start=0, step=1, limit=4
    $region2: #{tpu_custom_call.1} parent=1 // loop_pre_header
      _
    $region3: #{tpu_custom_call.1} parent=1 // loop_header
      %s20 = sphi 0, %s24
      %p21 = scmp.ge.s32.totalorder %s20, 4
      %s27 = sphi 0, %s39
      %s28 = sphi 0, %s35
      %s29 = sphi 0, %s27
      %s30 = sphi 0, %s28
      %s31 = sphi 0, %s29
      %s32 = sphi 0, %s30
      %s44 = sphi 0, %s46
      %s47 = sphi 0, %s44
      %s48 = sphi 0, %s47
      %s64 = sphi 0, %s48
      %s76 = sphi 0, %s78
      %s79 = sphi 0, %s76
      %s80 = sphi 0, %s79
      %s96 = sphi 0, %s80
      %s100 = sphi 0, %s100
      %s102 = sphi 0, %s100
      %s103 = sphi 0, %s102
      %s117 = sphi 0, %s103
      %s121 = sphi 0, %s121
      %s123 = sphi 0, %s121
      %s124 = sphi 0, %s123
      %s138 = sphi 0, %s124
      %s142 = sphi 0, %s142
      %s144 = sphi 0, %s142
      %s145 = sphi 0, %s144
      %s159 = sphi 0, %s145
      %s167 = sphi 0, %s169
      %s170 = sphi 0, %s167
      %s171 = sphi 0, %s170
      %s187 = sphi 0, %s171
    $region4: #{tpu_custom_call.1} parent=1 // loop_header_branch
      %23 = sbr.rel (%p21) target = $region8
    $region5: #{tpu_custom_call.1} parent=1 // loop_body
      %s25 = ssub.s32 %s20, 1
      %s26 = ssub.s32 %s20, 2
      %s33 = sadd.s32 1, %s28
      %p34 = scmp.ge.s32.totalorder %s33, 1
      %s35 = scalar_select %p34, 0, %s33
      %s36 = sadd.s32 1, %s27
      %s37 = scalar_select %p34, %s36, %s27
      %p38 = scmp.ge.s32.totalorder %s37, 2
      %s39 = scalar_select %p38, 0, %s37
      %s40 = ssub.s32 %s27, %s39
      %s41 = ssub.s32 %s28, %s35
      %s42 = sor.u32 %s40, %s41
      %p43 = scmp.eq.s32.totalorder %s42, 0
      %s45 = sadd.s32 %s44, 1
      %s46 = scalar_select %p43, %s44, %s45
      %p49 = pneg %p43
      %p50 = scmp.eq.s32.totalorder %s20, 1
      %p51 = por %p49, %p50
      %p52 = scmp.ne.s32.totalorder %s44, %s47
      %p53 = scmp.eq.s32.totalorder %s20, 0
      %p54 = por %p52, %p53
      %p55 = scmp.ne.s32.totalorder %s44, %s47
      %p56 = scmp.eq.s32.totalorder %s25, 1
      %p57 = por %p55, %p56
      %p58 = scmp.ne.s32.totalorder %s47, %s48
      %p59 = scmp.eq.s32.totalorder %s25, 0
      %p60 = por %p58, %p59
      %p61 = scmp.ne.s32.totalorder %s47, %s48
      %p62 = scmp.eq.s32.totalorder %s26, 1
      %p63 = por %p61, %p62
      %p65 = scmp.ne.s32.totalorder %s48, %s64
      %p66 = scmp.eq.s32.totalorder %s26, 0
      %p67 = por %p65, %p66
      %s68 = sadd.s32 %s28, 1
      %s69 = smul.u32 %s68, 10
      %s70 = sadd.s32 %s35, 1
      %s71 = smul.u32 %s70, 10
      %s72 = ssub.s32 %s27, %s39
      %s73 = ssub.s32 %s69, %s71
      %s74 = sor.u32 %s72, %s73
      %p75 = scmp.eq.s32.totalorder %s74, 0
      %s77 = sadd.s32 %s76, 1
      %s78 = scalar_select %p75, %s76, %s77
      %p81 = pneg %p75
      %p82 = scmp.eq.s32.totalorder %s20, 1
      %p83 = por %p81, %p82
      %p84 = scmp.ne.s32.totalorder %s76, %s79
      %p85 = scmp.eq.s32.totalorder %s20, 0
      %p86 = por %p84, %p85
      %p87 = scmp.ne.s32.totalorder %s76, %s79
      %p88 = scmp.eq.s32.totalorder %s25, 1
      %p89 = por %p87, %p88
      %p90 = scmp.ne.s32.totalorder %s79, %s80
      %p91 = scmp.eq.s32.totalorder %s25, 0
      %p92 = por %p90, %p91
      %p93 = scmp.ne.s32.totalorder %s79, %s80
      %p94 = scmp.eq.s32.totalorder %s26, 1
      %p95 = por %p93, %p94
      %p97 = scmp.ne.s32.totalorder %s80, %s96
      %p98 = scmp.eq.s32.totalorder %s26, 0
      %p99 = por %p97, %p98
      %s101 = sadd.s32 %s100, 1
      %p104 = scmp.eq.s32.totalorder %s20, 1
      %p105 = scmp.ne.s32.totalorder %s100, %s102
      %p106 = scmp.eq.s32.totalorder %s20, 0
      %p107 = por %p105, %p106
      %p108 = scmp.ne.s32.totalorder %s100, %s102
      %p109 = scmp.eq.s32.totalorder %s25, 1
      %p110 = por %p108, %p109
      %p111 = scmp.ne.s32.totalorder %s102, %s103
      %p112 = scmp.eq.s32.totalorder %s25, 0
      %p113 = por %p111, %p112
      %p114 = scmp.ne.s32.totalorder %s102, %s103
      %p115 = scmp.eq.s32.totalorder %s26, 1
      %p116 = por %p114, %p115
      %p118 = scmp.ne.s32.totalorder %s103, %s117
      %p119 = scmp.eq.s32.totalorder %s26, 0
      %p120 = por %p118, %p119
      %s122 = sadd.s32 %s121, 1
      %p125 = scmp.eq.s32.totalorder %s20, 1
      %p126 = scmp.ne.s32.totalorder %s121, %s123
      %p127 = scmp.eq.s32.totalorder %s20, 0
      %p128 = por %p126, %p127
      %p129 = scmp.ne.s32.totalorder %s121, %s123
      %p130 = scmp.eq.s32.totalorder %s25, 1
      %p131 = por %p129, %p130
      %p132 = scmp.ne.s32.totalorder %s123, %s124
      %p133 = scmp.eq.s32.totalorder %s25, 0
      %p134 = por %p132, %p133
      %p135 = scmp.ne.s32.totalorder %s123, %s124
      %p136 = scmp.eq.s32.totalorder %s26, 1
      %p137 = por %p135, %p136
      %p139 = scmp.ne.s32.totalorder %s124, %s138
      %p140 = scmp.eq.s32.totalorder %s26, 0
      %p141 = por %p139, %p140
      %s143 = sadd.s32 %s142, 1
      %p146 = scmp.eq.s32.totalorder %s20, 1
      %p147 = scmp.ne.s32.totalorder %s142, %s144
      %p148 = scmp.eq.s32.totalorder %s20, 0
      %p149 = por %p147, %p148
      %p150 = scmp.ne.s32.totalorder %s142, %s144
      %p151 = scmp.eq.s32.totalorder %s25, 1
      %p152 = por %p150, %p151
      %p153 = scmp.ne.s32.totalorder %s144, %s145
      %p154 = scmp.eq.s32.totalorder %s25, 0
      %p155 = por %p153, %p154
      %p156 = scmp.ne.s32.totalorder %s144, %s145
      %p157 = scmp.eq.s32.totalorder %s26, 1
      %p158 = por %p156, %p157
      %p160 = scmp.ne.s32.totalorder %s145, %s159
      %p161 = scmp.eq.s32.totalorder %s26, 0
      %p162 = por %p160, %p161
      %s163 = ssub.s32 %s27, %s39
      %s164 = ssub.s32 %s28, %s35
      %s165 = sor.u32 %s163, %s164
      %p166 = scmp.eq.s32.totalorder %s165, 0
      %s168 = sadd.s32 %s167, 1
      %s169 = scalar_select %p166, %s167, %s168
      %p172 = pneg %p166
      %p173 = scmp.eq.s32.totalorder %s20, 1
      %p174 = por %p172, %p173
      %p175 = scmp.ne.s32.totalorder %s167, %s170
      %p176 = scmp.eq.s32.totalorder %s20, 0
      %p177 = por %p175, %p176
      %p178 = scmp.ne.s32.totalorder %s167, %s170
      %p179 = scmp.eq.s32.totalorder %s25, 1
      %p180 = por %p178, %p179
      %p181 = scmp.ne.s32.totalorder %s170, %s171
      %p182 = scmp.eq.s32.totalorder %s25, 0
      %p183 = por %p181, %p182
      %p184 = scmp.ne.s32.totalorder %s170, %s171
      %p185 = scmp.eq.s32.totalorder %s26, 1
      %p186 = por %p184, %p185
      %p188 = scmp.ne.s32.totalorder %s171, %s187
      %p189 = scmp.eq.s32.totalorder %s26, 0
      %p190 = por %p188, %p189
      %p191 = scmp.le.s32.totalorder 1, %s20
      %p192 = scmp.lt.s32.totalorder %s20, 3
      %p193 = pnand %p191, %p192
      %p194 = pneg %p193
      // Predicated region
      $region9: #{tpu_custom_call.1} parent=5 // pred_check
        _
      $region10: #{tpu_custom_call.1} parent=5 // pred_check_branch
        %196 = sbr.rel (%p193) target = $region12
      $region11: #{tpu_custom_call.1} parent=5 // pred_region
        %s197 = ssub.s32 %s20, 1
        // Predicated region
        $region13: #{tpu_custom_call.1} parent=11 // pred_check
          %p198 = pneg %p113
        $region14: #{tpu_custom_call.1} parent=11 // pred_check_branch
          %200 = sbr.rel (%p198) target = $region16
        $region15: #{tpu_custom_call.1} parent=11 // pred_region
          _
        $region16: #{tpu_custom_call.1} parent=11 // pred_fallthru
          _
        // Predicated region
        $region17: #{tpu_custom_call.1} parent=11 // pred_check
          %p201 = pneg %p134
        $region18: #{tpu_custom_call.1} parent=11 // pred_check_branch
          %203 = sbr.rel (%p201) target = $region20
        $region19: #{tpu_custom_call.1} parent=11 // pred_region
          _
        $region20: #{tpu_custom_call.1} parent=11 // pred_fallthru
          _
        // Predicated region
        $region21: #{tpu_custom_call.1} parent=11 // pred_check
          %p204 = pneg %p155
        $region22: #{tpu_custom_call.1} parent=11 // pred_check_branch
          %206 = sbr.rel (%p204) target = $region24
        $region23: #{tpu_custom_call.1} parent=11 // pred_region
          _
        $region24: #{tpu_custom_call.1} parent=11 // pred_fallthru
          _
      $region12: #{tpu_custom_call.1} parent=5 // pred_fallthru
        _
      %p207 = scmp.lt.s32.totalorder %s20, 2
      // Predicated region
      $region25: #{tpu_custom_call.1} parent=5 // pred_check
        %p208 = pneg %p207
      $region26: #{tpu_custom_call.1} parent=5 // pred_check_branch
        %210 = sbr.rel (%p208) target = $region28
      $region27: #{tpu_custom_call.1} parent=5 // pred_region
        // Predicated region
        $region29: #{tpu_custom_call.1} parent=27 // pred_check
          %p211 = pneg %p54
        $region30: #{tpu_custom_call.1} parent=27 // pred_check_branch
          %213 = sbr.rel (%p211) target = $region32
        $region31: #{tpu_custom_call.1} parent=27 // pred_region
          %s214 = sand.u32 %s44, 1
          %s215 = scalar_lea.sflag [#allocation3], %s214
          %s216 = sand.u32 %s44, 1
          %s217 = smul.addr %s216, 160
          %s218 = scalar_lea.vmem [#allocation2], %s217
          %s219 = smul.u32 10, %s28
          %s220 = ssub.s32 11, %s219
          %p221 = scmp.lt.s32.totalorder %s220, 10
          %s222 = scalar_select %p221, %s220, 10
          %s223 = smul.u32 256, %s222
          %s225 = ssub.s32 2560, %s223
          %226 = vsyncadd %s215, %s225
          %p227 = scmp.ne.s32.totalorder 0, %s223
          %s228 = smul.addr %s27, 22
          %s229 = sadd.s32 %s219, %s228
          %s230 = smul.addr %s229, 128
          %s231 = scalar_lea.hbm %s0, %s230
          %s232 = smul.u32 %s222, 8
          %s233 = smul.u32 %s232, 2
          %s234 = sshll.u32 %s218, 4
          %s235 = int_to_ptr.vmem [resolvable:$true] %s234
          %s236 = sshll.u32 %s233, 4
          %240 = dma.hbm_to_vmem [thread:$0]  (%p227), %s231, %s236, %s235, %s215, 1408, 1280, %s232
        $region32: #{tpu_custom_call.1} parent=27 // pred_fallthru
          _
        // Predicated region
        $region33: #{tpu_custom_call.1} parent=27 // pred_check
          %p241 = pneg %p86
        $region34: #{tpu_custom_call.1} parent=27 // pred_check_branch
          %243 = sbr.rel (%p241) target = $region36
        $region35: #{tpu_custom_call.1} parent=27 // pred_region
          %s244 = sand.u32 %s76, 1
          %s245 = scalar_lea.sflag [#allocation6], %s244
          %s246 = sand.u32 %s76, 1
          %s247 = smul.addr %s246, 16
          %s248 = scalar_lea.vmem [#allocation5], %s247
          %s249 = sadd.s32 %s28, 1
          %s250 = smul.u32 %s249, 10
          %s252 = ssub.s32 256, 256
          %253 = vsyncadd %s245, %s252
          %s254 = smul.addr %s27, 22
          %s255 = sadd.s32 %s250, %s254
          %s256 = smul.addr %s255, 128
          %s257 = scalar_lea.hbm %s1, %s256
          %s258 = sshll.u32 %s248, 4
          %s259 = int_to_ptr.vmem [resolvable:$true] %s258
          %264 = dma.hbm_to_vmem [thread:$0]  %s257, 256, %s259, %s245, 1408, 128, 8
        $region36: #{tpu_custom_call.1} parent=27 // pred_fallthru
          _
      $region28: #{tpu_custom_call.1} parent=5 // pred_fallthru
        _
      %p265 = scmp.le.s32.totalorder 1, %s20
      %p266 = scmp.lt.s32.totalorder %s20, 3
      %p267 = pnand %p265, %p266
      %p268 = pneg %p267
      // Predicated region
      $region37: #{tpu_custom_call.1} parent=5 // pred_check
        _
      $region38: #{tpu_custom_call.1} parent=5 // pred_check_branch
        %270 = sbr.rel (%p267) target = $region40
      $region39: #{tpu_custom_call.1} parent=5 // pred_region
        %s271 = ssub.s32 %s20, 1
        %s272 = sand.u32 %s47, 1
        %s273 = scalar_lea.sflag [#allocation3], %s272
        %s274 = sand.u32 %s47, 1
        %s275 = smul.addr %s274, 160
        %s276 = scalar_lea.vmem [#allocation2], %s275
        // Predicated region
        $region41: #{tpu_custom_call.1} parent=39 // pred_check
          %p277 = pneg %p60
        $region42: #{tpu_custom_call.1} parent=39 // pred_check_branch
          %279 = sbr.rel (%p277) target = $region44
        $region43: #{tpu_custom_call.1} parent=39 // pred_region
          %280 = dma.done %s273, 2560
        $region44: #{tpu_custom_call.1} parent=39 // pred_fallthru
          _
        %s281 = sand.u32 %s79, 1
        %s282 = scalar_lea.sflag [#allocation6], %s281
        %s283 = sand.u32 %s79, 1
        %s284 = smul.addr %s283, 16
        %s285 = scalar_lea.vmem [#allocation5], %s284
        // Predicated region
        $region45: #{tpu_custom_call.1} parent=39 // pred_check
          %p286 = pneg %p92
        $region46: #{tpu_custom_call.1} parent=39 // pred_check_branch
          %288 = sbr.rel (%p286) target = $region48
        $region47: #{tpu_custom_call.1} parent=39 // pred_region
          %289 = dma.done %s282, 256
        $region48: #{tpu_custom_call.1} parent=39 // pred_fallthru
          _
        %s290 = sand.u32 %s47, 1
        %s291 = scalar_lea.sflag [#allocation3], %s290
        %s292 = sand.u32 %s47, 1
        %s293 = smul.addr %s292, 160
        %s294 = scalar_lea.vmem [#allocation2], %s293
        %p295 = pneg %p60
        %p296 = pneg %p57
        %s297 = sand.u32 %s79, 1
        %s298 = scalar_lea.sflag [#allocation6], %s297
        %s299 = sand.u32 %s79, 1
        %s300 = smul.addr %s299, 16
        %s301 = scalar_lea.vmem [#allocation5], %s300
        %p302 = pneg %p92
        %p303 = pneg %p89
        %p304 = pneg %p113
        %p305 = pneg %p110
        %p306 = pneg %p134
        %p307 = pneg %p131
        %p308 = pneg %p155
        %p309 = pneg %p152
        %p310 = pneg %p183
        %p311 = pneg %p180
        %s312 = sand.u32 %s170, 1
        %s313 = scalar_lea.sflag [#allocation4], %s312
        %s314 = sand.u32 %s170, 1
        %s315 = smul.addr %s314, 160
        %s316 = scalar_lea.vmem [#allocation7], %s315
        %s317 = smul.u32 10, %s30
        %s318 = ssub.s32 11, %s317
        %p319 = scmp.lt.s32.totalorder %s318, 10
        %s320 = scalar_select %p319, %s318, 10
        %s321 = smul.u32 256, %s320
        %s322 = sadd.s32 %s30, 1
        %s323 = smul.u32 %s322, 10
        %s324 = smul.u32 10, %s30
        %v326 = vld [vmem:[%s2] sm:$0xf]
        %v327 = vld [vmem:[%s2 + $0x4] sm:$0xf]
        %v328 = vld [vmem:[%s2 + $0x8] sm:$0xf]
        %v329 = vld [vmem:[%s2 + $0xc] sm:$0xf]
        %v330 = vld [vmem:[%s2 + $0x10] sm:$0xf]
        %v331 = vld [vmem:[%s2 + $0x14] sm:$0xf]
        %v332 = vld [vmem:[%s2 + $0x18] sm:$0xf]
        %v333 = vld [vmem:[%s2 + $0x1c] sm:$0xf]
        %v334 = vld [vmem:[%s2 + $0x20] sm:$0xf]
        %v335 = vld [vmem:[%s2 + $0x24] sm:$0xf]
        %v336 = vld [vmem:[%s2 + $0x28] sm:$0xf]
        %v337 = vld [vmem:[%s2 + $0x2c] sm:$0xf]
        %v338 = vld [vmem:[%s2 + $0x30] sm:$0xf]
        %v339 = vld [vmem:[%s2 + $0x34] sm:$0xf]
        %v340 = vld [vmem:[%s2 + $0x38] sm:$0xf]
        %v341 = vld [vmem:[%s2 + $0x3c] sm:$0xf]
        %v342 = vld [vmem:[%s3] sm:$0xf]
        %v343 = vld [vmem:[%s3 + $0x4] sm:$0xf]
        %v344 = vld [vmem:[%s3 + $0x8] sm:$0xf]
        %v345 = vld [vmem:[%s3 + $0xc] sm:$0xf]
        %v346 = vld [vmem:[%s3 + $0x10] sm:$0xf]
        %v347 = vld [vmem:[%s3 + $0x14] sm:$0xf]
        %v348 = vld [vmem:[%s3 + $0x18] sm:$0xf]
        %v349 = vld [vmem:[%s3 + $0x1c] sm:$0xf]
        %v350 = vld [vmem:[%s3 + $0x20] sm:$0xf]
        %v351 = vld [vmem:[%s3 + $0x24] sm:$0xf]
        %v352 = vld [vmem:[%s3 + $0x28] sm:$0xf]
        %v353 = vld [vmem:[%s3 + $0x2c] sm:$0xf]
        %v354 = vld [vmem:[%s3 + $0x30] sm:$0xf]
        %v355 = vld [vmem:[%s3 + $0x34] sm:$0xf]
        %v356 = vld [vmem:[%s3 + $0x38] sm:$0xf]
        %v357 = vld [vmem:[%s3 + $0x3c] sm:$0xf]
        %v358 = vld [vmem:[%s4] sm:$0xff]
        %v359 = vld [vmem:[%s4 + $0x8] sm:$0xff]
        %v360 = vld [vmem:[%s276] sm:$0xff]
        %v361 = vld [vmem:[%s276 + $0x8] sm:$0xff]
        %v362 = vld [vmem:[%s276 + $0x10] sm:$0xff]
        %v363 = vld [vmem:[%s276 + $0x50] sm:$0xff]
        %v364 = vld [vmem:[%s276 + $0x58] sm:$0xff]
        %v365 = vld [vmem:[%s276 + $0x60] sm:$0xff]
        %v366 = vpack.c.bf16 %v363, %v360
        %v367 = vpack.c.bf16 %v364, %v361
        %v368 = vpack.c.bf16 %v365, %v362
        %v369 = vunpack.c.l.bf16 %v366
        %v370 = vunpack.c.l.bf16 %v367
        %v371 = vunpack.c.l.bf16 %v368
        %v372 = vunpack.c.h.bf16 %v366
        %v373 = vunpack.c.h.bf16 %v367
        %v374 = vunpack.c.h.bf16 %v368
        %v375 = vsub.f32 %v360, %v369
        %v376 = vsub.f32 %v361, %v370
        %v377 = vsub.f32 %v362, %v371
        %v378 = vsub.f32 %v363, %v372
        %v379 = vsub.f32 %v364, %v373
        %v380 = vsub.f32 %v365, %v374
        %v381 = vpack.c.bf16 %v378, %v375
        %v382 = vpack.c.bf16 %v379, %v376
        %v383 = vpack.c.bf16 %v380, %v377
        %387 = vrot.lane.b32.xlu0 %v366, 127
        %v388 = vpop.permute.xlu0 %387
        %389 = vrot.lane.b32.xlu0 %v367, 127
        %v390 = vpop.permute.xlu0 %389
        %391 = vrot.lane.b32.xlu0 %v368, 127
        %v392 = vpop.permute.xlu0 %391
        %vm393 = vcmask 1039360
        %v394 = vsel %vm393, %v388, %v390
        %v395 = vsel %vm393, %v390, %v392
        %398 = vrot.lane.b32.xlu0 %v366, 126
        %v399 = vpop.permute.xlu0 %398
        %400 = vrot.lane.b32.xlu0 %v367, 126
        %v401 = vpop.permute.xlu0 %400
        %402 = vrot.lane.b32.xlu0 %v368, 126
        %v403 = vpop.permute.xlu0 %402
        %vm404 = vcmask 1031168
        %v405 = vsel %vm404, %v399, %v401
        %v406 = vsel %vm404, %v401, %v403
        %409 = vrot.lane.b32.xlu0 %v366, 125
        %v410 = vpop.permute.xlu0 %409
        %411 = vrot.lane.b32.xlu0 %v367, 125
        %v412 = vpop.permute.xlu0 %411
        %413 = vrot.lane.b32.xlu0 %v368, 125
        %v414 = vpop.permute.xlu0 %413
        %vm415 = vcmask 1022976
        %v416 = vsel %vm415, %v410, %v412
        %v417 = vsel %vm415, %v412, %v414
        %420 = vrot.lane.b32.xlu0 %v366, 124
        %v421 = vpop.permute.xlu0 %420
        %422 = vrot.lane.b32.xlu0 %v367, 124
        %v423 = vpop.permute.xlu0 %422
        %424 = vrot.lane.b32.xlu0 %v368, 124
        %v425 = vpop.permute.xlu0 %424
        %vm426 = vcmask 1014784
        %v427 = vsel %vm426, %v421, %v423
        %v428 = vsel %vm426, %v423, %v425
        %434 = vrot.lane.b32.xlu0 %v381, 127
        %v435 = vpop.permute.xlu0 %434
        %436 = vrot.lane.b32.xlu0 %v382, 127
        %v437 = vpop.permute.xlu0 %436
        %438 = vrot.lane.b32.xlu0 %v383, 127
        %v439 = vpop.permute.xlu0 %438
        %v440 = vsel %vm393, %v435, %v437
        %v441 = vsel %vm393, %v437, %v439
        %444 = vrot.lane.b32.xlu0 %v381, 126
        %v445 = vpop.permute.xlu0 %444
        %446 = vrot.lane.b32.xlu0 %v382, 126
        %v447 = vpop.permute.xlu0 %446
        %448 = vrot.lane.b32.xlu0 %v383, 126
        %v449 = vpop.permute.xlu0 %448
        %v450 = vsel %vm404, %v445, %v447
        %v451 = vsel %vm404, %v447, %v449
        %454 = vrot.lane.b32.xlu0 %v381, 125
        %v455 = vpop.permute.xlu0 %454
        %456 = vrot.lane.b32.xlu0 %v382, 125
        %v457 = vpop.permute.xlu0 %456
        %458 = vrot.lane.b32.xlu0 %v383, 125
        %v459 = vpop.permute.xlu0 %458
        %v460 = vsel %vm415, %v455, %v457
        %v461 = vsel %vm415, %v457, %v459
        %464 = vrot.lane.b32.xlu0 %v381, 124
        %v465 = vpop.permute.xlu0 %464
        %466 = vrot.lane.b32.xlu0 %v382, 124
        %v467 = vpop.permute.xlu0 %466
        %468 = vrot.lane.b32.xlu0 %v383, 124
        %v469 = vpop.permute.xlu0 %468
        %v470 = vsel %vm426, %v465, %v467
        %v471 = vsel %vm426, %v467, %v469
        %v490 = vunpack.c.l.b16 %v342
        %v491 = vunpack.c.l.b16 %v343
        %v492 = vunpack.c.l.b16 %v344
        %v493 = vunpack.c.l.b16 %v345
        %v494 = vunpack.c.l.b16 %v346
        %v495 = vunpack.c.l.b16 %v347
        %v496 = vunpack.c.l.b16 %v348
        %v497 = vunpack.c.l.b16 %v349
        %v498 = vunpack.c.l.b16 %v350
        %v499 = vunpack.c.l.b16 %v351
        %v500 = vunpack.c.l.b16 %v352
        %v501 = vunpack.c.l.b16 %v353
        %v502 = vunpack.c.l.b16 %v354
        %v503 = vunpack.c.l.b16 %v355
        %v504 = vunpack.c.l.b16 %v356
        %v505 = vunpack.c.l.b16 %v357
        %v506 = vpack.c.b16 %v491, %v490
        %v507 = vpack.c.b16 %v493, %v492
        %v508 = vpack.c.b16 %v495, %v494
        %v509 = vpack.c.b16 %v497, %v496
        %v510 = vpack.c.b16 %v499, %v498
        %v511 = vpack.c.b16 %v501, %v500
        %v512 = vpack.c.b16 %v503, %v502
        %v513 = vpack.c.b16 %v505, %v504
        %vm514 = vcmask 654336
        %v516 = vsel %vm514, %v506, 0
        %v519 = vsel %vm514, %v507, 0
        %v522 = vsel %vm514, %v508, 0
        %v525 = vsel %vm514, %v509, 0
        %v528 = vsel %vm514, %v510, 0
        %v531 = vsel %vm514, %v511, 0
        %v534 = vsel %vm514, %v512, 0
        %v537 = vsel %vm514, %v513, 0
        %539 = vmatprep.subr.bf16.mxu0 %v367
        %540 = vmatpush1.bf16.msra.mxu0 %v366
        %541 = vmatprep.subr.bf16.mxu0 %v395
        %542 = vmatpush1.bf16.msra.mxu0 %v394
        %543 = vmatprep.subr.bf16.mxu0 %v406
        %544 = vmatpush1.bf16.msra.mxu0 %v405
        %545 = vmatprep.subr.bf16.mxu0 %v417
        %546 = vmatpush1.bf16.msra.mxu0 %v416
        %547 = vmatprep.subr.bf16.mxu0 %v428
        %548 = vmatpush1.bf16.msra.mxu0 %v427
        %549 = vmatprep.subr.bf16.mxu0 0
        %550 = vmatpush1.bf16.msra.mxu0 0
        %551 = vmatprep.subr.bf16.mxu0 0
        %552 = vmatpush1.bf16.msra.mxu0 0
        %553 = vmatprep.subr.bf16.mxu0 0
        %554 = vmatpush1.bf16.msra.mxu0 0
        %555 = vmatprep.subr.bf16.mxu0 0
        %556 = vmatpush1.bf16.msra.mxu0 0
        %557 = vmatprep.subr.bf16.mxu0 0
        %558 = vmatpush1.bf16.msra.mxu0 0
        %559 = vmatprep.subr.bf16.mxu0 0
        %560 = vmatpush1.bf16.msra.mxu0 0
        %561 = vmatprep.subr.bf16.mxu0 0
        %562 = vmatpush1.bf16.msra.mxu0 0
        %563 = vmatprep.subr.bf16.mxu0 0
        %564 = vmatpush1.bf16.msra.mxu0 0
        %565 = vmatprep.subr.bf16.mxu0 0
        %566 = vmatpush1.bf16.msra.mxu0 0
        %567 = vmatprep.subr.bf16.mxu0 0
        %568 = vmatpush1.bf16.msra.mxu0 0
        %569 = vmatprep.subr.bf16.mxu0 0
        %570 = vmatpush1.bf16.msra.mxu0 0
        %571 = vmatprep.mubr.bf16.mxu0 0
        %572 = vmatmul.mubr.bf16.gmra.mrb[0].mxu0 %v516
        %v573 = vpop.f32.mrb[0].mxu0
        %v574 = vadd.f32 0.0, %v573
        %v575 = vpop.f32.mrb[0].mxu0
        %v576 = vadd.f32 0.0, %v575
        %v577 = vpop.f32.mrb[0].mxu0
        %v578 = vadd.f32 0.0, %v577
        %v579 = vpop.f32.mrb[0].mxu0
        %v580 = vadd.f32 0.0, %v579
        %581 = vmatprep.mubr.bf16.mxu0 0
        %582 = vmatmul.mubr.bf16.gmra.mrb[0].mxu0 %v519
        %v583 = vpop.f32.mrb[0].mxu0
        %v584 = vadd.f32 0.0, %v583
        %v585 = vpop.f32.mrb[0].mxu0
        %v586 = vadd.f32 0.0, %v585
        %v587 = vpop.f32.mrb[0].mxu0
        %v588 = vadd.f32 0.0, %v587
        %v589 = vpop.f32.mrb[0].mxu0
        %v590 = vadd.f32 0.0, %v589
        %591 = vmatprep.mubr.bf16.mxu0 0
        %592 = vmatmul.mubr.bf16.gmra.mrb[0].mxu0 %v522
        %v593 = vpop.f32.mrb[0].mxu0
        %v594 = vadd.f32 0.0, %v593
        %v595 = vpop.f32.mrb[0].mxu0
        %v596 = vadd.f32 0.0, %v595
        %v597 = vpop.f32.mrb[0].mxu0
        %v598 = vadd.f32 0.0, %v597
        %v599 = vpop.f32.mrb[0].mxu0
        %v600 = vadd.f32 0.0, %v599
        %601 = vmatprep.mubr.bf16.mxu0 0
        %602 = vmatmul.mubr.bf16.gmra.mrb[0].mxu0 %v525
        %v603 = vpop.f32.mrb[0].mxu0
        %v604 = vadd.f32 0.0, %v603
        %v605 = vpop.f32.mrb[0].mxu0
        %v606 = vadd.f32 0.0, %v605
        %v607 = vpop.f32.mrb[0].mxu0
        %v608 = vadd.f32 0.0, %v607
        %v609 = vpop.f32.mrb[0].mxu0
        %v610 = vadd.f32 0.0, %v609
        %611 = vmatprep.mubr.bf16.mxu0 0
        %612 = vmatmul.mubr.bf16.gmra.mrb[0].mxu0 %v528
        %v613 = vpop.f32.mrb[0].mxu0
        %v614 = vadd.f32 0.0, %v613
        %v615 = vpop.f32.mrb[0].mxu0
        %v616 = vadd.f32 0.0, %v615
        %v617 = vpop.f32.mrb[0].mxu0
        %v618 = vadd.f32 0.0, %v617
        %v619 = vpop.f32.mrb[0].mxu0
        %v620 = vadd.f32 0.0, %v619
        %621 = vmatprep.mubr.bf16.mxu0 0
        %622 = vmatmul.mubr.bf16.gmra.mrb[0].mxu0 %v531
        %v623 = vpop.f32.mrb[0].mxu0
        %v624 = vadd.f32 0.0, %v623
        %v625 = vpop.f32.mrb[0].mxu0
        %v626 = vadd.f32 0.0, %v625
        %v627 = vpop.f32.mrb[0].mxu0
        %v628 = vadd.f32 0.0, %v627
        %v629 = vpop.f32.mrb[0].mxu0
        %v630 = vadd.f32 0.0, %v629
        %631 = vmatprep.mubr.bf16.mxu0 0
        %632 = vmatmul.mubr.bf16.gmra.mrb[0].mxu0 %v534
        %v633 = vpop.f32.mrb[0].mxu0
        %v634 = vadd.f32 0.0, %v633
        %v635 = vpop.f32.mrb[0].mxu0
        %v636 = vadd.f32 0.0, %v635
        %v637 = vpop.f32.mrb[0].mxu0
        %v638 = vadd.f32 0.0, %v637
        %v639 = vpop.f32.mrb[0].mxu0
        %v640 = vadd.f32 0.0, %v639
        %641 = vmatprep.mubr.bf16.mxu0 0
        %642 = vmatmul.mubr.bf16.gmra.mrb[0].mxu0 %v537
        %v643 = vpop.f32.mrb[0].mxu0
        %v644 = vadd.f32 0.0, %v643
        %v645 = vpop.f32.mrb[0].mxu0
        %v646 = vadd.f32 0.0, %v645
        %v647 = vpop.f32.mrb[0].mxu0
        %v648 = vadd.f32 0.0, %v647
        %v649 = vpop.f32.mrb[0].mxu0
        %v650 = vadd.f32 0.0, %v649
        %651 = vdwg.mxu0
        %v668 = vunpack.c.l.b16 %v326
        %v669 = vunpack.c.l.b16 %v327
        %v670 = vunpack.c.l.b16 %v328
        %v671 = vunpack.c.l.b16 %v329
        %v672 = vunpack.c.l.b16 %v330
        %v673 = vunpack.c.l.b16 %v331
        %v674 = vunpack.c.l.b16 %v332
        %v675 = vunpack.c.l.b16 %v333
        %v676 = vunpack.c.l.b16 %v334
        %v677 = vunpack.c.l.b16 %v335
        %v678 = vunpack.c.l.b16 %v336
        %v679 = vunpack.c.l.b16 %v337
        %v680 = vunpack.c.l.b16 %v338
        %v681 = vunpack.c.l.b16 %v339
        %v682 = vunpack.c.l.b16 %v340
        %v683 = vunpack.c.l.b16 %v341
        %v684 = vpack.c.b16 %v669, %v668
        %v685 = vpack.c.b16 %v671, %v670
        %v686 = vpack.c.b16 %v673, %v672
        %v687 = vpack.c.b16 %v675, %v674
        %v688 = vpack.c.b16 %v677, %v676
        %v689 = vpack.c.b16 %v679, %v678
        %v690 = vpack.c.b16 %v681, %v680
        %v691 = vpack.c.b16 %v683, %v682
        %v693 = vsel %vm514, %v684, 0
        %v696 = vsel %vm514, %v685, 0
        %v699 = vsel %vm514, %v686, 0
        %v702 = vsel %vm514, %v687, 0
        %v705 = vsel %vm514, %v688, 0
        %v708 = vsel %vm514, %v689, 0
        %v711 = vsel %vm514, %v690, 0
        %v714 = vsel %vm514, %v691, 0
        %716 = vmatprep.subr.bf16.mxu0 %v367
        %717 = vmatpush1.bf16.msra.mxu0 %v366
        %718 = vmatprep.subr.bf16.mxu0 %v395
        %719 = vmatpush1.bf16.msra.mxu0 %v394
        %720 = vmatprep.subr.bf16.mxu0 %v406
        %721 = vmatpush1.bf16.msra.mxu0 %v405
        %722 = vmatprep.subr.bf16.mxu0 %v417
        %723 = vmatpush1.bf16.msra.mxu0 %v416
        %724 = vmatprep.subr.bf16.mxu0 %v428
        %725 = vmatpush1.bf16.msra.mxu0 %v427
        %726 = vmatprep.subr.bf16.mxu0 0
        %727 = vmatpush1.bf16.msra.mxu0 0
        %728 = vmatprep.subr.bf16.mxu0 0
        %729 = vmatpush1.bf16.msra.mxu0 0
        %730 = vmatprep.subr.bf16.mxu0 0
        %731 = vmatpush1.bf16.msra.mxu0 0
        %732 = vmatprep.subr.bf16.mxu0 0
        %733 = vmatpush1.bf16.msra.mxu0 0
        %734 = vmatprep.subr.bf16.mxu0 0
        %735 = vmatpush1.bf16.msra.mxu0 0
        %736 = vmatprep.subr.bf16.mxu0 0
        %737 = vmatpush1.bf16.msra.mxu0 0
        %738 = vmatprep.subr.bf16.mxu0 0
        %739 = vmatpush1.bf16.msra.mxu0 0
        %740 = vmatprep.subr.bf16.mxu0 0
        %741 = vmatpush1.bf16.msra.mxu0 0
        %742 = vmatprep.subr.bf16.mxu0 0
        %743 = vmatpush1.bf16.msra.mxu0 0
        %744 = vmatprep.subr.bf16.mxu0 0
        %745 = vmatpush1.bf16.msra.mxu0 0
        %746 = vmatprep.subr.bf16.mxu0 0
        %747 = vmatpush1.bf16.msra.mxu0 0
        %748 = vmatprep.mubr.bf16.mxu0 0
        %749 = vmatmul.mubr.bf16.gmra.mrb[0].mxu0 %v693
        %v750 = vpop.f32.mrb[0].mxu0
        %v751 = vadd.f32 %v574, %v750
        %v752 = vpop.f32.mrb[0].mxu0
        %v753 = vadd.f32 %v576, %v752
        %v754 = vpop.f32.mrb[0].mxu0
        %v755 = vadd.f32 %v578, %v754
        %v756 = vpop.f32.mrb[0].mxu0
        %v757 = vadd.f32 %v580, %v756
        %758 = vmatprep.mubr.bf16.mxu0 0
        %759 = vmatmul.mubr.bf16.gmra.mrb[0].mxu0 %v696
        %v760 = vpop.f32.mrb[0].mxu0
        %v761 = vadd.f32 %v584, %v760
        %v762 = vpop.f32.mrb[0].mxu0
        %v763 = vadd.f32 %v586, %v762
        %v764 = vpop.f32.mrb[0].mxu0
        %v765 = vadd.f32 %v588, %v764
        %v766 = vpop.f32.mrb[0].mxu0
        %v767 = vadd.f32 %v590, %v766
        %768 = vmatprep.mubr.bf16.mxu0 0
        %769 = vmatmul.mubr.bf16.gmra.mrb[0].mxu0 %v699
        %v770 = vpop.f32.mrb[0].mxu0
        %v771 = vadd.f32 %v594, %v770
        %v772 = vpop.f32.mrb[0].mxu0
        %v773 = vadd.f32 %v596, %v772
        %v774 = vpop.f32.mrb[0].mxu0
        %v775 = vadd.f32 %v598, %v774
        %v776 = vpop.f32.mrb[0].mxu0
        %v777 = vadd.f32 %v600, %v776
        %778 = vmatprep.mubr.bf16.mxu0 0
        %779 = vmatmul.mubr.bf16.gmra.mrb[0].mxu0 %v702
        %v780 = vpop.f32.mrb[0].mxu0
        %v781 = vadd.f32 %v604, %v780
        %v782 = vpop.f32.mrb[0].mxu0
        %v783 = vadd.f32 %v606, %v782
        %v784 = vpop.f32.mrb[0].mxu0
        %v785 = vadd.f32 %v608, %v784
        %v786 = vpop.f32.mrb[0].mxu0
        %v787 = vadd.f32 %v610, %v786
        %788 = vmatprep.mubr.bf16.mxu0 0
        %789 = vmatmul.mubr.bf16.gmra.mrb[0].mxu0 %v705
        %v790 = vpop.f32.mrb[0].mxu0
        %v791 = vadd.f32 %v614, %v790
        %v792 = vpop.f32.mrb[0].mxu0
        %v793 = vadd.f32 %v616, %v792
        %v794 = vpop.f32.mrb[0].mxu0
        %v795 = vadd.f32 %v618, %v794
        %v796 = vpop.f32.mrb[0].mxu0
        %v797 = vadd.f32 %v620, %v796
        %798 = vmatprep.mubr.bf16.mxu0 0
        %799 = vmatmul.mubr.bf16.gmra.mrb[0].mxu0 %v708
        %v800 = vpop.f32.mrb[0].mxu0
        %v801 = vadd.f32 %v624, %v800
        %v802 = vpop.f32.mrb[0].mxu0
        %v803 = vadd.f32 %v626, %v802
        %v804 = vpop.f32.mrb[0].mxu0
        %v805 = vadd.f32 %v628, %v804
        %v806 = vpop.f32.mrb[0].mxu0
        %v807 = vadd.f32 %v630, %v806
        %808 = vmatprep.mubr.bf16.mxu0 0
        %809 = vmatmul.mubr.bf16.gmra.mrb[0].mxu0 %v711
        %v810 = vpop.f32.mrb[0].mxu0
        %v811 = vadd.f32 %v634, %v810
        %v812 = vpop.f32.mrb[0].mxu0
        %v813 = vadd.f32 %v636, %v812
        %v814 = vpop.f32.mrb[0].mxu0
        %v815 = vadd.f32 %v638, %v814
        %v816 = vpop.f32.mrb[0].mxu0
        %v817 = vadd.f32 %v640, %v816
        %818 = vmatprep.mubr.bf16.mxu0 0
        %819 = vmatmul.mubr.bf16.gmra.mrb[0].mxu0 %v714
        %v820 = vpop.f32.mrb[0].mxu0
        %v821 = vadd.f32 %v644, %v820
        %v822 = vpop.f32.mrb[0].mxu0
        %v823 = vadd.f32 %v646, %v822
        %v824 = vpop.f32.mrb[0].mxu0
        %v825 = vadd.f32 %v648, %v824
        %v826 = vpop.f32.mrb[0].mxu0
        %v827 = vadd.f32 %v650, %v826
        %828 = vdwg.mxu0
        %829 = vmatprep.subr.bf16.mxu0 %v382
        %830 = vmatpush1.bf16.msra.mxu0 %v381
        %831 = vmatprep.subr.bf16.mxu0 %v441
        %832 = vmatpush1.bf16.msra.mxu0 %v440
        %833 = vmatprep.subr.bf16.mxu0 %v451
        %834 = vmatpush1.bf16.msra.mxu0 %v450
        %835 = vmatprep.subr.bf16.mxu0 %v461
        %836 = vmatpush1.bf16.msra.mxu0 %v460
        %837 = vmatprep.subr.bf16.mxu0 %v471
        %838 = vmatpush1.bf16.msra.mxu0 %v470
        %839 = vmatprep.subr.bf16.mxu0 0
        %840 = vmatpush1.bf16.msra.mxu0 0
        %841 = vmatprep.subr.bf16.mxu0 0
        %842 = vmatpush1.bf16.msra.mxu0 0
        %843 = vmatprep.subr.bf16.mxu0 0
        %844 = vmatpush1.bf16.msra.mxu0 0
        %845 = vmatprep.subr.bf16.mxu0 0
        %846 = vmatpush1.bf16.msra.mxu0 0
        %847 = vmatprep.subr.bf16.mxu0 0
        %848 = vmatpush1.bf16.msra.mxu0 0
        %849 = vmatprep.subr.bf16.mxu0 0
        %850 = vmatpush1.bf16.msra.mxu0 0
        %851 = vmatprep.subr.bf16.mxu0 0
        %852 = vmatpush1.bf16.msra.mxu0 0
        %853 = vmatprep.subr.bf16.mxu0 0
        %854 = vmatpush1.bf16.msra.mxu0 0
        %855 = vmatprep.subr.bf16.mxu0 0
        %856 = vmatpush1.bf16.msra.mxu0 0
        %857 = vmatprep.subr.bf16.mxu0 0
        %858 = vmatpush1.bf16.msra.mxu0 0
        %859 = vmatprep.subr.bf16.mxu0 0
        %860 = vmatpush1.bf16.msra.mxu0 0
        %861 = vmatprep.mubr.bf16.mxu0 0
        %862 = vmatmul.mubr.bf16.gmra.mrb[0].mxu0 %v693
        %v863 = vpop.f32.mrb[0].mxu0
        %v864 = vadd.f32 0.0, %v863
        %v865 = vpop.f32.mrb[0].mxu0
        %v866 = vadd.f32 0.0, %v865
        %v867 = vpop.f32.mrb[0].mxu0
        %v868 = vadd.f32 0.0, %v867
        %v869 = vpop.f32.mrb[0].mxu0
        %v870 = vadd.f32 0.0, %v869
        %871 = vmatprep.mubr.bf16.mxu0 0
        %872 = vmatmul.mubr.bf16.gmra.mrb[0].mxu0 %v696
        %v873 = vpop.f32.mrb[0].mxu0
        %v874 = vadd.f32 0.0, %v873
        %v875 = vpop.f32.mrb[0].mxu0
        %v876 = vadd.f32 0.0, %v875
        %v877 = vpop.f32.mrb[0].mxu0
        %v878 = vadd.f32 0.0, %v877
        %v879 = vpop.f32.mrb[0].mxu0
        %v880 = vadd.f32 0.0, %v879
        %881 = vmatprep.mubr.bf16.mxu0 0
        %882 = vmatmul.mubr.bf16.gmra.mrb[0].mxu0 %v699
        %v883 = vpop.f32.mrb[0].mxu0
        %v884 = vadd.f32 0.0, %v883
        %v885 = vpop.f32.mrb[0].mxu0
        %v886 = vadd.f32 0.0, %v885
        %v887 = vpop.f32.mrb[0].mxu0
        %v888 = vadd.f32 0.0, %v887
        %v889 = vpop.f32.mrb[0].mxu0
        %v890 = vadd.f32 0.0, %v889
        %891 = vmatprep.mubr.bf16.mxu0 0
        %892 = vmatmul.mubr.bf16.gmra.mrb[0].mxu0 %v702
        %v893 = vpop.f32.mrb[0].mxu0
        %v894 = vadd.f32 0.0, %v893
        %v895 = vpop.f32.mrb[0].mxu0
        %v896 = vadd.f32 0.0, %v895
        %v897 = vpop.f32.mrb[0].mxu0
        %v898 = vadd.f32 0.0, %v897
        %v899 = vpop.f32.mrb[0].mxu0
        %v900 = vadd.f32 0.0, %v899
        %901 = vmatprep.mubr.bf16.mxu0 0
        %902 = vmatmul.mubr.bf16.gmra.mrb[0].mxu0 %v705
        %v903 = vpop.f32.mrb[0].mxu0
        %v904 = vadd.f32 0.0, %v903
        %v905 = vpop.f32.mrb[0].mxu0
        %v906 = vadd.f32 0.0, %v905
        %v907 = vpop.f32.mrb[0].mxu0
        %v908 = vadd.f32 0.0, %v907
        %v909 = vpop.f32.mrb[0].mxu0
        %v910 = vadd.f32 0.0, %v909
        %911 = vmatprep.mubr.bf16.mxu0 0
        %912 = vmatmul.mubr.bf16.gmra.mrb[0].mxu0 %v708
        %v913 = vpop.f32.mrb[0].mxu0
        %v914 = vadd.f32 0.0, %v913
        %v915 = vpop.f32.mrb[0].mxu0
        %v916 = vadd.f32 0.0, %v915
        %v917 = vpop.f32.mrb[0].mxu0
        %v918 = vadd.f32 0.0, %v917
        %v919 = vpop.f32.mrb[0].mxu0
        %v920 = vadd.f32 0.0, %v919
        %921 = vmatprep.mubr.bf16.mxu0 0
        %922 = vmatmul.mubr.bf16.gmra.mrb[0].mxu0 %v711
        %v923 = vpop.f32.mrb[0].mxu0
        %v924 = vadd.f32 0.0, %v923
        %v925 = vpop.f32.mrb[0].mxu0
        %v926 = vadd.f32 0.0, %v925
        %v927 = vpop.f32.mrb[0].mxu0
        %v928 = vadd.f32 0.0, %v927
        %v929 = vpop.f32.mrb[0].mxu0
        %v930 = vadd.f32 0.0, %v929
        %931 = vmatprep.mubr.bf16.mxu0 0
        %932 = vmatmul.mubr.bf16.gmra.mrb[0].mxu0 %v714
        %v933 = vpop.f32.mrb[0].mxu0
        %v934 = vadd.f32 0.0, %v933
        %v935 = vpop.f32.mrb[0].mxu0
        %v936 = vadd.f32 0.0, %v935
        %v937 = vpop.f32.mrb[0].mxu0
        %v938 = vadd.f32 0.0, %v937
        %v939 = vpop.f32.mrb[0].mxu0
        %v940 = vadd.f32 0.0, %v939
        %941 = vdwg.mxu0
        %v942 = vadd.f32 %v751, %v864
        %v943 = vadd.f32 %v753, %v866
        %v944 = vadd.f32 %v755, %v868
        %v945 = vadd.f32 %v757, %v870
        %v946 = vadd.f32 %v761, %v874
        %v947 = vadd.f32 %v763, %v876
        %v948 = vadd.f32 %v765, %v878
        %v949 = vadd.f32 %v767, %v880
        %v950 = vadd.f32 %v771, %v884
        %v951 = vadd.f32 %v773, %v886
        %v952 = vadd.f32 %v775, %v888
        %v953 = vadd.f32 %v777, %v890
        %v954 = vadd.f32 %v781, %v894
        %v955 = vadd.f32 %v783, %v896
        %v956 = vadd.f32 %v785, %v898
        %v957 = vadd.f32 %v787, %v900
        %v958 = vadd.f32 %v791, %v904
        %v959 = vadd.f32 %v793, %v906
        %v960 = vadd.f32 %v795, %v908
        %v961 = vadd.f32 %v797, %v910
        %v962 = vadd.f32 %v801, %v914
        %v963 = vadd.f32 %v803, %v916
        %v964 = vadd.f32 %v805, %v918
        %v965 = vadd.f32 %v807, %v920
        %v966 = vadd.f32 %v811, %v924
        %v967 = vadd.f32 %v813, %v926
        %v968 = vadd.f32 %v815, %v928
        %v969 = vadd.f32 %v817, %v930
        %v970 = vadd.f32 %v821, %v934
        %v971 = vadd.f32 %v823, %v936
        %v972 = vadd.f32 %v825, %v938
        %v973 = vadd.f32 %v827, %v940
        %v974 = vmax.f32 %v942, %v946
        %v975 = vmax.f32 %v943, %v947
        %v976 = vmax.f32 %v944, %v948
        %v977 = vmax.f32 %v945, %v949
        %v978 = vmax.f32 %v950, %v954
        %v979 = vmax.f32 %v951, %v955
        %v980 = vmax.f32 %v952, %v956
        %v981 = vmax.f32 %v953, %v957
        %v982 = vmax.f32 %v958, %v962
        %v983 = vmax.f32 %v959, %v963
        %v984 = vmax.f32 %v960, %v964
        %v985 = vmax.f32 %v961, %v965
        %v986 = vmax.f32 %v966, %v970
        %v987 = vmax.f32 %v967, %v971
        %v988 = vmax.f32 %v968, %v972
        %v989 = vmax.f32 %v969, %v973
        %v990 = vmax.f32 %v974, %v978
        %v991 = vmax.f32 %v975, %v979
        %v992 = vmax.f32 %v976, %v980
        %v993 = vmax.f32 %v977, %v981
        %v994 = vmax.f32 %v982, %v986
        %v995 = vmax.f32 %v983, %v987
        %v996 = vmax.f32 %v984, %v988
        %v997 = vmax.f32 %v985, %v989
        %v998 = vmax.f32 %v990, %v994
        %v999 = vmax.f32 %v991, %v995
        %v1000 = vmax.f32 %v992, %v996
        %v1001 = vmax.f32 %v993, %v997
        %1003 = vset.pattern.permute.xlu0 0
        %1004 = vperm.xlu0 %1003, %v358
        %v1005 = vpop.permute.xlu0 %1004
        %1008 = vset.pattern.permute.xlu0 0
        %1009 = vperm.xlu0 %1008, %v359
        %v1010 = vpop.permute.xlu0 %1009
        %v1012 = vadd.f32 %v998, %v1005
        %v1013 = vadd.f32 %v999, %v1005
        %v1014 = vadd.f32 %v1000, %v1010
        %v1015 = vadd.f32 %v1001, %v1010
        %v1016 = vmax.f32 %v1012, 0.0
        %v1017 = vmax.f32 %v1013, 0.0
        %v1018 = vmax.f32 %v1014, 0.0
        %v1019 = vmax.f32 %v1015, 0.0
        %1020 = vst [vmem:[%s316] sm:$0xff] %v1016
        %1021 = vst [vmem:[%s316 + $0x8] sm:$0xff] %v1017
        %1022 = vst [vmem:[%s316 + $0x50] sm:$0xff] %v1018
        %1023 = vst [vmem:[%s316 + $0x58] sm:$0xff] %v1019
        %v1024 = vld [vmem:[%s276 + $0x10] sm:$0xff]
        %v1025 = vld [vmem:[%s276 + $0x18] sm:$0xff]
        %v1026 = vld [vmem:[%s276 + $0x20] sm:$0xff]
        %v1027 = vld [vmem:[%s276 + $0x60] sm:$0xff]
        %v1028 = vld [vmem:[%s276 + $0x68] sm:$0xff]
        %v1029 = vld [vmem:[%s276 + $0x70] sm:$0xff]
        %v1030 = vpack.c.bf16 %v1027, %v1024
        %v1031 = vpack.c.bf16 %v1028, %v1025
        %v1032 = vpack.c.bf16 %v1029, %v1026
        %v1033 = vunpack.c.l.bf16 %v1030
        %v1034 = vunpack.c.l.bf16 %v1031
        %v1035 = vunpack.c.l.bf16 %v1032
        %v1036 = vunpack.c.h.bf16 %v1030
        %v1037 = vunpack.c.h.bf16 %v1031
        %v1038 = vunpack.c.h.bf16 %v1032
        %v1039 = vsub.f32 %v1024, %v1033
        %v1040 = vsub.f32 %v1025, %v1034
        %v1041 = vsub.f32 %v1026, %v1035
        %v1042 = vsub.f32 %v1027, %v1036
        %v1043 = vsub.f32 %v1028, %v1037
        %v1044 = vsub.f32 %v1029, %v1038
        %v1045 = vpack.c.bf16 %v1042, %v1039
        %v1046 = vpack.c.bf16 %v1043, %v1040
        %v1047 = vpack.c.bf16 %v1044, %v1041
        %1051 = vrot.lane.b32.xlu0 %v1030, 127
        %v1052 = vpop.permute.xlu0 %1051
        %1053 = vrot.lane.b32.xlu0 %v1031, 127
        %v1054 = vpop.permute.xlu0 %1053
        %1055 = vrot.lane.b32.xlu0 %v1032, 127
        %v1056 = vpop.permute.xlu0 %1055
        %v1057 = vsel %vm393, %v1052, %v1054
        %v1058 = vsel %vm393, %v1054, %v1056
        %1061 = vrot.lane.b32.xlu0 %v1030, 126
        %v1062 = vpop.permute.xlu0 %1061
        %1063 = vrot.lane.b32.xlu0 %v1031, 126
        %v1064 = vpop.permute.xlu0 %1063
        %1065 = vrot.lane.b32.xlu0 %v1032, 126
        %v1066 = vpop.permute.xlu0 %1065
        %v1067 = vsel %vm404, %v1062, %v1064
        %v1068 = vsel %vm404, %v1064, %v1066
        %1071 = vrot.lane.b32.xlu0 %v1030, 125
        %v1072 = vpop.permute.xlu0 %1071
        %1073 = vrot.lane.b32.xlu0 %v1031, 125
        %v1074 = vpop.permute.xlu0 %1073
        %1075 = vrot.lane.b32.xlu0 %v1032, 125
        %v1076 = vpop.permute.xlu0 %1075
        %v1077 = vsel %vm415, %v1072, %v1074
        %v1078 = vsel %vm415, %v1074, %v1076
        %1081 = vrot.lane.b32.xlu0 %v1030, 124
        %v1082 = vpop.permute.xlu0 %1081
        %1083 = vrot.lane.b32.xlu0 %v1031, 124
        %v1084 = vpop.permute.xlu0 %1083
        %1085 = vrot.lane.b32.xlu0 %v1032, 124
        %v1086 = vpop.permute.xlu0 %1085
        %v1087 = vsel %vm426, %v1082, %v1084
        %v1088 = vsel %vm426, %v1084, %v1086
        %1094 = vrot.lane.b32.xlu0 %v1045, 127
        %v1095 = vpop.permute.xlu0 %1094
        %1096 = vrot.lane.b32.xlu0 %v1046, 127
        %v1097 = vpop.permute.xlu0 %1096
        %1098 = vrot.lane.b32.xlu0 %v1047, 127
        %v1099 = vpop.permute.xlu0 %1098
        %v1100 = vsel %vm393, %v1095, %v1097
        %v1101 = vsel %vm393, %v1097, %v1099
        %1104 = vrot.lane.b32.xlu0 %v1045, 126
        %v1105 = vpop.permute.xlu0 %1104
        %1106 = vrot.lane.b32.xlu0 %v1046, 126
        %v1107 = vpop.permute.xlu0 %1106
        %1108 = vrot.lane.b32.xlu0 %v1047, 126
        %v1109 = vpop.permute.xlu0 %1108
        %v1110 = vsel %vm404, %v1105, %v1107
        %v1111 = vsel %vm404, %v1107, %v1109
        %1114 = vrot.lane.b32.xlu0 %v1045, 125
        %v1115 = vpop.permute.xlu0 %1114
        %1116 = vrot.lane.b32.xlu0 %v1046, 125
        %v1117 = vpop.permute.xlu0 %1116
        %1118 = vrot.lane.b32.xlu0 %v1047, 125
        %v1119 = vpop.permute.xlu0 %1118
        %v1120 = vsel %vm415, %v1115, %v1117
        %v1121 = vsel %vm415, %v1117, %v1119
        %1124 = vrot.lane.b32.xlu0 %v1045, 124
        %v1125 = vpop.permute.xlu0 %1124
        %1126 = vrot.lane.b32.xlu0 %v1046, 124
        %v1127 = vpop.permute.xlu0 %1126
        %1128 = vrot.lane.b32.xlu0 %v1047, 124
        %v1129 = vpop.permute.xlu0 %1128
        %v1130 = vsel %vm426, %v1125, %v1127
        %v1131 = vsel %vm426, %v1127, %v1129
        %1134 = vmatprep.subr.bf16.mxu0 %v1031
        %1135 = vmatpush1.bf16.msra.mxu0 %v1030
        %1136 = vmatprep.subr.bf16.mxu0 %v1058
        %1137 = vmatpush1.bf16.msra.mxu0 %v1057
        %1138 = vmatprep.subr.bf16.mxu0 %v1068
        %1139 = vmatpush1.bf16.msra.mxu0 %v1067
        %1140 = vmatprep.subr.bf16.mxu0 %v1078
        %1141 = vmatpush1.bf16.msra.mxu0 %v1077
        %1142 = vmatprep.subr.bf16.mxu0 %v1088
        %1143 = vmatpush1.bf16.msra.mxu0 %v1087
        %1144 = vmatprep.subr.bf16.mxu0 0
        %1145 = vmatpush1.bf16.msra.mxu0 0
        %1146 = vmatprep.subr.bf16.mxu0 0
        %1147 = vmatpush1.bf16.msra.mxu0 0
        %1148 = vmatprep.subr.bf16.mxu0 0
        %1149 = vmatpush1.bf16.msra.mxu0 0
        %1150 = vmatprep.subr.bf16.mxu0 0
        %1151 = vmatpush1.bf16.msra.mxu0 0
        %1152 = vmatprep.subr.bf16.mxu0 0
        %1153 = vmatpush1.bf16.msra.mxu0 0
        %1154 = vmatprep.subr.bf16.mxu0 0
        %1155 = vmatpush1.bf16.msra.mxu0 0
        %1156 = vmatprep.subr.bf16.mxu0 0
        %1157 = vmatpush1.bf16.msra.mxu0 0
        %1158 = vmatprep.subr.bf16.mxu0 0
        %1159 = vmatpush1.bf16.msra.mxu0 0
        %1160 = vmatprep.subr.bf16.mxu0 0
        %1161 = vmatpush1.bf16.msra.mxu0 0
        %1162 = vmatprep.subr.bf16.mxu0 0
        %1163 = vmatpush1.bf16.msra.mxu0 0
        %1164 = vmatprep.subr.bf16.mxu0 0
        %1165 = vmatpush1.bf16.msra.mxu0 0
        %1166 = vmatprep.mubr.bf16.mxu0 0
        %1167 = vmatmul.mubr.bf16.gmra.mrb[0].mxu0 %v516
        %v1168 = vpop.f32.mrb[0].mxu0
        %v1169 = vadd.f32 0.0, %v1168
        %v1170 = vpop.f32.mrb[0].mxu0
        %v1171 = vadd.f32 0.0, %v1170
        %v1172 = vpop.f32.mrb[0].mxu0
        %v1173 = vadd.f32 0.0, %v1172
        %v1174 = vpop.f32.mrb[0].mxu0
        %v1175 = vadd.f32 0.0, %v1174
        %1176 = vmatprep.mubr.bf16.mxu0 0
        %1177 = vmatmul.mubr.bf16.gmra.mrb[0].mxu0 %v519
        %v1178 = vpop.f32.mrb[0].mxu0
        %v1179 = vadd.f32 0.0, %v1178
        %v1180 = vpop.f32.mrb[0].mxu0
        %v1181 = vadd.f32 0.0, %v1180
        %v1182 = vpop.f32.mrb[0].mxu0
        %v1183 = vadd.f32 0.0, %v1182
        %v1184 = vpop.f32.mrb[0].mxu0
        %v1185 = vadd.f32 0.0, %v1184
        %1186 = vmatprep.mubr.bf16.mxu0 0
        %1187 = vmatmul.mubr.bf16.gmra.mrb[0].mxu0 %v522
        %v1188 = vpop.f32.mrb[0].mxu0
        %v1189 = vadd.f32 0.0, %v1188
        %v1190 = vpop.f32.mrb[0].mxu0
        %v1191 = vadd.f32 0.0, %v1190
        %v1192 = vpop.f32.mrb[0].mxu0
        %v1193 = vadd.f32 0.0, %v1192
        %v1194 = vpop.f32.mrb[0].mxu0
        %v1195 = vadd.f32 0.0, %v1194
        %1196 = vmatprep.mubr.bf16.mxu0 0
        %1197 = vmatmul.mubr.bf16.gmra.mrb[0].mxu0 %v525
        %v1198 = vpop.f32.mrb[0].mxu0
        %v1199 = vadd.f32 0.0, %v1198
        %v1200 = vpop.f32.mrb[0].mxu0
        %v1201 = vadd.f32 0.0, %v1200
        %v1202 = vpop.f32.mrb[0].mxu0
        %v1203 = vadd.f32 0.0, %v1202
        %v1204 = vpop.f32.mrb[0].mxu0
        %v1205 = vadd.f32 0.0, %v1204
        %1206 = vmatprep.mubr.bf16.mxu0 0
        %1207 = vmatmul.mubr.bf16.gmra.mrb[0].mxu0 %v528
        %v1208 = vpop.f32.mrb[0].mxu0
        %v1209 = vadd.f32 0.0, %v1208
        %v1210 = vpop.f32.mrb[0].mxu0
        %v1211 = vadd.f32 0.0, %v1210
        %v1212 = vpop.f32.mrb[0].mxu0
        %v1213 = vadd.f32 0.0, %v1212
        %v1214 = vpop.f32.mrb[0].mxu0
        %v1215 = vadd.f32 0.0, %v1214
        %1216 = vmatprep.mubr.bf16.mxu0 0
        %1217 = vmatmul.mubr.bf16.gmra.mrb[0].mxu0 %v531
        %v1218 = vpop.f32.mrb[0].mxu0
        %v1219 = vadd.f32 0.0, %v1218
        %v1220 = vpop.f32.mrb[0].mxu0
        %v1221 = vadd.f32 0.0, %v1220
        %v1222 = vpop.f32.mrb[0].mxu0
        %v1223 = vadd.f32 0.0, %v1222
        %v1224 = vpop.f32.mrb[0].mxu0
        %v1225 = vadd.f32 0.0, %v1224
        %1226 = vmatprep.mubr.bf16.mxu0 0
        %1227 = vmatmul.mubr.bf16.gmra.mrb[0].mxu0 %v534
        %v1228 = vpop.f32.mrb[0].mxu0
        %v1229 = vadd.f32 0.0, %v1228
        %v1230 = vpop.f32.mrb[0].mxu0
        %v1231 = vadd.f32 0.0, %v1230
        %v1232 = vpop.f32.mrb[0].mxu0
        %v1233 = vadd.f32 0.0, %v1232
        %v1234 = vpop.f32.mrb[0].mxu0
        %v1235 = vadd.f32 0.0, %v1234
        %1236 = vmatprep.mubr.bf16.mxu0 0
        %1237 = vmatmul.mubr.bf16.gmra.mrb[0].mxu0 %v537
        %v1238 = vpop.f32.mrb[0].mxu0
        %v1239 = vadd.f32 0.0, %v1238
        %v1240 = vpop.f32.mrb[0].mxu0
        %v1241 = vadd.f32 0.0, %v1240
        %v1242 = vpop.f32.mrb[0].mxu0
        %v1243 = vadd.f32 0.0, %v1242
        %v1244 = vpop.f32.mrb[0].mxu0
        %v1245 = vadd.f32 0.0, %v1244
        %1246 = vdwg.mxu0
        %1247 = vmatprep.subr.bf16.mxu0 %v1031
        %1248 = vmatpush1.bf16.msra.mxu0 %v1030
        %1249 = vmatprep.subr.bf16.mxu0 %v1058
        %1250 = vmatpush1.bf16.msra.mxu0 %v1057
        %1251 = vmatprep.subr.bf16.mxu0 %v1068
        %1252 = vmatpush1.bf16.msra.mxu0 %v1067
        %1253 = vmatprep.subr.bf16.mxu0 %v1078
        %1254 = vmatpush1.bf16.msra.mxu0 %v1077
        %1255 = vmatprep.subr.bf16.mxu0 %v1088
        %1256 = vmatpush1.bf16.msra.mxu0 %v1087
        %1257 = vmatprep.subr.bf16.mxu0 0
        %1258 = vmatpush1.bf16.msra.mxu0 0
        %1259 = vmatprep.subr.bf16.mxu0 0
        %1260 = vmatpush1.bf16.msra.mxu0 0
        %1261 = vmatprep.subr.bf16.mxu0 0
        %1262 = vmatpush1.bf16.msra.mxu0 0
        %1263 = vmatprep.subr.bf16.mxu0 0
        %1264 = vmatpush1.bf16.msra.mxu0 0
        %1265 = vmatprep.subr.bf16.mxu0 0
        %1266 = vmatpush1.bf16.msra.mxu0 0
        %1267 = vmatprep.subr.bf16.mxu0 0
        %1268 = vmatpush1.bf16.msra.mxu0 0
        %1269 = vmatprep.subr.bf16.mxu0 0
        %1270 = vmatpush1.bf16.msra.mxu0 0
        %1271 = vmatprep.subr.bf16.mxu0 0
        %1272 = vmatpush1.bf16.msra.mxu0 0
        %1273 = vmatprep.subr.bf16.mxu0 0
        %1274 = vmatpush1.bf16.msra.mxu0 0
        %1275 = vmatprep.subr.bf16.mxu0 0
        %1276 = vmatpush1.bf16.msra.mxu0 0
        %1277 = vmatprep.subr.bf16.mxu0 0
        %1278 = vmatpush1.bf16.msra.mxu0 0
        %1279 = vmatprep.mubr.bf16.mxu0 0
        %1280 = vmatmul.mubr.bf16.gmra.mrb[0].mxu0 %v693
        %v1281 = vpop.f32.mrb[0].mxu0
        %v1282 = vadd.f32 %v1169, %v1281
        %v1283 = vpop.f32.mrb[0].mxu0
        %v1284 = vadd.f32 %v1171, %v1283
        %v1285 = vpop.f32.mrb[0].mxu0
        %v1286 = vadd.f32 %v1173, %v1285
        %v1287 = vpop.f32.mrb[0].mxu0
        %v1288 = vadd.f32 %v1175, %v1287
        %1289 = vmatprep.mubr.bf16.mxu0 0
        %1290 = vmatmul.mubr.bf16.gmra.mrb[0].mxu0 %v696
        %v1291 = vpop.f32.mrb[0].mxu0
        %v1292 = vadd.f32 %v1179, %v1291
        %v1293 = vpop.f32.mrb[0].mxu0
        %v1294 = vadd.f32 %v1181, %v1293
        %v1295 = vpop.f32.mrb[0].mxu0
        %v1296 = vadd.f32 %v1183, %v1295
        %v1297 = vpop.f32.mrb[0].mxu0
        %v1298 = vadd.f32 %v1185, %v1297
        %1299 = vmatprep.mubr.bf16.mxu0 0
        %1300 = vmatmul.mubr.bf16.gmra.mrb[0].mxu0 %v699
        %v1301 = vpop.f32.mrb[0].mxu0
        %v1302 = vadd.f32 %v1189, %v1301
        %v1303 = vpop.f32.mrb[0].mxu0
        %v1304 = vadd.f32 %v1191, %v1303
        %v1305 = vpop.f32.mrb[0].mxu0
        %v1306 = vadd.f32 %v1193, %v1305
        %v1307 = vpop.f32.mrb[0].mxu0
        %v1308 = vadd.f32 %v1195, %v1307
        %1309 = vmatprep.mubr.bf16.mxu0 0
        %1310 = vmatmul.mubr.bf16.gmra.mrb[0].mxu0 %v702
        %v1311 = vpop.f32.mrb[0].mxu0
        %v1312 = vadd.f32 %v1199, %v1311
        %v1313 = vpop.f32.mrb[0].mxu0
        %v1314 = vadd.f32 %v1201, %v1313
        %v1315 = vpop.f32.mrb[0].mxu0
        %v1316 = vadd.f32 %v1203, %v1315
        %v1317 = vpop.f32.mrb[0].mxu0
        %v1318 = vadd.f32 %v1205, %v1317
        %1319 = vmatprep.mubr.bf16.mxu0 0
        %1320 = vmatmul.mubr.bf16.gmra.mrb[0].mxu0 %v705
        %v1321 = vpop.f32.mrb[0].mxu0
        %v1322 = vadd.f32 %v1209, %v1321
        %v1323 = vpop.f32.mrb[0].mxu0
        %v1324 = vadd.f32 %v1211, %v1323
        %v1325 = vpop.f32.mrb[0].mxu0
        %v1326 = vadd.f32 %v1213, %v1325
        %v1327 = vpop.f32.mrb[0].mxu0
        %v1328 = vadd.f32 %v1215, %v1327
        %1329 = vmatprep.mubr.bf16.mxu0 0
        %1330 = vmatmul.mubr.bf16.gmra.mrb[0].mxu0 %v708
        %v1331 = vpop.f32.mrb[0].mxu0
        %v1332 = vadd.f32 %v1219, %v1331
        %v1333 = vpop.f32.mrb[0].mxu0
        %v1334 = vadd.f32 %v1221, %v1333
        %v1335 = vpop.f32.mrb[0].mxu0
        %v1336 = vadd.f32 %v1223, %v1335
        %v1337 = vpop.f32.mrb[0].mxu0
        %v1338 = vadd.f32 %v1225, %v1337
        %1339 = vmatprep.mubr.bf16.mxu0 0
        %1340 = vmatmul.mubr.bf16.gmra.mrb[0].mxu0 %v711
        %v1341 = vpop.f32.mrb[0].mxu0
        %v1342 = vadd.f32 %v1229, %v1341
        %v1343 = vpop.f32.mrb[0].mxu0
        %v1344 = vadd.f32 %v1231, %v1343
        %v1345 = vpop.f32.mrb[0].mxu0
        %v1346 = vadd.f32 %v1233, %v1345
        %v1347 = vpop.f32.mrb[0].mxu0
        %v1348 = vadd.f32 %v1235, %v1347
        %1349 = vmatprep.mubr.bf16.mxu0 0
        %1350 = vmatmul.mubr.bf16.gmra.mrb[0].mxu0 %v714
        %v1351 = vpop.f32.mrb[0].mxu0
        %v1352 = vadd.f32 %v1239, %v1351
        %v1353 = vpop.f32.mrb[0].mxu0
        %v1354 = vadd.f32 %v1241, %v1353
        %v1355 = vpop.f32.mrb[0].mxu0
        %v1356 = vadd.f32 %v1243, %v1355
        %v1357 = vpop.f32.mrb[0].mxu0
        %v1358 = vadd.f32 %v1245, %v1357
        %1359 = vdwg.mxu0
        %1360 = vmatprep.subr.bf16.mxu0 %v1046
        %1361 = vmatpush1.bf16.msra.mxu0 %v1045
        %1362 = vmatprep.subr.bf16.mxu0 %v1101
        %1363 = vmatpush1.bf16.msra.mxu0 %v1100
        %1364 = vmatprep.subr.bf16.mxu0 %v1111
        %1365 = vmatpush1.bf16.msra.mxu0 %v1110
        %1366 = vmatprep.subr.bf16.mxu0 %v1121
        %1367 = vmatpush1.bf16.msra.mxu0 %v1120
        %1368 = vmatprep.subr.bf16.mxu0 %v1131
        %1369 = vmatpush1.bf16.msra.mxu0 %v1130
        %1370 = vmatprep.subr.bf16.mxu0 0
        %1371 = vmatpush1.bf16.msra.mxu0 0
        %1372 = vmatprep.subr.bf16.mxu0 0
        %1373 = vmatpush1.bf16.msra.mxu0 0
        %1374 = vmatprep.subr.bf16.mxu0 0
        %1375 = vmatpush1.bf16.msra.mxu0 0
        %1376 = vmatprep.subr.bf16.mxu0 0
        %1377 = vmatpush1.bf16.msra.mxu0 0
        %1378 = vmatprep.subr.bf16.mxu0 0
        %1379 = vmatpush1.bf16.msra.mxu0 0
        %1380 = vmatprep.subr.bf16.mxu0 0
        %1381 = vmatpush1.bf16.msra.mxu0 0
        %1382 = vmatprep.subr.bf16.mxu0 0
        %1383 = vmatpush1.bf16.msra.mxu0 0
        %1384 = vmatprep.subr.bf16.mxu0 0
        %1385 = vmatpush1.bf16.msra.mxu0 0
        %1386 = vmatprep.subr.bf16.mxu0 0
        %1387 = vmatpush1.bf16.msra.mxu0 0
        %1388 = vmatprep.subr.bf16.mxu0 0
        %1389 = vmatpush1.bf16.msra.mxu0 0
        %1390 = vmatprep.subr.bf16.mxu0 0
        %1391 = vmatpush1.bf16.msra.mxu0 0
        %1392 = vmatprep.mubr.bf16.mxu0 0
        %1393 = vmatmul.mubr.bf16.gmra.mrb[0].mxu0 %v693
        %v1394 = vpop.f32.mrb[0].mxu0
        %v1395 = vadd.f32 0.0, %v1394
        %v1396 = vpop.f32.mrb[0].mxu0
        %v1397 = vadd.f32 0.0, %v1396
        %v1398 = vpop.f32.mrb[0].mxu0
        %v1399 = vadd.f32 0.0, %v1398
        %v1400 = vpop.f32.mrb[0].mxu0
        %v1401 = vadd.f32 0.0, %v1400
        %1402 = vmatprep.mubr.bf16.mxu0 0
        %1403 = vmatmul.mubr.bf16.gmra.mrb[0].mxu0 %v696
        %v1404 = vpop.f32.mrb[0].mxu0
        %v1405 = vadd.f32 0.0, %v1404
        %v1406 = vpop.f32.mrb[0].mxu0
        %v1407 = vadd.f32 0.0, %v1406
        %v1408 = vpop.f32.mrb[0].mxu0
        %v1409 = vadd.f32 0.0, %v1408
        %v1410 = vpop.f32.mrb[0].mxu0
        %v1411 = vadd.f32 0.0, %v1410
        %1412 = vmatprep.mubr.bf16.mxu0 0
        %1413 = vmatmul.mubr.bf16.gmra.mrb[0].mxu0 %v699
        %v1414 = vpop.f32.mrb[0].mxu0
        %v1415 = vadd.f32 0.0, %v1414
        %v1416 = vpop.f32.mrb[0].mxu0
        %v1417 = vadd.f32 0.0, %v1416
        %v1418 = vpop.f32.mrb[0].mxu0
        %v1419 = vadd.f32 0.0, %v1418
        %v1420 = vpop.f32.mrb[0].mxu0
        %v1421 = vadd.f32 0.0, %v1420
        %1422 = vmatprep.mubr.bf16.mxu0 0
        %1423 = vmatmul.mubr.bf16.gmra.mrb[0].mxu0 %v702
        %v1424 = vpop.f32.mrb[0].mxu0
        %v1425 = vadd.f32 0.0, %v1424
        %v1426 = vpop.f32.mrb[0].mxu0
        %v1427 = vadd.f32 0.0, %v1426
        %v1428 = vpop.f32.mrb[0].mxu0
        %v1429 = vadd.f32 0.0, %v1428
        %v1430 = vpop.f32.mrb[0].mxu0
        %v1431 = vadd.f32 0.0, %v1430
        %1432 = vmatprep.mubr.bf16.mxu0 0
        %1433 = vmatmul.mubr.bf16.gmra.mrb[0].mxu0 %v705
        %v1434 = vpop.f32.mrb[0].mxu0
        %v1435 = vadd.f32 0.0, %v1434
        %v1436 = vpop.f32.mrb[0].mxu0
        %v1437 = vadd.f32 0.0, %v1436
        %v1438 = vpop.f32.mrb[0].mxu0
        %v1439 = vadd.f32 0.0, %v1438
        %v1440 = vpop.f32.mrb[0].mxu0
        %v1441 = vadd.f32 0.0, %v1440
        %1442 = vmatprep.mubr.bf16.mxu0 0
        %1443 = vmatmul.mubr.bf16.gmra.mrb[0].mxu0 %v708
        %v1444 = vpop.f32.mrb[0].mxu0
        %v1445 = vadd.f32 0.0, %v1444
        %v1446 = vpop.f32.mrb[0].mxu0
        %v1447 = vadd.f32 0.0, %v1446
        %v1448 = vpop.f32.mrb[0].mxu0
        %v1449 = vadd.f32 0.0, %v1448
        %v1450 = vpop.f32.mrb[0].mxu0
        %v1451 = vadd.f32 0.0, %v1450
        %1452 = vmatprep.mubr.bf16.mxu0 0
        %1453 = vmatmul.mubr.bf16.gmra.mrb[0].mxu0 %v711
        %v1454 = vpop.f32.mrb[0].mxu0
        %v1455 = vadd.f32 0.0, %v1454
        %v1456 = vpop.f32.mrb[0].mxu0
        %v1457 = vadd.f32 0.0, %v1456
        %v1458 = vpop.f32.mrb[0].mxu0
        %v1459 = vadd.f32 0.0, %v1458
        %v1460 = vpop.f32.mrb[0].mxu0
        %v1461 = vadd.f32 0.0, %v1460
        %1462 = vmatprep.mubr.bf16.mxu0 0
        %1463 = vmatmul.mubr.bf16.gmra.mrb[0].mxu0 %v714
        %v1464 = vpop.f32.mrb[0].mxu0
        %v1465 = vadd.f32 0.0, %v1464
        %v1466 = vpop.f32.mrb[0].mxu0
        %v1467 = vadd.f32 0.0, %v1466
        %v1468 = vpop.f32.mrb[0].mxu0
        %v1469 = vadd.f32 0.0, %v1468
        %v1470 = vpop.f32.mrb[0].mxu0
        %v1471 = vadd.f32 0.0, %v1470
        %1472 = vdwg.mxu0
        %v1473 = vadd.f32 %v1282, %v1395
        %v1474 = vadd.f32 %v1284, %v1397
        %v1475 = vadd.f32 %v1286, %v1399
        %v1476 = vadd.f32 %v1288, %v1401
        %v1477 = vadd.f32 %v1292, %v1405
        %v1478 = vadd.f32 %v1294, %v1407
        %v1479 = vadd.f32 %v1296, %v1409
        %v1480 = vadd.f32 %v1298, %v1411
        %v1481 = vadd.f32 %v1302, %v1415
        %v1482 = vadd.f32 %v1304, %v1417
        %v1483 = vadd.f32 %v1306, %v1419
        %v1484 = vadd.f32 %v1308, %v1421
        %v1485 = vadd.f32 %v1312, %v1425
        %v1486 = vadd.f32 %v1314, %v1427
        %v1487 = vadd.f32 %v1316, %v1429
        %v1488 = vadd.f32 %v1318, %v1431
        %v1489 = vadd.f32 %v1322, %v1435
        %v1490 = vadd.f32 %v1324, %v1437
        %v1491 = vadd.f32 %v1326, %v1439
        %v1492 = vadd.f32 %v1328, %v1441
        %v1493 = vadd.f32 %v1332, %v1445
        %v1494 = vadd.f32 %v1334, %v1447
        %v1495 = vadd.f32 %v1336, %v1449
        %v1496 = vadd.f32 %v1338, %v1451
        %v1497 = vadd.f32 %v1342, %v1455
        %v1498 = vadd.f32 %v1344, %v1457
        %v1499 = vadd.f32 %v1346, %v1459
        %v1500 = vadd.f32 %v1348, %v1461
        %v1501 = vadd.f32 %v1352, %v1465
        %v1502 = vadd.f32 %v1354, %v1467
        %v1503 = vadd.f32 %v1356, %v1469
        %v1504 = vadd.f32 %v1358, %v1471
        %v1505 = vmax.f32 %v1473, %v1477
        %v1506 = vmax.f32 %v1474, %v1478
        %v1507 = vmax.f32 %v1475, %v1479
        %v1508 = vmax.f32 %v1476, %v1480
        %v1509 = vmax.f32 %v1481, %v1485
        %v1510 = vmax.f32 %v1482, %v1486
        %v1511 = vmax.f32 %v1483, %v1487
        %v1512 = vmax.f32 %v1484, %v1488
        %v1513 = vmax.f32 %v1489, %v1493
        %v1514 = vmax.f32 %v1490, %v1494
        %v1515 = vmax.f32 %v1491, %v1495
        %v1516 = vmax.f32 %v1492, %v1496
        %v1517 = vmax.f32 %v1497, %v1501
        %v1518 = vmax.f32 %v1498, %v1502
        %v1519 = vmax.f32 %v1499, %v1503
        %v1520 = vmax.f32 %v1500, %v1504
        %v1521 = vmax.f32 %v1505, %v1509
        %v1522 = vmax.f32 %v1506, %v1510
        %v1523 = vmax.f32 %v1507, %v1511
        %v1524 = vmax.f32 %v1508, %v1512
        %v1525 = vmax.f32 %v1513, %v1517
        %v1526 = vmax.f32 %v1514, %v1518
        %v1527 = vmax.f32 %v1515, %v1519
        %v1528 = vmax.f32 %v1516, %v1520
        %v1529 = vmax.f32 %v1521, %v1525
        %v1530 = vmax.f32 %v1522, %v1526
        %v1531 = vmax.f32 %v1523, %v1527
        %v1532 = vmax.f32 %v1524, %v1528
        %v1533 = vadd.f32 %v1529, %v1005
        %v1534 = vadd.f32 %v1530, %v1005
        %v1535 = vadd.f32 %v1531, %v1010
        %v1536 = vadd.f32 %v1532, %v1010
        %v1537 = vmax.f32 %v1533, 0.0
        %v1538 = vmax.f32 %v1534, 0.0
        %v1539 = vmax.f32 %v1535, 0.0
        %v1540 = vmax.f32 %v1536, 0.0
        %1541 = vst [vmem:[%s316 + $0x10] sm:$0xff] %v1537
        %1542 = vst [vmem:[%s316 + $0x18] sm:$0xff] %v1538
        %1543 = vst [vmem:[%s316 + $0x60] sm:$0xff] %v1539
        %1544 = vst [vmem:[%s316 + $0x68] sm:$0xff] %v1540
        %v1545 = vld [vmem:[%s276 + $0x20] sm:$0xff]
        %v1546 = vld [vmem:[%s276 + $0x28] sm:$0xff]
        %v1547 = vld [vmem:[%s276 + $0x30] sm:$0xff]
        %v1548 = vld [vmem:[%s276 + $0x70] sm:$0xff]
        %v1549 = vld [vmem:[%s276 + $0x78] sm:$0xff]
        %v1550 = vld [vmem:[%s276 + $0x80] sm:$0xff]
        %v1551 = vpack.c.bf16 %v1548, %v1545
        %v1552 = vpack.c.bf16 %v1549, %v1546
        %v1553 = vpack.c.bf16 %v1550, %v1547
        %v1554 = vunpack.c.l.bf16 %v1551
        %v1555 = vunpack.c.l.bf16 %v1552
        %v1556 = vunpack.c.l.bf16 %v1553
        %v1557 = vunpack.c.h.bf16 %v1551
        %v1558 = vunpack.c.h.bf16 %v1552
        %v1559 = vunpack.c.h.bf16 %v1553
        %v1560 = vsub.f32 %v1545, %v1554
        %v1561 = vsub.f32 %v1546, %v1555
        %v1562 = vsub.f32 %v1547, %v1556
        %v1563 = vsub.f32 %v1548, %v1557
        %v1564 = vsub.f32 %v1549, %v1558
        %v1565 = vsub.f32 %v1550, %v1559
        %v1566 = vpack.c.bf16 %v1563, %v1560
        %v1567 = vpack.c.bf16 %v1564, %v1561
        %v1568 = vpack.c.bf16 %v1565, %v1562
        %1572 = vrot.lane.b32.xlu0 %v1551, 127
        %v1573 = vpop.permute.xlu0 %1572
        %1574 = vrot.lane.b32.xlu0 %v1552, 127
        %v1575 = vpop.permute.xlu0 %1574
        %1576 = vrot.lane.b32.xlu0 %v1553, 127
        %v1577 = vpop.permute.xlu0 %1576
        %v1578 = vsel %vm393, %v1573, %v1575
        %v1579 = vsel %vm393, %v1575, %v1577
        %1582 = vrot.lane.b32.xlu0 %v1551, 126
        %v1583 = vpop.permute.xlu0 %1582
        %1584 = vrot.lane.b32.xlu0 %v1552, 126
        %v1585 = vpop.permute.xlu0 %1584
        %1586 = vrot.lane.b32.xlu0 %v1553, 126
        %v1587 = vpop.permute.xlu0 %1586
        %v1588 = vsel %vm404, %v1583, %v1585
        %v1589 = vsel %vm404, %v1585, %v1587
        %1592 = vrot.lane.b32.xlu0 %v1551, 125
        %v1593 = vpop.permute.xlu0 %1592
        %1594 = vrot.lane.b32.xlu0 %v1552, 125
        %v1595 = vpop.permute.xlu0 %1594
        %1596 = vrot.lane.b32.xlu0 %v1553, 125
        %v1597 = vpop.permute.xlu0 %1596
        %v1598 = vsel %vm415, %v1593, %v1595
        %v1599 = vsel %vm415, %v1595, %v1597
        %1602 = vrot.lane.b32.xlu0 %v1551, 124
        %v1603 = vpop.permute.xlu0 %1602
        %1604 = vrot.lane.b32.xlu0 %v1552, 124
        %v1605 = vpop.permute.xlu0 %1604
        %1606 = vrot.lane.b32.xlu0 %v1553, 124
        %v1607 = vpop.permute.xlu0 %1606
        %v1608 = vsel %vm426, %v1603, %v1605
        %v1609 = vsel %vm426, %v1605, %v1607
        %1615 = vrot.lane.b32.xlu0 %v1566, 127
        %v1616 = vpop.permute.xlu0 %1615
        %1617 = vrot.lane.b32.xlu0 %v1567, 127
        %v1618 = vpop.permute.xlu0 %1617
        %1619 = vrot.lane.b32.xlu0 %v1568, 127
        %v1620 = vpop.permute.xlu0 %1619
        %v1621 = vsel %vm393, %v1616, %v1618
        %v1622 = vsel %vm393, %v1618, %v1620
        %1625 = vrot.lane.b32.xlu0 %v1566, 126
        %v1626 = vpop.permute.xlu0 %1625
        %1627 = vrot.lane.b32.xlu0 %v1567, 126
        %v1628 = vpop.permute.xlu0 %1627
        %1629 = vrot.lane.b32.xlu0 %v1568, 126
        %v1630 = vpop.permute.xlu0 %1629
        %v1631 = vsel %vm404, %v1626, %v1628
        %v1632 = vsel %vm404, %v1628, %v1630
        %1635 = vrot.lane.b32.xlu0 %v1566, 125
        %v1636 = vpop.permute.xlu0 %1635
        %1637 = vrot.lane.b32.xlu0 %v1567, 125
        %v1638 = vpop.permute.xlu0 %1637
        %1639 = vrot.lane.b32.xlu0 %v1568, 125
        %v1640 = vpop.permute.xlu0 %1639
        %v1641 = vsel %vm415, %v1636, %v1638
        %v1642 = vsel %vm415, %v1638, %v1640
        %1645 = vrot.lane.b32.xlu0 %v1566, 124
        %v1646 = vpop.permute.xlu0 %1645
        %1647 = vrot.lane.b32.xlu0 %v1567, 124
        %v1648 = vpop.permute.xlu0 %1647
        %1649 = vrot.lane.b32.xlu0 %v1568, 124
        %v1650 = vpop.permute.xlu0 %1649
        %v1651 = vsel %vm426, %v1646, %v1648
        %v1652 = vsel %vm426, %v1648, %v1650
        %1655 = vmatprep.subr.bf16.mxu0 %v1552
        %1656 = vmatpush1.bf16.msra.mxu0 %v1551
        %1657 = vmatprep.subr.bf16.mxu0 %v1579
        %1658 = vmatpush1.bf16.msra.mxu0 %v1578
        %1659 = vmatprep.subr.bf16.mxu0 %v1589
        %1660 = vmatpush1.bf16.msra.mxu0 %v1588
        %1661 = vmatprep.subr.bf16.mxu0 %v1599
        %1662 = vmatpush1.bf16.msra.mxu0 %v1598
        %1663 = vmatprep.subr.bf16.mxu0 %v1609
        %1664 = vmatpush1.bf16.msra.mxu0 %v1608
        %1665 = vmatprep.subr.bf16.mxu0 0
        %1666 = vmatpush1.bf16.msra.mxu0 0
        %1667 = vmatprep.subr.bf16.mxu0 0
        %1668 = vmatpush1.bf16.msra.mxu0 0
        %1669 = vmatprep.subr.bf16.mxu0 0
        %1670 = vmatpush1.bf16.msra.mxu0 0
        %1671 = vmatprep.subr.bf16.mxu0 0
        %1672 = vmatpush1.bf16.msra.mxu0 0
        %1673 = vmatprep.subr.bf16.mxu0 0
        %1674 = vmatpush1.bf16.msra.mxu0 0
        %1675 = vmatprep.subr.bf16.mxu0 0
        %1676 = vmatpush1.bf16.msra.mxu0 0
        %1677 = vmatprep.subr.bf16.mxu0 0
        %1678 = vmatpush1.bf16.msra.mxu0 0
        %1679 = vmatprep.subr.bf16.mxu0 0
        %1680 = vmatpush1.bf16.msra.mxu0 0
        %1681 = vmatprep.subr.bf16.mxu0 0
        %1682 = vmatpush1.bf16.msra.mxu0 0
        %1683 = vmatprep.subr.bf16.mxu0 0
        %1684 = vmatpush1.bf16.msra.mxu0 0
        %1685 = vmatprep.subr.bf16.mxu0 0
        %1686 = vmatpush1.bf16.msra.mxu0 0
        %1687 = vmatprep.mubr.bf16.mxu0 0
        %1688 = vmatmul.mubr.bf16.gmra.mrb[0].mxu0 %v516
        %v1689 = vpop.f32.mrb[0].mxu0
        %v1690 = vadd.f32 0.0, %v1689
        %v1691 = vpop.f32.mrb[0].mxu0
        %v1692 = vadd.f32 0.0, %v1691
        %v1693 = vpop.f32.mrb[0].mxu0
        %v1694 = vadd.f32 0.0, %v1693
        %v1695 = vpop.f32.mrb[0].mxu0
        %v1696 = vadd.f32 0.0, %v1695
        %1697 = vmatprep.mubr.bf16.mxu0 0
        %1698 = vmatmul.mubr.bf16.gmra.mrb[0].mxu0 %v519
        %v1699 = vpop.f32.mrb[0].mxu0
        %v1700 = vadd.f32 0.0, %v1699
        %v1701 = vpop.f32.mrb[0].mxu0
        %v1702 = vadd.f32 0.0, %v1701
        %v1703 = vpop.f32.mrb[0].mxu0
        %v1704 = vadd.f32 0.0, %v1703
        %v1705 = vpop.f32.mrb[0].mxu0
        %v1706 = vadd.f32 0.0, %v1705
        %1707 = vmatprep.mubr.bf16.mxu0 0
        %1708 = vmatmul.mubr.bf16.gmra.mrb[0].mxu0 %v522
        %v1709 = vpop.f32.mrb[0].mxu0
        %v1710 = vadd.f32 0.0, %v1709
        %v1711 = vpop.f32.mrb[0].mxu0
        %v1712 = vadd.f32 0.0, %v1711
        %v1713 = vpop.f32.mrb[0].mxu0
        %v1714 = vadd.f32 0.0, %v1713
        %v1715 = vpop.f32.mrb[0].mxu0
        %v1716 = vadd.f32 0.0, %v1715
        %1717 = vmatprep.mubr.bf16.mxu0 0
        %1718 = vmatmul.mubr.bf16.gmra.mrb[0].mxu0 %v525
        %v1719 = vpop.f32.mrb[0].mxu0
        %v1720 = vadd.f32 0.0, %v1719
        %v1721 = vpop.f32.mrb[0].mxu0
        %v1722 = vadd.f32 0.0, %v1721
        %v1723 = vpop.f32.mrb[0].mxu0
        %v1724 = vadd.f32 0.0, %v1723
        %v1725 = vpop.f32.mrb[0].mxu0
        %v1726 = vadd.f32 0.0, %v1725
        %1727 = vmatprep.mubr.bf16.mxu0 0
        %1728 = vmatmul.mubr.bf16.gmra.mrb[0].mxu0 %v528
        %v1729 = vpop.f32.mrb[0].mxu0
        %v1730 = vadd.f32 0.0, %v1729
        %v1731 = vpop.f32.mrb[0].mxu0
        %v1732 = vadd.f32 0.0, %v1731
        %v1733 = vpop.f32.mrb[0].mxu0
        %v1734 = vadd.f32 0.0, %v1733
        %v1735 = vpop.f32.mrb[0].mxu0
        %v1736 = vadd.f32 0.0, %v1735
        %1737 = vmatprep.mubr.bf16.mxu0 0
        %1738 = vmatmul.mubr.bf16.gmra.mrb[0].mxu0 %v531
        %v1739 = vpop.f32.mrb[0].mxu0
        %v1740 = vadd.f32 0.0, %v1739
        %v1741 = vpop.f32.mrb[0].mxu0
        %v1742 = vadd.f32 0.0, %v1741
        %v1743 = vpop.f32.mrb[0].mxu0
        %v1744 = vadd.f32 0.0, %v1743
        %v1745 = vpop.f32.mrb[0].mxu0
        %v1746 = vadd.f32 0.0, %v1745
        %1747 = vmatprep.mubr.bf16.mxu0 0
        %1748 = vmatmul.mubr.bf16.gmra.mrb[0].mxu0 %v534
        %v1749 = vpop.f32.mrb[0].mxu0
        %v1750 = vadd.f32 0.0, %v1749
        %v1751 = vpop.f32.mrb[0].mxu0
        %v1752 = vadd.f32 0.0, %v1751
        %v1753 = vpop.f32.mrb[0].mxu0
        %v1754 = vadd.f32 0.0, %v1753
        %v1755 = vpop.f32.mrb[0].mxu0
        %v1756 = vadd.f32 0.0, %v1755
        %1757 = vmatprep.mubr.bf16.mxu0 0
        %1758 = vmatmul.mubr.bf16.gmra.mrb[0].mxu0 %v537
        %v1759 = vpop.f32.mrb[0].mxu0
        %v1760 = vadd.f32 0.0, %v1759
        %v1761 = vpop.f32.mrb[0].mxu0
        %v1762 = vadd.f32 0.0, %v1761
        %v1763 = vpop.f32.mrb[0].mxu0
        %v1764 = vadd.f32 0.0, %v1763
        %v1765 = vpop.f32.mrb[0].mxu0
        %v1766 = vadd.f32 0.0, %v1765
        %1767 = vdwg.mxu0
        %1768 = vmatprep.subr.bf16.mxu0 %v1552
        %1769 = vmatpush1.bf16.msra.mxu0 %v1551
        %1770 = vmatprep.subr.bf16.mxu0 %v1579
        %1771 = vmatpush1.bf16.msra.mxu0 %v1578
        %1772 = vmatprep.subr.bf16.mxu0 %v1589
        %1773 = vmatpush1.bf16.msra.mxu0 %v1588
        %1774 = vmatprep.subr.bf16.mxu0 %v1599
        %1775 = vmatpush1.bf16.msra.mxu0 %v1598
        %1776 = vmatprep.subr.bf16.mxu0 %v1609
        %1777 = vmatpush1.bf16.msra.mxu0 %v1608
        %1778 = vmatprep.subr.bf16.mxu0 0
        %1779 = vmatpush1.bf16.msra.mxu0 0
        %1780 = vmatprep.subr.bf16.mxu0 0
        %1781 = vmatpush1.bf16.msra.mxu0 0
        %1782 = vmatprep.subr.bf16.mxu0 0
        %1783 = vmatpush1.bf16.msra.mxu0 0
        %1784 = vmatprep.subr.bf16.mxu0 0
        %1785 = vmatpush1.bf16.msra.mxu0 0
        %1786 = vmatprep.subr.bf16.mxu0 0
        %1787 = vmatpush1.bf16.msra.mxu0 0
        %1788 = vmatprep.subr.bf16.mxu0 0
        %1789 = vmatpush1.bf16.msra.mxu0 0
        %1790 = vmatprep.subr.bf16.mxu0 0
        %1791 = vmatpush1.bf16.msra.mxu0 0
        %1792 = vmatprep.subr.bf16.mxu0 0
        %1793 = vmatpush1.bf16.msra.mxu0 0
        %1794 = vmatprep.subr.bf16.mxu0 0
        %1795 = vmatpush1.bf16.msra.mxu0 0
        %1796 = vmatprep.subr.bf16.mxu0 0
        %1797 = vmatpush1.bf16.msra.mxu0 0
        %1798 = vmatprep.subr.bf16.mxu0 0
        %1799 = vmatpush1.bf16.msra.mxu0 0
        %1800 = vmatprep.mubr.bf16.mxu0 0
        %1801 = vmatmul.mubr.bf16.gmra.mrb[0].mxu0 %v693
        %v1802 = vpop.f32.mrb[0].mxu0
        %v1803 = vadd.f32 %v1690, %v1802
        %v1804 = vpop.f32.mrb[0].mxu0
        %v1805 = vadd.f32 %v1692, %v1804
        %v1806 = vpop.f32.mrb[0].mxu0
        %v1807 = vadd.f32 %v1694, %v1806
        %v1808 = vpop.f32.mrb[0].mxu0
        %v1809 = vadd.f32 %v1696, %v1808
        %1810 = vmatprep.mubr.bf16.mxu0 0
        %1811 = vmatmul.mubr.bf16.gmra.mrb[0].mxu0 %v696
        %v1812 = vpop.f32.mrb[0].mxu0
        %v1813 = vadd.f32 %v1700, %v1812
        %v1814 = vpop.f32.mrb[0].mxu0
        %v1815 = vadd.f32 %v1702, %v1814
        %v1816 = vpop.f32.mrb[0].mxu0
        %v1817 = vadd.f32 %v1704, %v1816
        %v1818 = vpop.f32.mrb[0].mxu0
        %v1819 = vadd.f32 %v1706, %v1818
        %1820 = vmatprep.mubr.bf16.mxu0 0
        %1821 = vmatmul.mubr.bf16.gmra.mrb[0].mxu0 %v699
        %v1822 = vpop.f32.mrb[0].mxu0
        %v1823 = vadd.f32 %v1710, %v1822
        %v1824 = vpop.f32.mrb[0].mxu0
        %v1825 = vadd.f32 %v1712, %v1824
        %v1826 = vpop.f32.mrb[0].mxu0
        %v1827 = vadd.f32 %v1714, %v1826
        %v1828 = vpop.f32.mrb[0].mxu0
        %v1829 = vadd.f32 %v1716, %v1828
        %1830 = vmatprep.mubr.bf16.mxu0 0
        %1831 = vmatmul.mubr.bf16.gmra.mrb[0].mxu0 %v702
        %v1832 = vpop.f32.mrb[0].mxu0
        %v1833 = vadd.f32 %v1720, %v1832
        %v1834 = vpop.f32.mrb[0].mxu0
        %v1835 = vadd.f32 %v1722, %v1834
        %v1836 = vpop.f32.mrb[0].mxu0
        %v1837 = vadd.f32 %v1724, %v1836
        %v1838 = vpop.f32.mrb[0].mxu0
        %v1839 = vadd.f32 %v1726, %v1838
        %1840 = vmatprep.mubr.bf16.mxu0 0
        %1841 = vmatmul.mubr.bf16.gmra.mrb[0].mxu0 %v705
        %v1842 = vpop.f32.mrb[0].mxu0
        %v1843 = vadd.f32 %v1730, %v1842
        %v1844 = vpop.f32.mrb[0].mxu0
        %v1845 = vadd.f32 %v1732, %v1844
        %v1846 = vpop.f32.mrb[0].mxu0
        %v1847 = vadd.f32 %v1734, %v1846
        %v1848 = vpop.f32.mrb[0].mxu0
        %v1849 = vadd.f32 %v1736, %v1848
        %1850 = vmatprep.mubr.bf16.mxu0 0
        %1851 = vmatmul.mubr.bf16.gmra.mrb[0].mxu0 %v708
        %v1852 = vpop.f32.mrb[0].mxu0
        %v1853 = vadd.f32 %v1740, %v1852
        %v1854 = vpop.f32.mrb[0].mxu0
        %v1855 = vadd.f32 %v1742, %v1854
        %v1856 = vpop.f32.mrb[0].mxu0
        %v1857 = vadd.f32 %v1744, %v1856
        %v1858 = vpop.f32.mrb[0].mxu0
        %v1859 = vadd.f32 %v1746, %v1858
        %1860 = vmatprep.mubr.bf16.mxu0 0
        %1861 = vmatmul.mubr.bf16.gmra.mrb[0].mxu0 %v711
        %v1862 = vpop.f32.mrb[0].mxu0
        %v1863 = vadd.f32 %v1750, %v1862
        %v1864 = vpop.f32.mrb[0].mxu0
        %v1865 = vadd.f32 %v1752, %v1864
        %v1866 = vpop.f32.mrb[0].mxu0
        %v1867 = vadd.f32 %v1754, %v1866
        %v1868 = vpop.f32.mrb[0].mxu0
        %v1869 = vadd.f32 %v1756, %v1868
        %1870 = vmatprep.mubr.bf16.mxu0 0
        %1871 = vmatmul.mubr.bf16.gmra.mrb[0].mxu0 %v714
        %v1872 = vpop.f32.mrb[0].mxu0
        %v1873 = vadd.f32 %v1760, %v1872
        %v1874 = vpop.f32.mrb[0].mxu0
        %v1875 = vadd.f32 %v1762, %v1874
        %v1876 = vpop.f32.mrb[0].mxu0
        %v1877 = vadd.f32 %v1764, %v1876
        %v1878 = vpop.f32.mrb[0].mxu0
        %v1879 = vadd.f32 %v1766, %v1878
        %1880 = vdwg.mxu0
        %1881 = vmatprep.subr.bf16.mxu0 %v1567
        %1882 = vmatpush1.bf16.msra.mxu0 %v1566
        %1883 = vmatprep.subr.bf16.mxu0 %v1622
        %1884 = vmatpush1.bf16.msra.mxu0 %v1621
        %1885 = vmatprep.subr.bf16.mxu0 %v1632
        %1886 = vmatpush1.bf16.msra.mxu0 %v1631
        %1887 = vmatprep.subr.bf16.mxu0 %v1642
        %1888 = vmatpush1.bf16.msra.mxu0 %v1641
        %1889 = vmatprep.subr.bf16.mxu0 %v1652
        %1890 = vmatpush1.bf16.msra.mxu0 %v1651
        %1891 = vmatprep.subr.bf16.mxu0 0
        %1892 = vmatpush1.bf16.msra.mxu0 0
        %1893 = vmatprep.subr.bf16.mxu0 0
        %1894 = vmatpush1.bf16.msra.mxu0 0
        %1895 = vmatprep.subr.bf16.mxu0 0
        %1896 = vmatpush1.bf16.msra.mxu0 0
        %1897 = vmatprep.subr.bf16.mxu0 0
        %1898 = vmatpush1.bf16.msra.mxu0 0
        %1899 = vmatprep.subr.bf16.mxu0 0
        %1900 = vmatpush1.bf16.msra.mxu0 0
        %1901 = vmatprep.subr.bf16.mxu0 0
        %1902 = vmatpush1.bf16.msra.mxu0 0
        %1903 = vmatprep.subr.bf16.mxu0 0
        %1904 = vmatpush1.bf16.msra.mxu0 0
        %1905 = vmatprep.subr.bf16.mxu0 0
        %1906 = vmatpush1.bf16.msra.mxu0 0
        %1907 = vmatprep.subr.bf16.mxu0 0
        %1908 = vmatpush1.bf16.msra.mxu0 0
        %1909 = vmatprep.subr.bf16.mxu0 0
        %1910 = vmatpush1.bf16.msra.mxu0 0
        %1911 = vmatprep.subr.bf16.mxu0 0
        %1912 = vmatpush1.bf16.msra.mxu0 0
        %1913 = vmatprep.mubr.bf16.mxu0 0
        %1914 = vmatmul.mubr.bf16.gmra.mrb[0].mxu0 %v693
        %v1915 = vpop.f32.mrb[0].mxu0
        %v1916 = vadd.f32 0.0, %v1915
        %v1917 = vpop.f32.mrb[0].mxu0
        %v1918 = vadd.f32 0.0, %v1917
        %v1919 = vpop.f32.mrb[0].mxu0
        %v1920 = vadd.f32 0.0, %v1919
        %v1921 = vpop.f32.mrb[0].mxu0
        %v1922 = vadd.f32 0.0, %v1921
        %1923 = vmatprep.mubr.bf16.mxu0 0
        %1924 = vmatmul.mubr.bf16.gmra.mrb[0].mxu0 %v696
        %v1925 = vpop.f32.mrb[0].mxu0
        %v1926 = vadd.f32 0.0, %v1925
        %v1927 = vpop.f32.mrb[0].mxu0
        %v1928 = vadd.f32 0.0, %v1927
        %v1929 = vpop.f32.mrb[0].mxu0
        %v1930 = vadd.f32 0.0, %v1929
        %v1931 = vpop.f32.mrb[0].mxu0
        %v1932 = vadd.f32 0.0, %v1931
        %1933 = vmatprep.mubr.bf16.mxu0 0
        %1934 = vmatmul.mubr.bf16.gmra.mrb[0].mxu0 %v699
        %v1935 = vpop.f32.mrb[0].mxu0
        %v1936 = vadd.f32 0.0, %v1935
        %v1937 = vpop.f32.mrb[0].mxu0
        %v1938 = vadd.f32 0.0, %v1937
        %v1939 = vpop.f32.mrb[0].mxu0
        %v1940 = vadd.f32 0.0, %v1939
        %v1941 = vpop.f32.mrb[0].mxu0
        %v1942 = vadd.f32 0.0, %v1941
        %1943 = vmatprep.mubr.bf16.mxu0 0
        %1944 = vmatmul.mubr.bf16.gmra.mrb[0].mxu0 %v702
        %v1945 = vpop.f32.mrb[0].mxu0
        %v1946 = vadd.f32 0.0, %v1945
        %v1947 = vpop.f32.mrb[0].mxu0
        %v1948 = vadd.f32 0.0, %v1947
        %v1949 = vpop.f32.mrb[0].mxu0
        %v1950 = vadd.f32 0.0, %v1949
        %v1951 = vpop.f32.mrb[0].mxu0
        %v1952 = vadd.f32 0.0, %v1951
        %1953 = vmatprep.mubr.bf16.mxu0 0
        %1954 = vmatmul.mubr.bf16.gmra.mrb[0].mxu0 %v705
        %v1955 = vpop.f32.mrb[0].mxu0
        %v1956 = vadd.f32 0.0, %v1955
        %v1957 = vpop.f32.mrb[0].mxu0
        %v1958 = vadd.f32 0.0, %v1957
        %v1959 = vpop.f32.mrb[0].mxu0
        %v1960 = vadd.f32 0.0, %v1959
        %v1961 = vpop.f32.mrb[0].mxu0
        %v1962 = vadd.f32 0.0, %v1961
        %1963 = vmatprep.mubr.bf16.mxu0 0
        %1964 = vmatmul.mubr.bf16.gmra.mrb[0].mxu0 %v708
        %v1965 = vpop.f32.mrb[0].mxu0
        %v1966 = vadd.f32 0.0, %v1965
        %v1967 = vpop.f32.mrb[0].mxu0
        %v1968 = vadd.f32 0.0, %v1967
        %v1969 = vpop.f32.mrb[0].mxu0
        %v1970 = vadd.f32 0.0, %v1969
        %v1971 = vpop.f32.mrb[0].mxu0
        %v1972 = vadd.f32 0.0, %v1971
        %1973 = vmatprep.mubr.bf16.mxu0 0
        %1974 = vmatmul.mubr.bf16.gmra.mrb[0].mxu0 %v711
        %v1975 = vpop.f32.mrb[0].mxu0
        %v1976 = vadd.f32 0.0, %v1975
        %v1977 = vpop.f32.mrb[0].mxu0
        %v1978 = vadd.f32 0.0, %v1977
        %v1979 = vpop.f32.mrb[0].mxu0
        %v1980 = vadd.f32 0.0, %v1979
        %v1981 = vpop.f32.mrb[0].mxu0
        %v1982 = vadd.f32 0.0, %v1981
        %1983 = vmatprep.mubr.bf16.mxu0 0
        %1984 = vmatmul.mubr.bf16.gmra.mrb[0].mxu0 %v714
        %v1985 = vpop.f32.mrb[0].mxu0
        %v1986 = vadd.f32 0.0, %v1985
        %v1987 = vpop.f32.mrb[0].mxu0
        %v1988 = vadd.f32 0.0, %v1987
        %v1989 = vpop.f32.mrb[0].mxu0
        %v1990 = vadd.f32 0.0, %v1989
        %v1991 = vpop.f32.mrb[0].mxu0
        %v1992 = vadd.f32 0.0, %v1991
        %1993 = vdwg.mxu0
        %v1994 = vadd.f32 %v1803, %v1916
        %v1995 = vadd.f32 %v1805, %v1918
        %v1996 = vadd.f32 %v1807, %v1920
        %v1997 = vadd.f32 %v1809, %v1922
        %v1998 = vadd.f32 %v1813, %v1926
        %v1999 = vadd.f32 %v1815, %v1928
        %v2000 = vadd.f32 %v1817, %v1930
        %v2001 = vadd.f32 %v1819, %v1932
        %v2002 = vadd.f32 %v1823, %v1936
        %v2003 = vadd.f32 %v1825, %v1938
        %v2004 = vadd.f32 %v1827, %v1940
        %v2005 = vadd.f32 %v1829, %v1942
        %v2006 = vadd.f32 %v1833, %v1946
        %v2007 = vadd.f32 %v1835, %v1948
        %v2008 = vadd.f32 %v1837, %v1950
        %v2009 = vadd.f32 %v1839, %v1952
        %v2010 = vadd.f32 %v1843, %v1956
        %v2011 = vadd.f32 %v1845, %v1958
        %v2012 = vadd.f32 %v1847, %v1960
        %v2013 = vadd.f32 %v1849, %v1962
        %v2014 = vadd.f32 %v1853, %v1966
        %v2015 = vadd.f32 %v1855, %v1968
        %v2016 = vadd.f32 %v1857, %v1970
        %v2017 = vadd.f32 %v1859, %v1972
        %v2018 = vadd.f32 %v1863, %v1976
        %v2019 = vadd.f32 %v1865, %v1978
        %v2020 = vadd.f32 %v1867, %v1980
        %v2021 = vadd.f32 %v1869, %v1982
        %v2022 = vadd.f32 %v1873, %v1986
        %v2023 = vadd.f32 %v1875, %v1988
        %v2024 = vadd.f32 %v1877, %v1990
        %v2025 = vadd.f32 %v1879, %v1992
        %v2026 = vmax.f32 %v1994, %v1998
        %v2027 = vmax.f32 %v1995, %v1999
        %v2028 = vmax.f32 %v1996, %v2000
        %v2029 = vmax.f32 %v1997, %v2001
        %v2030 = vmax.f32 %v2002, %v2006
        %v2031 = vmax.f32 %v2003, %v2007
        %v2032 = vmax.f32 %v2004, %v2008
        %v2033 = vmax.f32 %v2005, %v2009
        %v2034 = vmax.f32 %v2010, %v2014
        %v2035 = vmax.f32 %v2011, %v2015
        %v2036 = vmax.f32 %v2012, %v2016
        %v2037 = vmax.f32 %v2013, %v2017
        %v2038 = vmax.f32 %v2018, %v2022
        %v2039 = vmax.f32 %v2019, %v2023
        %v2040 = vmax.f32 %v2020, %v2024
        %v2041 = vmax.f32 %v2021, %v2025
        %v2042 = vmax.f32 %v2026, %v2030
        %v2043 = vmax.f32 %v2027, %v2031
        %v2044 = vmax.f32 %v2028, %v2032
        %v2045 = vmax.f32 %v2029, %v2033
        %v2046 = vmax.f32 %v2034, %v2038
        %v2047 = vmax.f32 %v2035, %v2039
        %v2048 = vmax.f32 %v2036, %v2040
        %v2049 = vmax.f32 %v2037, %v2041
        %v2050 = vmax.f32 %v2042, %v2046
        %v2051 = vmax.f32 %v2043, %v2047
        %v2052 = vmax.f32 %v2044, %v2048
        %v2053 = vmax.f32 %v2045, %v2049
        %v2054 = vadd.f32 %v2050, %v1005
        %v2055 = vadd.f32 %v2051, %v1005
        %v2056 = vadd.f32 %v2052, %v1010
        %v2057 = vadd.f32 %v2053, %v1010
        %v2058 = vmax.f32 %v2054, 0.0
        %v2059 = vmax.f32 %v2055, 0.0
        %v2060 = vmax.f32 %v2056, 0.0
        %v2061 = vmax.f32 %v2057, 0.0
        %2062 = vst [vmem:[%s316 + $0x20] sm:$0xff] %v2058
        %2063 = vst [vmem:[%s316 + $0x28] sm:$0xff] %v2059
        %2064 = vst [vmem:[%s316 + $0x70] sm:$0xff] %v2060
        %2065 = vst [vmem:[%s316 + $0x78] sm:$0xff] %v2061
        %v2066 = vld [vmem:[%s276 + $0x30] sm:$0xff]
        %v2067 = vld [vmem:[%s276 + $0x38] sm:$0xff]
        %v2068 = vld [vmem:[%s276 + $0x40] sm:$0xff]
        %v2069 = vld [vmem:[%s276 + $0x80] sm:$0xff]
        %v2070 = vld [vmem:[%s276 + $0x88] sm:$0xff]
        %v2071 = vld [vmem:[%s276 + $0x90] sm:$0xff]
        %v2072 = vpack.c.bf16 %v2069, %v2066
        %v2073 = vpack.c.bf16 %v2070, %v2067
        %v2074 = vpack.c.bf16 %v2071, %v2068
        %v2075 = vunpack.c.l.bf16 %v2072
        %v2076 = vunpack.c.l.bf16 %v2073
        %v2077 = vunpack.c.l.bf16 %v2074
        %v2078 = vunpack.c.h.bf16 %v2072
        %v2079 = vunpack.c.h.bf16 %v2073
        %v2080 = vunpack.c.h.bf16 %v2074
        %v2081 = vsub.f32 %v2066, %v2075
        %v2082 = vsub.f32 %v2067, %v2076
        %v2083 = vsub.f32 %v2068, %v2077
        %v2084 = vsub.f32 %v2069, %v2078
        %v2085 = vsub.f32 %v2070, %v2079
        %v2086 = vsub.f32 %v2071, %v2080
        %v2087 = vpack.c.bf16 %v2084, %v2081
        %v2088 = vpack.c.bf16 %v2085, %v2082
        %v2089 = vpack.c.bf16 %v2086, %v2083
        %2093 = vrot.lane.b32.xlu0 %v2072, 127
        %v2094 = vpop.permute.xlu0 %2093
        %2095 = vrot.lane.b32.xlu0 %v2073, 127
        %v2096 = vpop.permute.xlu0 %2095
        %2097 = vrot.lane.b32.xlu0 %v2074, 127
        %v2098 = vpop.permute.xlu0 %2097
        %v2099 = vsel %vm393, %v2094, %v2096
        %v2100 = vsel %vm393, %v2096, %v2098
        %2103 = vrot.lane.b32.xlu0 %v2072, 126
        %v2104 = vpop.permute.xlu0 %2103
        %2105 = vrot.lane.b32.xlu0 %v2073, 126
        %v2106 = vpop.permute.xlu0 %2105
        %2107 = vrot.lane.b32.xlu0 %v2074, 126
        %v2108 = vpop.permute.xlu0 %2107
        %v2109 = vsel %vm404, %v2104, %v2106
        %v2110 = vsel %vm404, %v2106, %v2108
        %2113 = vrot.lane.b32.xlu0 %v2072, 125
        %v2114 = vpop.permute.xlu0 %2113
        %2115 = vrot.lane.b32.xlu0 %v2073, 125
        %v2116 = vpop.permute.xlu0 %2115
        %2117 = vrot.lane.b32.xlu0 %v2074, 125
        %v2118 = vpop.permute.xlu0 %2117
        %v2119 = vsel %vm415, %v2114, %v2116
        %v2120 = vsel %vm415, %v2116, %v2118
        %2123 = vrot.lane.b32.xlu0 %v2072, 124
        %v2124 = vpop.permute.xlu0 %2123
        %2125 = vrot.lane.b32.xlu0 %v2073, 124
        %v2126 = vpop.permute.xlu0 %2125
        %2127 = vrot.lane.b32.xlu0 %v2074, 124
        %v2128 = vpop.permute.xlu0 %2127
        %v2129 = vsel %vm426, %v2124, %v2126
        %v2130 = vsel %vm426, %v2126, %v2128
        %2136 = vrot.lane.b32.xlu0 %v2087, 127
        %v2137 = vpop.permute.xlu0 %2136
        %2138 = vrot.lane.b32.xlu0 %v2088, 127
        %v2139 = vpop.permute.xlu0 %2138
        %2140 = vrot.lane.b32.xlu0 %v2089, 127
        %v2141 = vpop.permute.xlu0 %2140
        %v2142 = vsel %vm393, %v2137, %v2139
        %v2143 = vsel %vm393, %v2139, %v2141
        %2146 = vrot.lane.b32.xlu0 %v2087, 126
        %v2147 = vpop.permute.xlu0 %2146
        %2148 = vrot.lane.b32.xlu0 %v2088, 126
        %v2149 = vpop.permute.xlu0 %2148
        %2150 = vrot.lane.b32.xlu0 %v2089, 126
        %v2151 = vpop.permute.xlu0 %2150
        %v2152 = vsel %vm404, %v2147, %v2149
        %v2153 = vsel %vm404, %v2149, %v2151
        %2156 = vrot.lane.b32.xlu0 %v2087, 125
        %v2157 = vpop.permute.xlu0 %2156
        %2158 = vrot.lane.b32.xlu0 %v2088, 125
        %v2159 = vpop.permute.xlu0 %2158
        %2160 = vrot.lane.b32.xlu0 %v2089, 125
        %v2161 = vpop.permute.xlu0 %2160
        %v2162 = vsel %vm415, %v2157, %v2159
        %v2163 = vsel %vm415, %v2159, %v2161
        %2166 = vrot.lane.b32.xlu0 %v2087, 124
        %v2167 = vpop.permute.xlu0 %2166
        %2168 = vrot.lane.b32.xlu0 %v2088, 124
        %v2169 = vpop.permute.xlu0 %2168
        %2170 = vrot.lane.b32.xlu0 %v2089, 124
        %v2171 = vpop.permute.xlu0 %2170
        %v2172 = vsel %vm426, %v2167, %v2169
        %v2173 = vsel %vm426, %v2169, %v2171
        %2176 = vmatprep.subr.bf16.mxu0 %v2073
        %2177 = vmatpush1.bf16.msra.mxu0 %v2072
        %2178 = vmatprep.subr.bf16.mxu0 %v2100
        %2179 = vmatpush1.bf16.msra.mxu0 %v2099
        %2180 = vmatprep.subr.bf16.mxu0 %v2110
        %2181 = vmatpush1.bf16.msra.mxu0 %v2109
        %2182 = vmatprep.subr.bf16.mxu0 %v2120
        %2183 = vmatpush1.bf16.msra.mxu0 %v2119
        %2184 = vmatprep.subr.bf16.mxu0 %v2130
        %2185 = vmatpush1.bf16.msra.mxu0 %v2129
        %2186 = vmatprep.subr.bf16.mxu0 0
        %2187 = vmatpush1.bf16.msra.mxu0 0
        %2188 = vmatprep.subr.bf16.mxu0 0
        %2189 = vmatpush1.bf16.msra.mxu0 0
        %2190 = vmatprep.subr.bf16.mxu0 0
        %2191 = vmatpush1.bf16.msra.mxu0 0
        %2192 = vmatprep.subr.bf16.mxu0 0
        %2193 = vmatpush1.bf16.msra.mxu0 0
        %2194 = vmatprep.subr.bf16.mxu0 0
        %2195 = vmatpush1.bf16.msra.mxu0 0
        %2196 = vmatprep.subr.bf16.mxu0 0
        %2197 = vmatpush1.bf16.msra.mxu0 0
        %2198 = vmatprep.subr.bf16.mxu0 0
        %2199 = vmatpush1.bf16.msra.mxu0 0
        %2200 = vmatprep.subr.bf16.mxu0 0
        %2201 = vmatpush1.bf16.msra.mxu0 0
        %2202 = vmatprep.subr.bf16.mxu0 0
        %2203 = vmatpush1.bf16.msra.mxu0 0
        %2204 = vmatprep.subr.bf16.mxu0 0
        %2205 = vmatpush1.bf16.msra.mxu0 0
        %2206 = vmatprep.subr.bf16.mxu0 0
        %2207 = vmatpush1.bf16.msra.mxu0 0
        %2208 = vmatprep.mubr.bf16.mxu0 0
        %2209 = vmatmul.mubr.bf16.gmra.mrb[0].mxu0 %v516
        %v2210 = vpop.f32.mrb[0].mxu0
        %v2211 = vadd.f32 0.0, %v2210
        %v2212 = vpop.f32.mrb[0].mxu0
        %v2213 = vadd.f32 0.0, %v2212
        %v2214 = vpop.f32.mrb[0].mxu0
        %v2215 = vadd.f32 0.0, %v2214
        %v2216 = vpop.f32.mrb[0].mxu0
        %v2217 = vadd.f32 0.0, %v2216
        %2218 = vmatprep.mubr.bf16.mxu0 0
        %2219 = vmatmul.mubr.bf16.gmra.mrb[0].mxu0 %v519
        %v2220 = vpop.f32.mrb[0].mxu0
        %v2221 = vadd.f32 0.0, %v2220
        %v2222 = vpop.f32.mrb[0].mxu0
        %v2223 = vadd.f32 0.0, %v2222
        %v2224 = vpop.f32.mrb[0].mxu0
        %v2225 = vadd.f32 0.0, %v2224
        %v2226 = vpop.f32.mrb[0].mxu0
        %v2227 = vadd.f32 0.0, %v2226
        %2228 = vmatprep.mubr.bf16.mxu0 0
        %2229 = vmatmul.mubr.bf16.gmra.mrb[0].mxu0 %v522
        %v2230 = vpop.f32.mrb[0].mxu0
        %v2231 = vadd.f32 0.0, %v2230
        %v2232 = vpop.f32.mrb[0].mxu0
        %v2233 = vadd.f32 0.0, %v2232
        %v2234 = vpop.f32.mrb[0].mxu0
        %v2235 = vadd.f32 0.0, %v2234
        %v2236 = vpop.f32.mrb[0].mxu0
        %v2237 = vadd.f32 0.0, %v2236
        %2238 = vmatprep.mubr.bf16.mxu0 0
        %2239 = vmatmul.mubr.bf16.gmra.mrb[0].mxu0 %v525
        %v2240 = vpop.f32.mrb[0].mxu0
        %v2241 = vadd.f32 0.0, %v2240
        %v2242 = vpop.f32.mrb[0].mxu0
        %v2243 = vadd.f32 0.0, %v2242
        %v2244 = vpop.f32.mrb[0].mxu0
        %v2245 = vadd.f32 0.0, %v2244
        %v2246 = vpop.f32.mrb[0].mxu0
        %v2247 = vadd.f32 0.0, %v2246
        %2248 = vmatprep.mubr.bf16.mxu0 0
        %2249 = vmatmul.mubr.bf16.gmra.mrb[0].mxu0 %v528
        %v2250 = vpop.f32.mrb[0].mxu0
        %v2251 = vadd.f32 0.0, %v2250
        %v2252 = vpop.f32.mrb[0].mxu0
        %v2253 = vadd.f32 0.0, %v2252
        %v2254 = vpop.f32.mrb[0].mxu0
        %v2255 = vadd.f32 0.0, %v2254
        %v2256 = vpop.f32.mrb[0].mxu0
        %v2257 = vadd.f32 0.0, %v2256
        %2258 = vmatprep.mubr.bf16.mxu0 0
        %2259 = vmatmul.mubr.bf16.gmra.mrb[0].mxu0 %v531
        %v2260 = vpop.f32.mrb[0].mxu0
        %v2261 = vadd.f32 0.0, %v2260
        %v2262 = vpop.f32.mrb[0].mxu0
        %v2263 = vadd.f32 0.0, %v2262
        %v2264 = vpop.f32.mrb[0].mxu0
        %v2265 = vadd.f32 0.0, %v2264
        %v2266 = vpop.f32.mrb[0].mxu0
        %v2267 = vadd.f32 0.0, %v2266
        %2268 = vmatprep.mubr.bf16.mxu0 0
        %2269 = vmatmul.mubr.bf16.gmra.mrb[0].mxu0 %v534
        %v2270 = vpop.f32.mrb[0].mxu0
        %v2271 = vadd.f32 0.0, %v2270
        %v2272 = vpop.f32.mrb[0].mxu0
        %v2273 = vadd.f32 0.0, %v2272
        %v2274 = vpop.f32.mrb[0].mxu0
        %v2275 = vadd.f32 0.0, %v2274
        %v2276 = vpop.f32.mrb[0].mxu0
        %v2277 = vadd.f32 0.0, %v2276
        %2278 = vmatprep.mubr.bf16.mxu0 0
        %2279 = vmatmul.mubr.bf16.gmra.mrb[0].mxu0 %v537
        %v2280 = vpop.f32.mrb[0].mxu0
        %v2281 = vadd.f32 0.0, %v2280
        %v2282 = vpop.f32.mrb[0].mxu0
        %v2283 = vadd.f32 0.0, %v2282
        %v2284 = vpop.f32.mrb[0].mxu0
        %v2285 = vadd.f32 0.0, %v2284
        %v2286 = vpop.f32.mrb[0].mxu0
        %v2287 = vadd.f32 0.0, %v2286
        %2288 = vdwg.mxu0
        %2289 = vmatprep.subr.bf16.mxu0 %v2073
        %2290 = vmatpush1.bf16.msra.mxu0 %v2072
        %2291 = vmatprep.subr.bf16.mxu0 %v2100
        %2292 = vmatpush1.bf16.msra.mxu0 %v2099
        %2293 = vmatprep.subr.bf16.mxu0 %v2110
        %2294 = vmatpush1.bf16.msra.mxu0 %v2109
        %2295 = vmatprep.subr.bf16.mxu0 %v2120
        %2296 = vmatpush1.bf16.msra.mxu0 %v2119
        %2297 = vmatprep.subr.bf16.mxu0 %v2130
        %2298 = vmatpush1.bf16.msra.mxu0 %v2129
        %2299 = vmatprep.subr.bf16.mxu0 0
        %2300 = vmatpush1.bf16.msra.mxu0 0
        %2301 = vmatprep.subr.bf16.mxu0 0
        %2302 = vmatpush1.bf16.msra.mxu0 0
        %2303 = vmatprep.subr.bf16.mxu0 0
        %2304 = vmatpush1.bf16.msra.mxu0 0
        %2305 = vmatprep.subr.bf16.mxu0 0
        %2306 = vmatpush1.bf16.msra.mxu0 0
        %2307 = vmatprep.subr.bf16.mxu0 0
        %2308 = vmatpush1.bf16.msra.mxu0 0
        %2309 = vmatprep.subr.bf16.mxu0 0
        %2310 = vmatpush1.bf16.msra.mxu0 0
        %2311 = vmatprep.subr.bf16.mxu0 0
        %2312 = vmatpush1.bf16.msra.mxu0 0
        %2313 = vmatprep.subr.bf16.mxu0 0
        %2314 = vmatpush1.bf16.msra.mxu0 0
        %2315 = vmatprep.subr.bf16.mxu0 0
        %2316 = vmatpush1.bf16.msra.mxu0 0
        %2317 = vmatprep.subr.bf16.mxu0 0
        %2318 = vmatpush1.bf16.msra.mxu0 0
        %2319 = vmatprep.subr.bf16.mxu0 0
        %2320 = vmatpush1.bf16.msra.mxu0 0
        %2321 = vmatprep.mubr.bf16.mxu0 0
        %2322 = vmatmul.mubr.bf16.gmra.mrb[0].mxu0 %v693
        %v2323 = vpop.f32.mrb[0].mxu0
        %v2324 = vadd.f32 %v2211, %v2323
        %v2325 = vpop.f32.mrb[0].mxu0
        %v2326 = vadd.f32 %v2213, %v2325
        %v2327 = vpop.f32.mrb[0].mxu0
        %v2328 = vadd.f32 %v2215, %v2327
        %v2329 = vpop.f32.mrb[0].mxu0
        %v2330 = vadd.f32 %v2217, %v2329
        %2331 = vmatprep.mubr.bf16.mxu0 0
        %2332 = vmatmul.mubr.bf16.gmra.mrb[0].mxu0 %v696
        %v2333 = vpop.f32.mrb[0].mxu0
        %v2334 = vadd.f32 %v2221, %v2333
        %v2335 = vpop.f32.mrb[0].mxu0
        %v2336 = vadd.f32 %v2223, %v2335
        %v2337 = vpop.f32.mrb[0].mxu0
        %v2338 = vadd.f32 %v2225, %v2337
        %v2339 = vpop.f32.mrb[0].mxu0
        %v2340 = vadd.f32 %v2227, %v2339
        %2341 = vmatprep.mubr.bf16.mxu0 0
        %2342 = vmatmul.mubr.bf16.gmra.mrb[0].mxu0 %v699
        %v2343 = vpop.f32.mrb[0].mxu0
        %v2344 = vadd.f32 %v2231, %v2343
        %v2345 = vpop.f32.mrb[0].mxu0
        %v2346 = vadd.f32 %v2233, %v2345
        %v2347 = vpop.f32.mrb[0].mxu0
        %v2348 = vadd.f32 %v2235, %v2347
        %v2349 = vpop.f32.mrb[0].mxu0
        %v2350 = vadd.f32 %v2237, %v2349
        %2351 = vmatprep.mubr.bf16.mxu0 0
        %2352 = vmatmul.mubr.bf16.gmra.mrb[0].mxu0 %v702
        %v2353 = vpop.f32.mrb[0].mxu0
        %v2354 = vadd.f32 %v2241, %v2353
        %v2355 = vpop.f32.mrb[0].mxu0
        %v2356 = vadd.f32 %v2243, %v2355
        %v2357 = vpop.f32.mrb[0].mxu0
        %v2358 = vadd.f32 %v2245, %v2357
        %v2359 = vpop.f32.mrb[0].mxu0
        %v2360 = vadd.f32 %v2247, %v2359
        %2361 = vmatprep.mubr.bf16.mxu0 0
        %2362 = vmatmul.mubr.bf16.gmra.mrb[0].mxu0 %v705
        %v2363 = vpop.f32.mrb[0].mxu0
        %v2364 = vadd.f32 %v2251, %v2363
        %v2365 = vpop.f32.mrb[0].mxu0
        %v2366 = vadd.f32 %v2253, %v2365
        %v2367 = vpop.f32.mrb[0].mxu0
        %v2368 = vadd.f32 %v2255, %v2367
        %v2369 = vpop.f32.mrb[0].mxu0
        %v2370 = vadd.f32 %v2257, %v2369
        %2371 = vmatprep.mubr.bf16.mxu0 0
        %2372 = vmatmul.mubr.bf16.gmra.mrb[0].mxu0 %v708
        %v2373 = vpop.f32.mrb[0].mxu0
        %v2374 = vadd.f32 %v2261, %v2373
        %v2375 = vpop.f32.mrb[0].mxu0
        %v2376 = vadd.f32 %v2263, %v2375
        %v2377 = vpop.f32.mrb[0].mxu0
        %v2378 = vadd.f32 %v2265, %v2377
        %v2379 = vpop.f32.mrb[0].mxu0
        %v2380 = vadd.f32 %v2267, %v2379
        %2381 = vmatprep.mubr.bf16.mxu0 0
        %2382 = vmatmul.mubr.bf16.gmra.mrb[0].mxu0 %v711
        %v2383 = vpop.f32.mrb[0].mxu0
        %v2384 = vadd.f32 %v2271, %v2383
        %v2385 = vpop.f32.mrb[0].mxu0
        %v2386 = vadd.f32 %v2273, %v2385
        %v2387 = vpop.f32.mrb[0].mxu0
        %v2388 = vadd.f32 %v2275, %v2387
        %v2389 = vpop.f32.mrb[0].mxu0
        %v2390 = vadd.f32 %v2277, %v2389
        %2391 = vmatprep.mubr.bf16.mxu0 0
        %2392 = vmatmul.mubr.bf16.gmra.mrb[0].mxu0 %v714
        %v2393 = vpop.f32.mrb[0].mxu0
        %v2394 = vadd.f32 %v2281, %v2393
        %v2395 = vpop.f32.mrb[0].mxu0
        %v2396 = vadd.f32 %v2283, %v2395
        %v2397 = vpop.f32.mrb[0].mxu0
        %v2398 = vadd.f32 %v2285, %v2397
        %v2399 = vpop.f32.mrb[0].mxu0
        %v2400 = vadd.f32 %v2287, %v2399
        %2401 = vdwg.mxu0
        %2402 = vmatprep.subr.bf16.mxu0 %v2088
        %2403 = vmatpush1.bf16.msra.mxu0 %v2087
        %2404 = vmatprep.subr.bf16.mxu0 %v2143
        %2405 = vmatpush1.bf16.msra.mxu0 %v2142
        %2406 = vmatprep.subr.bf16.mxu0 %v2153
        %2407 = vmatpush1.bf16.msra.mxu0 %v2152
        %2408 = vmatprep.subr.bf16.mxu0 %v2163
        %2409 = vmatpush1.bf16.msra.mxu0 %v2162
        %2410 = vmatprep.subr.bf16.mxu0 %v2173
        %2411 = vmatpush1.bf16.msra.mxu0 %v2172
        %2412 = vmatprep.subr.bf16.mxu0 0
        %2413 = vmatpush1.bf16.msra.mxu0 0
        %2414 = vmatprep.subr.bf16.mxu0 0
        %2415 = vmatpush1.bf16.msra.mxu0 0
        %2416 = vmatprep.subr.bf16.mxu0 0
        %2417 = vmatpush1.bf16.msra.mxu0 0
        %2418 = vmatprep.subr.bf16.mxu0 0
        %2419 = vmatpush1.bf16.msra.mxu0 0
        %2420 = vmatprep.subr.bf16.mxu0 0
        %2421 = vmatpush1.bf16.msra.mxu0 0
        %2422 = vmatprep.subr.bf16.mxu0 0
        %2423 = vmatpush1.bf16.msra.mxu0 0
        %2424 = vmatprep.subr.bf16.mxu0 0
        %2425 = vmatpush1.bf16.msra.mxu0 0
        %2426 = vmatprep.subr.bf16.mxu0 0
        %2427 = vmatpush1.bf16.msra.mxu0 0
        %2428 = vmatprep.subr.bf16.mxu0 0
        %2429 = vmatpush1.bf16.msra.mxu0 0
        %2430 = vmatprep.subr.bf16.mxu0 0
        %2431 = vmatpush1.bf16.msra.mxu0 0
        %2432 = vmatprep.subr.bf16.mxu0 0
        %2433 = vmatpush1.bf16.msra.mxu0 0
        %2434 = vmatprep.mubr.bf16.mxu0 0
        %2435 = vmatmul.mubr.bf16.gmra.mrb[0].mxu0 %v693
        %v2436 = vpop.f32.mrb[0].mxu0
        %v2437 = vadd.f32 0.0, %v2436
        %v2438 = vpop.f32.mrb[0].mxu0
        %v2439 = vadd.f32 0.0, %v2438
        %v2440 = vpop.f32.mrb[0].mxu0
        %v2441 = vadd.f32 0.0, %v2440
        %v2442 = vpop.f32.mrb[0].mxu0
        %v2443 = vadd.f32 0.0, %v2442
        %2444 = vmatprep.mubr.bf16.mxu0 0
        %2445 = vmatmul.mubr.bf16.gmra.mrb[0].mxu0 %v696
        %v2446 = vpop.f32.mrb[0].mxu0
        %v2447 = vadd.f32 0.0, %v2446
        %v2448 = vpop.f32.mrb[0].mxu0
        %v2449 = vadd.f32 0.0, %v2448
        %v2450 = vpop.f32.mrb[0].mxu0
        %v2451 = vadd.f32 0.0, %v2450
        %v2452 = vpop.f32.mrb[0].mxu0
        %v2453 = vadd.f32 0.0, %v2452
        %2454 = vmatprep.mubr.bf16.mxu0 0
        %2455 = vmatmul.mubr.bf16.gmra.mrb[0].mxu0 %v699
        %v2456 = vpop.f32.mrb[0].mxu0
        %v2457 = vadd.f32 0.0, %v2456
        %v2458 = vpop.f32.mrb[0].mxu0
        %v2459 = vadd.f32 0.0, %v2458
        %v2460 = vpop.f32.mrb[0].mxu0
        %v2461 = vadd.f32 0.0, %v2460
        %v2462 = vpop.f32.mrb[0].mxu0
        %v2463 = vadd.f32 0.0, %v2462
        %2464 = vmatprep.mubr.bf16.mxu0 0
        %2465 = vmatmul.mubr.bf16.gmra.mrb[0].mxu0 %v702
        %v2466 = vpop.f32.mrb[0].mxu0
        %v2467 = vadd.f32 0.0, %v2466
        %v2468 = vpop.f32.mrb[0].mxu0
        %v2469 = vadd.f32 0.0, %v2468
        %v2470 = vpop.f32.mrb[0].mxu0
        %v2471 = vadd.f32 0.0, %v2470
        %v2472 = vpop.f32.mrb[0].mxu0
        %v2473 = vadd.f32 0.0, %v2472
        %2474 = vmatprep.mubr.bf16.mxu0 0
        %2475 = vmatmul.mubr.bf16.gmra.mrb[0].mxu0 %v705
        %v2476 = vpop.f32.mrb[0].mxu0
        %v2477 = vadd.f32 0.0, %v2476
        %v2478 = vpop.f32.mrb[0].mxu0
        %v2479 = vadd.f32 0.0, %v2478
        %v2480 = vpop.f32.mrb[0].mxu0
        %v2481 = vadd.f32 0.0, %v2480
        %v2482 = vpop.f32.mrb[0].mxu0
        %v2483 = vadd.f32 0.0, %v2482
        %2484 = vmatprep.mubr.bf16.mxu0 0
        %2485 = vmatmul.mubr.bf16.gmra.mrb[0].mxu0 %v708
        %v2486 = vpop.f32.mrb[0].mxu0
        %v2487 = vadd.f32 0.0, %v2486
        %v2488 = vpop.f32.mrb[0].mxu0
        %v2489 = vadd.f32 0.0, %v2488
        %v2490 = vpop.f32.mrb[0].mxu0
        %v2491 = vadd.f32 0.0, %v2490
        %v2492 = vpop.f32.mrb[0].mxu0
        %v2493 = vadd.f32 0.0, %v2492
        %2494 = vmatprep.mubr.bf16.mxu0 0
        %2495 = vmatmul.mubr.bf16.gmra.mrb[0].mxu0 %v711
        %v2496 = vpop.f32.mrb[0].mxu0
        %v2497 = vadd.f32 0.0, %v2496
        %v2498 = vpop.f32.mrb[0].mxu0
        %v2499 = vadd.f32 0.0, %v2498
        %v2500 = vpop.f32.mrb[0].mxu0
        %v2501 = vadd.f32 0.0, %v2500
        %v2502 = vpop.f32.mrb[0].mxu0
        %v2503 = vadd.f32 0.0, %v2502
        %2504 = vmatprep.mubr.bf16.mxu0 0
        %2505 = vmatmul.mubr.bf16.gmra.mrb[0].mxu0 %v714
        %v2506 = vpop.f32.mrb[0].mxu0
        %v2507 = vadd.f32 0.0, %v2506
        %v2508 = vpop.f32.mrb[0].mxu0
        %v2509 = vadd.f32 0.0, %v2508
        %v2510 = vpop.f32.mrb[0].mxu0
        %v2511 = vadd.f32 0.0, %v2510
        %v2512 = vpop.f32.mrb[0].mxu0
        %v2513 = vadd.f32 0.0, %v2512
        %2514 = vdwg.mxu0
        %v2515 = vadd.f32 %v2324, %v2437
        %v2516 = vadd.f32 %v2326, %v2439
        %v2517 = vadd.f32 %v2328, %v2441
        %v2518 = vadd.f32 %v2330, %v2443
        %v2519 = vadd.f32 %v2334, %v2447
        %v2520 = vadd.f32 %v2336, %v2449
        %v2521 = vadd.f32 %v2338, %v2451
        %v2522 = vadd.f32 %v2340, %v2453
        %v2523 = vadd.f32 %v2344, %v2457
        %v2524 = vadd.f32 %v2346, %v2459
        %v2525 = vadd.f32 %v2348, %v2461
        %v2526 = vadd.f32 %v2350, %v2463
        %v2527 = vadd.f32 %v2354, %v2467
        %v2528 = vadd.f32 %v2356, %v2469
        %v2529 = vadd.f32 %v2358, %v2471
        %v2530 = vadd.f32 %v2360, %v2473
        %v2531 = vadd.f32 %v2364, %v2477
        %v2532 = vadd.f32 %v2366, %v2479
        %v2533 = vadd.f32 %v2368, %v2481
        %v2534 = vadd.f32 %v2370, %v2483
        %v2535 = vadd.f32 %v2374, %v2487
        %v2536 = vadd.f32 %v2376, %v2489
        %v2537 = vadd.f32 %v2378, %v2491
        %v2538 = vadd.f32 %v2380, %v2493
        %v2539 = vadd.f32 %v2384, %v2497
        %v2540 = vadd.f32 %v2386, %v2499
        %v2541 = vadd.f32 %v2388, %v2501
        %v2542 = vadd.f32 %v2390, %v2503
        %v2543 = vadd.f32 %v2394, %v2507
        %v2544 = vadd.f32 %v2396, %v2509
        %v2545 = vadd.f32 %v2398, %v2511
        %v2546 = vadd.f32 %v2400, %v2513
        %v2547 = vmax.f32 %v2515, %v2519
        %v2548 = vmax.f32 %v2516, %v2520
        %v2549 = vmax.f32 %v2517, %v2521
        %v2550 = vmax.f32 %v2518, %v2522
        %v2551 = vmax.f32 %v2523, %v2527
        %v2552 = vmax.f32 %v2524, %v2528
        %v2553 = vmax.f32 %v2525, %v2529
        %v2554 = vmax.f32 %v2526, %v2530
        %v2555 = vmax.f32 %v2531, %v2535
        %v2556 = vmax.f32 %v2532, %v2536
        %v2557 = vmax.f32 %v2533, %v2537
        %v2558 = vmax.f32 %v2534, %v2538
        %v2559 = vmax.f32 %v2539, %v2543
        %v2560 = vmax.f32 %v2540, %v2544
        %v2561 = vmax.f32 %v2541, %v2545
        %v2562 = vmax.f32 %v2542, %v2546
        %v2563 = vmax.f32 %v2547, %v2551
        %v2564 = vmax.f32 %v2548, %v2552
        %v2565 = vmax.f32 %v2549, %v2553
        %v2566 = vmax.f32 %v2550, %v2554
        %v2567 = vmax.f32 %v2555, %v2559
        %v2568 = vmax.f32 %v2556, %v2560
        %v2569 = vmax.f32 %v2557, %v2561
        %v2570 = vmax.f32 %v2558, %v2562
        %v2571 = vmax.f32 %v2563, %v2567
        %v2572 = vmax.f32 %v2564, %v2568
        %v2573 = vmax.f32 %v2565, %v2569
        %v2574 = vmax.f32 %v2566, %v2570
        %v2575 = vadd.f32 %v2571, %v1005
        %v2576 = vadd.f32 %v2572, %v1005
        %v2577 = vadd.f32 %v2573, %v1010
        %v2578 = vadd.f32 %v2574, %v1010
        %v2579 = vmax.f32 %v2575, 0.0
        %v2580 = vmax.f32 %v2576, 0.0
        %v2581 = vmax.f32 %v2577, 0.0
        %v2582 = vmax.f32 %v2578, 0.0
        %2583 = vst [vmem:[%s316 + $0x30] sm:$0xff] %v2579
        %2584 = vst [vmem:[%s316 + $0x38] sm:$0xff] %v2580
        %2585 = vst [vmem:[%s316 + $0x80] sm:$0xff] %v2581
        %2586 = vst [vmem:[%s316 + $0x88] sm:$0xff] %v2582
        %v2587 = vld [vmem:[%s276 + $0x40] sm:$0xff]
        %v2588 = vld [vmem:[%s276 + $0x48] sm:$0xff]
        %v2589 = vld [vmem:[%s276 + $0x90] sm:$0xff]
        %v2590 = vld [vmem:[%s276 + $0x98] sm:$0xff]
        %v2591 = vld [vmem:[%s285] sm:$0xff]
        %v2592 = vld [vmem:[%s285 + $0x8] sm:$0xff]
        %v2593 = vpack.c.bf16 %v2589, %v2587
        %v2594 = vpack.c.bf16 %v2590, %v2588
        %v2595 = vpack.c.bf16 %v2592, %v2591
        %v2596 = vunpack.c.l.bf16 %v2593
        %v2597 = vunpack.c.l.bf16 %v2594
        %v2598 = vunpack.c.l.bf16 %v2595
        %v2599 = vunpack.c.h.bf16 %v2593
        %v2600 = vunpack.c.h.bf16 %v2594
        %v2601 = vunpack.c.h.bf16 %v2595
        %v2602 = vsub.f32 %v2587, %v2596
        %v2603 = vsub.f32 %v2588, %v2597
        %v2604 = vsub.f32 %v2591, %v2598
        %v2605 = vsub.f32 %v2589, %v2599
        %v2606 = vsub.f32 %v2590, %v2600
        %v2607 = vsub.f32 %v2592, %v2601
        %v2608 = vpack.c.bf16 %v2605, %v2602
        %v2609 = vpack.c.bf16 %v2606, %v2603
        %v2610 = vpack.c.bf16 %v2607, %v2604
        %2614 = vrot.lane.b32.xlu0 %v2593, 127
        %v2615 = vpop.permute.xlu0 %2614
        %2616 = vrot.lane.b32.xlu0 %v2594, 127
        %v2617 = vpop.permute.xlu0 %2616
        %2618 = vrot.lane.b32.xlu0 %v2595, 127
        %v2619 = vpop.permute.xlu0 %2618
        %v2620 = vsel %vm393, %v2615, %v2617
        %v2621 = vsel %vm393, %v2617, %v2619
        %2624 = vrot.lane.b32.xlu0 %v2593, 126
        %v2625 = vpop.permute.xlu0 %2624
        %2626 = vrot.lane.b32.xlu0 %v2594, 126
        %v2627 = vpop.permute.xlu0 %2626
        %2628 = vrot.lane.b32.xlu0 %v2595, 126
        %v2629 = vpop.permute.xlu0 %2628
        %v2630 = vsel %vm404, %v2625, %v2627
        %v2631 = vsel %vm404, %v2627, %v2629
        %2634 = vrot.lane.b32.xlu0 %v2593, 125
        %v2635 = vpop.permute.xlu0 %2634
        %2636 = vrot.lane.b32.xlu0 %v2594, 125
        %v2637 = vpop.permute.xlu0 %2636
        %2638 = vrot.lane.b32.xlu0 %v2595, 125
        %v2639 = vpop.permute.xlu0 %2638
        %v2640 = vsel %vm415, %v2635, %v2637
        %v2641 = vsel %vm415, %v2637, %v2639
        %2644 = vrot.lane.b32.xlu0 %v2593, 124
        %v2645 = vpop.permute.xlu0 %2644
        %2646 = vrot.lane.b32.xlu0 %v2594, 124
        %v2647 = vpop.permute.xlu0 %2646
        %2648 = vrot.lane.b32.xlu0 %v2595, 124
        %v2649 = vpop.permute.xlu0 %2648
        %v2650 = vsel %vm426, %v2645, %v2647
        %v2651 = vsel %vm426, %v2647, %v2649
        %2657 = vrot.lane.b32.xlu0 %v2608, 127
        %v2658 = vpop.permute.xlu0 %2657
        %2659 = vrot.lane.b32.xlu0 %v2609, 127
        %v2660 = vpop.permute.xlu0 %2659
        %2661 = vrot.lane.b32.xlu0 %v2610, 127
        %v2662 = vpop.permute.xlu0 %2661
        %v2663 = vsel %vm393, %v2658, %v2660
        %v2664 = vsel %vm393, %v2660, %v2662
        %2667 = vrot.lane.b32.xlu0 %v2608, 126
        %v2668 = vpop.permute.xlu0 %2667
        %2669 = vrot.lane.b32.xlu0 %v2609, 126
        %v2670 = vpop.permute.xlu0 %2669
        %2671 = vrot.lane.b32.xlu0 %v2610, 126
        %v2672 = vpop.permute.xlu0 %2671
        %v2673 = vsel %vm404, %v2668, %v2670
        %v2674 = vsel %vm404, %v2670, %v2672
        %2677 = vrot.lane.b32.xlu0 %v2608, 125
        %v2678 = vpop.permute.xlu0 %2677
        %2679 = vrot.lane.b32.xlu0 %v2609, 125
        %v2680 = vpop.permute.xlu0 %2679
        %2681 = vrot.lane.b32.xlu0 %v2610, 125
        %v2682 = vpop.permute.xlu0 %2681
        %v2683 = vsel %vm415, %v2678, %v2680
        %v2684 = vsel %vm415, %v2680, %v2682
        %2687 = vrot.lane.b32.xlu0 %v2608, 124
        %v2688 = vpop.permute.xlu0 %2687
        %2689 = vrot.lane.b32.xlu0 %v2609, 124
        %v2690 = vpop.permute.xlu0 %2689
        %2691 = vrot.lane.b32.xlu0 %v2610, 124
        %v2692 = vpop.permute.xlu0 %2691
        %v2693 = vsel %vm426, %v2688, %v2690
        %v2694 = vsel %vm426, %v2690, %v2692
        %2697 = vmatprep.subr.bf16.mxu0 %v2594
        %2698 = vmatpush1.bf16.msra.mxu0 %v2593
        %2699 = vmatprep.subr.bf16.mxu0 %v2621
        %2700 = vmatpush1.bf16.msra.mxu0 %v2620
        %2701 = vmatprep.subr.bf16.mxu0 %v2631
        %2702 = vmatpush1.bf16.msra.mxu0 %v2630
        %2703 = vmatprep.subr.bf16.mxu0 %v2641
        %2704 = vmatpush1.bf16.msra.mxu0 %v2640
        %2705 = vmatprep.subr.bf16.mxu0 %v2651
        %2706 = vmatpush1.bf16.msra.mxu0 %v2650
        %2707 = vmatprep.subr.bf16.mxu0 0
        %2708 = vmatpush1.bf16.msra.mxu0 0
        %2709 = vmatprep.subr.bf16.mxu0 0
        %2710 = vmatpush1.bf16.msra.mxu0 0
        %2711 = vmatprep.subr.bf16.mxu0 0
        %2712 = vmatpush1.bf16.msra.mxu0 0
        %2713 = vmatprep.subr.bf16.mxu0 0
        %2714 = vmatpush1.bf16.msra.mxu0 0
        %2715 = vmatprep.subr.bf16.mxu0 0
        %2716 = vmatpush1.bf16.msra.mxu0 0
        %2717 = vmatprep.subr.bf16.mxu0 0
        %2718 = vmatpush1.bf16.msra.mxu0 0
        %2719 = vmatprep.subr.bf16.mxu0 0
        %2720 = vmatpush1.bf16.msra.mxu0 0
        %2721 = vmatprep.subr.bf16.mxu0 0
        %2722 = vmatpush1.bf16.msra.mxu0 0
        %2723 = vmatprep.subr.bf16.mxu0 0
        %2724 = vmatpush1.bf16.msra.mxu0 0
        %2725 = vmatprep.subr.bf16.mxu0 0
        %2726 = vmatpush1.bf16.msra.mxu0 0
        %2727 = vmatprep.subr.bf16.mxu0 0
        %2728 = vmatpush1.bf16.msra.mxu0 0
        %2729 = vmatprep.mubr.bf16.mxu0 0
        %2730 = vmatmul.mubr.bf16.gmra.mrb[0].mxu0 %v516
        %v2731 = vpop.f32.mrb[0].mxu0
        %v2732 = vadd.f32 0.0, %v2731
        %v2733 = vpop.f32.mrb[0].mxu0
        %v2734 = vadd.f32 0.0, %v2733
        %v2735 = vpop.f32.mrb[0].mxu0
        %v2736 = vadd.f32 0.0, %v2735
        %v2737 = vpop.f32.mrb[0].mxu0
        %v2738 = vadd.f32 0.0, %v2737
        %2739 = vmatprep.mubr.bf16.mxu0 0
        %2740 = vmatmul.mubr.bf16.gmra.mrb[0].mxu0 %v519
        %v2741 = vpop.f32.mrb[0].mxu0
        %v2742 = vadd.f32 0.0, %v2741
        %v2743 = vpop.f32.mrb[0].mxu0
        %v2744 = vadd.f32 0.0, %v2743
        %v2745 = vpop.f32.mrb[0].mxu0
        %v2746 = vadd.f32 0.0, %v2745
        %v2747 = vpop.f32.mrb[0].mxu0
        %v2748 = vadd.f32 0.0, %v2747
        %2749 = vmatprep.mubr.bf16.mxu0 0
        %2750 = vmatmul.mubr.bf16.gmra.mrb[0].mxu0 %v522
        %v2751 = vpop.f32.mrb[0].mxu0
        %v2752 = vadd.f32 0.0, %v2751
        %v2753 = vpop.f32.mrb[0].mxu0
        %v2754 = vadd.f32 0.0, %v2753
        %v2755 = vpop.f32.mrb[0].mxu0
        %v2756 = vadd.f32 0.0, %v2755
        %v2757 = vpop.f32.mrb[0].mxu0
        %v2758 = vadd.f32 0.0, %v2757
        %2759 = vmatprep.mubr.bf16.mxu0 0
        %2760 = vmatmul.mubr.bf16.gmra.mrb[0].mxu0 %v525
        %v2761 = vpop.f32.mrb[0].mxu0
        %v2762 = vadd.f32 0.0, %v2761
        %v2763 = vpop.f32.mrb[0].mxu0
        %v2764 = vadd.f32 0.0, %v2763
        %v2765 = vpop.f32.mrb[0].mxu0
        %v2766 = vadd.f32 0.0, %v2765
        %v2767 = vpop.f32.mrb[0].mxu0
        %v2768 = vadd.f32 0.0, %v2767
        %2769 = vmatprep.mubr.bf16.mxu0 0
        %2770 = vmatmul.mubr.bf16.gmra.mrb[0].mxu0 %v528
        %v2771 = vpop.f32.mrb[0].mxu0
        %v2772 = vadd.f32 0.0, %v2771
        %v2773 = vpop.f32.mrb[0].mxu0
        %v2774 = vadd.f32 0.0, %v2773
        %v2775 = vpop.f32.mrb[0].mxu0
        %v2776 = vadd.f32 0.0, %v2775
        %v2777 = vpop.f32.mrb[0].mxu0
        %v2778 = vadd.f32 0.0, %v2777
        %2779 = vmatprep.mubr.bf16.mxu0 0
        %2780 = vmatmul.mubr.bf16.gmra.mrb[0].mxu0 %v531
        %v2781 = vpop.f32.mrb[0].mxu0
        %v2782 = vadd.f32 0.0, %v2781
        %v2783 = vpop.f32.mrb[0].mxu0
        %v2784 = vadd.f32 0.0, %v2783
        %v2785 = vpop.f32.mrb[0].mxu0
        %v2786 = vadd.f32 0.0, %v2785
        %v2787 = vpop.f32.mrb[0].mxu0
        %v2788 = vadd.f32 0.0, %v2787
        %2789 = vmatprep.mubr.bf16.mxu0 0
        %2790 = vmatmul.mubr.bf16.gmra.mrb[0].mxu0 %v534
        %v2791 = vpop.f32.mrb[0].mxu0
        %v2792 = vadd.f32 0.0, %v2791
        %v2793 = vpop.f32.mrb[0].mxu0
        %v2794 = vadd.f32 0.0, %v2793
        %v2795 = vpop.f32.mrb[0].mxu0
        %v2796 = vadd.f32 0.0, %v2795
        %v2797 = vpop.f32.mrb[0].mxu0
        %v2798 = vadd.f32 0.0, %v2797
        %2799 = vmatprep.mubr.bf16.mxu0 0
        %2800 = vmatmul.mubr.bf16.gmra.mrb[0].mxu0 %v537
        %v2801 = vpop.f32.mrb[0].mxu0
        %v2802 = vadd.f32 0.0, %v2801
        %v2803 = vpop.f32.mrb[0].mxu0
        %v2804 = vadd.f32 0.0, %v2803
        %v2805 = vpop.f32.mrb[0].mxu0
        %v2806 = vadd.f32 0.0, %v2805
        %v2807 = vpop.f32.mrb[0].mxu0
        %v2808 = vadd.f32 0.0, %v2807
        %2809 = vdwg.mxu0
        %2810 = vmatprep.subr.bf16.mxu0 %v2594
        %2811 = vmatpush1.bf16.msra.mxu0 %v2593
        %2812 = vmatprep.subr.bf16.mxu0 %v2621
        %2813 = vmatpush1.bf16.msra.mxu0 %v2620
        %2814 = vmatprep.subr.bf16.mxu0 %v2631
        %2815 = vmatpush1.bf16.msra.mxu0 %v2630
        %2816 = vmatprep.subr.bf16.mxu0 %v2641
        %2817 = vmatpush1.bf16.msra.mxu0 %v2640
        %2818 = vmatprep.subr.bf16.mxu0 %v2651
        %2819 = vmatpush1.bf16.msra.mxu0 %v2650
        %2820 = vmatprep.subr.bf16.mxu0 0
        %2821 = vmatpush1.bf16.msra.mxu0 0
        %2822 = vmatprep.subr.bf16.mxu0 0
        %2823 = vmatpush1.bf16.msra.mxu0 0
        %2824 = vmatprep.subr.bf16.mxu0 0
        %2825 = vmatpush1.bf16.msra.mxu0 0
        %2826 = vmatprep.subr.bf16.mxu0 0
        %2827 = vmatpush1.bf16.msra.mxu0 0
        %2828 = vmatprep.subr.bf16.mxu0 0
        %2829 = vmatpush1.bf16.msra.mxu0 0
        %2830 = vmatprep.subr.bf16.mxu0 0
        %2831 = vmatpush1.bf16.msra.mxu0 0
        %2832 = vmatprep.subr.bf16.mxu0 0
        %2833 = vmatpush1.bf16.msra.mxu0 0
        %2834 = vmatprep.subr.bf16.mxu0 0
        %2835 = vmatpush1.bf16.msra.mxu0 0
        %2836 = vmatprep.subr.bf16.mxu0 0
        %2837 = vmatpush1.bf16.msra.mxu0 0
        %2838 = vmatprep.subr.bf16.mxu0 0
        %2839 = vmatpush1.bf16.msra.mxu0 0
        %2840 = vmatprep.subr.bf16.mxu0 0
        %2841 = vmatpush1.bf16.msra.mxu0 0
        %2842 = vmatprep.mubr.bf16.mxu0 0
        %2843 = vmatmul.mubr.bf16.gmra.mrb[0].mxu0 %v693
        %v2844 = vpop.f32.mrb[0].mxu0
        %v2845 = vadd.f32 %v2732, %v2844
        %v2846 = vpop.f32.mrb[0].mxu0
        %v2847 = vadd.f32 %v2734, %v2846
        %v2848 = vpop.f32.mrb[0].mxu0
        %v2849 = vadd.f32 %v2736, %v2848
        %v2850 = vpop.f32.mrb[0].mxu0
        %v2851 = vadd.f32 %v2738, %v2850
        %2852 = vmatprep.mubr.bf16.mxu0 0
        %2853 = vmatmul.mubr.bf16.gmra.mrb[0].mxu0 %v696
        %v2854 = vpop.f32.mrb[0].mxu0
        %v2855 = vadd.f32 %v2742, %v2854
        %v2856 = vpop.f32.mrb[0].mxu0
        %v2857 = vadd.f32 %v2744, %v2856
        %v2858 = vpop.f32.mrb[0].mxu0
        %v2859 = vadd.f32 %v2746, %v2858
        %v2860 = vpop.f32.mrb[0].mxu0
        %v2861 = vadd.f32 %v2748, %v2860
        %2862 = vmatprep.mubr.bf16.mxu0 0
        %2863 = vmatmul.mubr.bf16.gmra.mrb[0].mxu0 %v699
        %v2864 = vpop.f32.mrb[0].mxu0
        %v2865 = vadd.f32 %v2752, %v2864
        %v2866 = vpop.f32.mrb[0].mxu0
        %v2867 = vadd.f32 %v2754, %v2866
        %v2868 = vpop.f32.mrb[0].mxu0
        %v2869 = vadd.f32 %v2756, %v2868
        %v2870 = vpop.f32.mrb[0].mxu0
        %v2871 = vadd.f32 %v2758, %v2870
        %2872 = vmatprep.mubr.bf16.mxu0 0
        %2873 = vmatmul.mubr.bf16.gmra.mrb[0].mxu0 %v702
        %v2874 = vpop.f32.mrb[0].mxu0
        %v2875 = vadd.f32 %v2762, %v2874
        %v2876 = vpop.f32.mrb[0].mxu0
        %v2877 = vadd.f32 %v2764, %v2876
        %v2878 = vpop.f32.mrb[0].mxu0
        %v2879 = vadd.f32 %v2766, %v2878
        %v2880 = vpop.f32.mrb[0].mxu0
        %v2881 = vadd.f32 %v2768, %v2880
        %2882 = vmatprep.mubr.bf16.mxu0 0
        %2883 = vmatmul.mubr.bf16.gmra.mrb[0].mxu0 %v705
        %v2884 = vpop.f32.mrb[0].mxu0
        %v2885 = vadd.f32 %v2772, %v2884
        %v2886 = vpop.f32.mrb[0].mxu0
        %v2887 = vadd.f32 %v2774, %v2886
        %v2888 = vpop.f32.mrb[0].mxu0
        %v2889 = vadd.f32 %v2776, %v2888
        %v2890 = vpop.f32.mrb[0].mxu0
        %v2891 = vadd.f32 %v2778, %v2890
        %2892 = vmatprep.mubr.bf16.mxu0 0
        %2893 = vmatmul.mubr.bf16.gmra.mrb[0].mxu0 %v708
        %v2894 = vpop.f32.mrb[0].mxu0
        %v2895 = vadd.f32 %v2782, %v2894
        %v2896 = vpop.f32.mrb[0].mxu0
        %v2897 = vadd.f32 %v2784, %v2896
        %v2898 = vpop.f32.mrb[0].mxu0
        %v2899 = vadd.f32 %v2786, %v2898
        %v2900 = vpop.f32.mrb[0].mxu0
        %v2901 = vadd.f32 %v2788, %v2900
        %2902 = vmatprep.mubr.bf16.mxu0 0
        %2903 = vmatmul.mubr.bf16.gmra.mrb[0].mxu0 %v711
        %v2904 = vpop.f32.mrb[0].mxu0
        %v2905 = vadd.f32 %v2792, %v2904
        %v2906 = vpop.f32.mrb[0].mxu0
        %v2907 = vadd.f32 %v2794, %v2906
        %v2908 = vpop.f32.mrb[0].mxu0
        %v2909 = vadd.f32 %v2796, %v2908
        %v2910 = vpop.f32.mrb[0].mxu0
        %v2911 = vadd.f32 %v2798, %v2910
        %2912 = vmatprep.mubr.bf16.mxu0 0
        %2913 = vmatmul.mubr.bf16.gmra.mrb[0].mxu0 %v714
        %v2914 = vpop.f32.mrb[0].mxu0
        %v2915 = vadd.f32 %v2802, %v2914
        %v2916 = vpop.f32.mrb[0].mxu0
        %v2917 = vadd.f32 %v2804, %v2916
        %v2918 = vpop.f32.mrb[0].mxu0
        %v2919 = vadd.f32 %v2806, %v2918
        %v2920 = vpop.f32.mrb[0].mxu0
        %v2921 = vadd.f32 %v2808, %v2920
        %2922 = vdwg.mxu0
        %2923 = vmatprep.subr.bf16.mxu0 %v2609
        %2924 = vmatpush1.bf16.msra.mxu0 %v2608
        %2925 = vmatprep.subr.bf16.mxu0 %v2664
        %2926 = vmatpush1.bf16.msra.mxu0 %v2663
        %2927 = vmatprep.subr.bf16.mxu0 %v2674
        %2928 = vmatpush1.bf16.msra.mxu0 %v2673
        %2929 = vmatprep.subr.bf16.mxu0 %v2684
        %2930 = vmatpush1.bf16.msra.mxu0 %v2683
        %2931 = vmatprep.subr.bf16.mxu0 %v2694
        %2932 = vmatpush1.bf16.msra.mxu0 %v2693
        %2933 = vmatprep.subr.bf16.mxu0 0
        %2934 = vmatpush1.bf16.msra.mxu0 0
        %2935 = vmatprep.subr.bf16.mxu0 0
        %2936 = vmatpush1.bf16.msra.mxu0 0
        %2937 = vmatprep.subr.bf16.mxu0 0
        %2938 = vmatpush1.bf16.msra.mxu0 0
        %2939 = vmatprep.subr.bf16.mxu0 0
        %2940 = vmatpush1.bf16.msra.mxu0 0
        %2941 = vmatprep.subr.bf16.mxu0 0
        %2942 = vmatpush1.bf16.msra.mxu0 0
        %2943 = vmatprep.subr.bf16.mxu0 0
        %2944 = vmatpush1.bf16.msra.mxu0 0
        %2945 = vmatprep.subr.bf16.mxu0 0
        %2946 = vmatpush1.bf16.msra.mxu0 0
        %2947 = vmatprep.subr.bf16.mxu0 0
        %2948 = vmatpush1.bf16.msra.mxu0 0
        %2949 = vmatprep.subr.bf16.mxu0 0
        %2950 = vmatpush1.bf16.msra.mxu0 0
        %2951 = vmatprep.subr.bf16.mxu0 0
        %2952 = vmatpush1.bf16.msra.mxu0 0
        %2953 = vmatprep.subr.bf16.mxu0 0
        %2954 = vmatpush1.bf16.msra.mxu0 0
        %2955 = vmatprep.mubr.bf16.mxu0 0
        %2956 = vmatmul.mubr.bf16.gmra.mrb[0].mxu0 %v693
        %v2957 = vpop.f32.mrb[0].mxu0
        %v2958 = vadd.f32 0.0, %v2957
        %v2959 = vpop.f32.mrb[0].mxu0
        %v2960 = vadd.f32 0.0, %v2959
        %v2961 = vpop.f32.mrb[0].mxu0
        %v2962 = vadd.f32 0.0, %v2961
        %v2963 = vpop.f32.mrb[0].mxu0
        %v2964 = vadd.f32 0.0, %v2963
        %2965 = vmatprep.mubr.bf16.mxu0 0
        %2966 = vmatmul.mubr.bf16.gmra.mrb[0].mxu0 %v696
        %v2967 = vpop.f32.mrb[0].mxu0
        %v2968 = vadd.f32 0.0, %v2967
        %v2969 = vpop.f32.mrb[0].mxu0
        %v2970 = vadd.f32 0.0, %v2969
        %v2971 = vpop.f32.mrb[0].mxu0
        %v2972 = vadd.f32 0.0, %v2971
        %v2973 = vpop.f32.mrb[0].mxu0
        %v2974 = vadd.f32 0.0, %v2973
        %2975 = vmatprep.mubr.bf16.mxu0 0
        %2976 = vmatmul.mubr.bf16.gmra.mrb[0].mxu0 %v699
        %v2977 = vpop.f32.mrb[0].mxu0
        %v2978 = vadd.f32 0.0, %v2977
        %v2979 = vpop.f32.mrb[0].mxu0
        %v2980 = vadd.f32 0.0, %v2979
        %v2981 = vpop.f32.mrb[0].mxu0
        %v2982 = vadd.f32 0.0, %v2981
        %v2983 = vpop.f32.mrb[0].mxu0
        %v2984 = vadd.f32 0.0, %v2983
        %2985 = vmatprep.mubr.bf16.mxu0 0
        %2986 = vmatmul.mubr.bf16.gmra.mrb[0].mxu0 %v702
        %v2987 = vpop.f32.mrb[0].mxu0
        %v2988 = vadd.f32 0.0, %v2987
        %v2989 = vpop.f32.mrb[0].mxu0
        %v2990 = vadd.f32 0.0, %v2989
        %v2991 = vpop.f32.mrb[0].mxu0
        %v2992 = vadd.f32 0.0, %v2991
        %v2993 = vpop.f32.mrb[0].mxu0
        %v2994 = vadd.f32 0.0, %v2993
        %2995 = vmatprep.mubr.bf16.mxu0 0
        %2996 = vmatmul.mubr.bf16.gmra.mrb[0].mxu0 %v705
        %v2997 = vpop.f32.mrb[0].mxu0
        %v2998 = vadd.f32 0.0, %v2997
        %v2999 = vpop.f32.mrb[0].mxu0
        %v3000 = vadd.f32 0.0, %v2999
        %v3001 = vpop.f32.mrb[0].mxu0
        %v3002 = vadd.f32 0.0, %v3001
        %v3003 = vpop.f32.mrb[0].mxu0
        %v3004 = vadd.f32 0.0, %v3003
        %3005 = vmatprep.mubr.bf16.mxu0 0
        %3006 = vmatmul.mubr.bf16.gmra.mrb[0].mxu0 %v708
        %v3007 = vpop.f32.mrb[0].mxu0
        %v3008 = vadd.f32 0.0, %v3007
        %v3009 = vpop.f32.mrb[0].mxu0
        %v3010 = vadd.f32 0.0, %v3009
        %v3011 = vpop.f32.mrb[0].mxu0
        %v3012 = vadd.f32 0.0, %v3011
        %v3013 = vpop.f32.mrb[0].mxu0
        %v3014 = vadd.f32 0.0, %v3013
        %3015 = vmatprep.mubr.bf16.mxu0 0
        %3016 = vmatmul.mubr.bf16.gmra.mrb[0].mxu0 %v711
        %v3017 = vpop.f32.mrb[0].mxu0
        %v3018 = vadd.f32 0.0, %v3017
        %v3019 = vpop.f32.mrb[0].mxu0
        %v3020 = vadd.f32 0.0, %v3019
        %v3021 = vpop.f32.mrb[0].mxu0
        %v3022 = vadd.f32 0.0, %v3021
        %v3023 = vpop.f32.mrb[0].mxu0
        %v3024 = vadd.f32 0.0, %v3023
        %3025 = vmatprep.mubr.bf16.mxu0 0
        %3026 = vmatmul.mubr.bf16.gmra.mrb[0].mxu0 %v714
        %v3027 = vpop.f32.mrb[0].mxu0
        %v3028 = vadd.f32 0.0, %v3027
        %v3029 = vpop.f32.mrb[0].mxu0
        %v3030 = vadd.f32 0.0, %v3029
        %v3031 = vpop.f32.mrb[0].mxu0
        %v3032 = vadd.f32 0.0, %v3031
        %v3033 = vpop.f32.mrb[0].mxu0
        %v3034 = vadd.f32 0.0, %v3033
        %3035 = vdwg.mxu0
        %v3036 = vadd.f32 %v2845, %v2958
        %v3037 = vadd.f32 %v2847, %v2960
        %v3038 = vadd.f32 %v2849, %v2962
        %v3039 = vadd.f32 %v2851, %v2964
        %v3040 = vadd.f32 %v2855, %v2968
        %v3041 = vadd.f32 %v2857, %v2970
        %v3042 = vadd.f32 %v2859, %v2972
        %v3043 = vadd.f32 %v2861, %v2974
        %v3044 = vadd.f32 %v2865, %v2978
        %v3045 = vadd.f32 %v2867, %v2980
        %v3046 = vadd.f32 %v2869, %v2982
        %v3047 = vadd.f32 %v2871, %v2984
        %v3048 = vadd.f32 %v2875, %v2988
        %v3049 = vadd.f32 %v2877, %v2990
        %v3050 = vadd.f32 %v2879, %v2992
        %v3051 = vadd.f32 %v2881, %v2994
        %v3052 = vadd.f32 %v2885, %v2998
        %v3053 = vadd.f32 %v2887, %v3000
        %v3054 = vadd.f32 %v2889, %v3002
        %v3055 = vadd.f32 %v2891, %v3004
        %v3056 = vadd.f32 %v2895, %v3008
        %v3057 = vadd.f32 %v2897, %v3010
        %v3058 = vadd.f32 %v2899, %v3012
        %v3059 = vadd.f32 %v2901, %v3014
        %v3060 = vadd.f32 %v2905, %v3018
        %v3061 = vadd.f32 %v2907, %v3020
        %v3062 = vadd.f32 %v2909, %v3022
        %v3063 = vadd.f32 %v2911, %v3024
        %v3064 = vadd.f32 %v2915, %v3028
        %v3065 = vadd.f32 %v2917, %v3030
        %v3066 = vadd.f32 %v2919, %v3032
        %v3067 = vadd.f32 %v2921, %v3034
        %v3068 = vmax.f32 %v3036, %v3040
        %v3069 = vmax.f32 %v3037, %v3041
        %v3070 = vmax.f32 %v3038, %v3042
        %v3071 = vmax.f32 %v3039, %v3043
        %v3072 = vmax.f32 %v3044, %v3048
        %v3073 = vmax.f32 %v3045, %v3049
        %v3074 = vmax.f32 %v3046, %v3050
        %v3075 = vmax.f32 %v3047, %v3051
        %v3076 = vmax.f32 %v3052, %v3056
        %v3077 = vmax.f32 %v3053, %v3057
        %v3078 = vmax.f32 %v3054, %v3058
        %v3079 = vmax.f32 %v3055, %v3059
        %v3080 = vmax.f32 %v3060, %v3064
        %v3081 = vmax.f32 %v3061, %v3065
        %v3082 = vmax.f32 %v3062, %v3066
        %v3083 = vmax.f32 %v3063, %v3067
        %v3084 = vmax.f32 %v3068, %v3072
        %v3085 = vmax.f32 %v3069, %v3073
        %v3086 = vmax.f32 %v3070, %v3074
        %v3087 = vmax.f32 %v3071, %v3075
        %v3088 = vmax.f32 %v3076, %v3080
        %v3089 = vmax.f32 %v3077, %v3081
        %v3090 = vmax.f32 %v3078, %v3082
        %v3091 = vmax.f32 %v3079, %v3083
        %v3092 = vmax.f32 %v3084, %v3088
        %v3093 = vmax.f32 %v3085, %v3089
        %v3094 = vmax.f32 %v3086, %v3090
        %v3095 = vmax.f32 %v3087, %v3091
        %v3096 = vadd.f32 %v3092, %v1005
        %v3097 = vadd.f32 %v3093, %v1005
        %v3098 = vadd.f32 %v3094, %v1010
        %v3099 = vadd.f32 %v3095, %v1010
        %v3100 = vmax.f32 %v3096, 0.0
        %v3101 = vmax.f32 %v3097, 0.0
        %v3102 = vmax.f32 %v3098, 0.0
        %v3103 = vmax.f32 %v3099, 0.0
        %3104 = vst [vmem:[%s316 + $0x40] sm:$0xff] %v3100
        %3105 = vst [vmem:[%s316 + $0x48] sm:$0xff] %v3101
        %3106 = vst [vmem:[%s316 + $0x90] sm:$0xff] %v3102
        %3107 = vst [vmem:[%s316 + $0x98] sm:$0xff] %v3103
        %s3108 = sand.u32 %s170, 1
        %s3109 = scalar_lea.sflag [#allocation4], %s3108
        %s3110 = sand.u32 %s170, 1
        %s3111 = smul.addr %s3110, 160
        %s3112 = scalar_lea.vmem [#allocation7], %s3111
        // Predicated region
        $region49: #{tpu_custom_call.1} parent=39 // pred_check
          %p3113 = pneg %p180
        $region50: #{tpu_custom_call.1} parent=39 // pred_check_branch
          %3115 = sbr.rel (%p3113) target = $region52
        $region51: #{tpu_custom_call.1} parent=39 // pred_region
          %s3116 = smul.u32 10, %s30
          %s3118 = ssub.s32 2560, 2560
          %3119 = vsyncadd %s3109, %s3118
          %s3120 = smul.addr %s29, 20
          %s3121 = sadd.s32 %s3116, %s3120
          %s3122 = smul.addr %s3121, 128
          %s3123 = scalar_lea.hbm %s5, %s3122
          %s3124 = sshll.u32 %s3112, 4
          %s3125 = int_to_ptr.vmem [resolvable:$true] %s3124
          %3130 = dma.vmem_to_hbm [thread:$0]  %s3125, 2560, %s3123, %s3109, 1280, 1280, 80
        $region52: #{tpu_custom_call.1} parent=39 // pred_fallthru
          _
      $region40: #{tpu_custom_call.1} parent=5 // pred_fallthru
        _
      %p3131 = scmp.le.s32.totalorder 2, %s20
      // Predicated region
      $region53: #{tpu_custom_call.1} parent=5 // pred_check
        %p3132 = pneg %p3131
      $region54: #{tpu_custom_call.1} parent=5 // pred_check_branch
        %3134 = sbr.rel (%p3132) target = $region56
      $region55: #{tpu_custom_call.1} parent=5 // pred_region
        %s3135 = ssub.s32 %s20, 2
        // Predicated region
        $region57: #{tpu_custom_call.1} parent=55 // pred_check
          %p3136 = pneg %p186
        $region58: #{tpu_custom_call.1} parent=55 // pred_check_branch
          %3138 = sbr.rel (%p3136) target = $region60
        $region59: #{tpu_custom_call.1} parent=55 // pred_region
          %s3139 = sand.u32 %s171, 1
          %s3140 = scalar_lea.sflag [#allocation4], %s3139
          %s3141 = sand.u32 %s171, 1
          %s3142 = smul.addr %s3141, 160
          %s3143 = scalar_lea.vmem [#allocation7], %s3142
          %3144 = dma.done %s3140, 2560
        $region60: #{tpu_custom_call.1} parent=55 // pred_fallthru
          _
      $region56: #{tpu_custom_call.1} parent=5 // pred_fallthru
        _
    $region6: #{tpu_custom_call.1} parent=1 // loop_footer
      %s24 = sadd.s32 1, %s20
    $region7: #{tpu_custom_call.1} parent=1 // loop_footer_branch
      %19 = sbr.rel target = $region3
    $region8: #{tpu_custom_call.1} parent=1 // loop_exit
      _
    %3145 = vsyncpa [#allocation3], 1
    %s3146 = scalar_lea.sflag [#allocation3], 1
    %3147 = vsyncpa %s3146, 1
    %3148 = vsyncpa [#allocation6], 1
    %s3149 = scalar_lea.sflag [#allocation6], 1
    %3150 = vsyncpa %s3149, 1
    %3151 = vsyncpa [#allocation4], 1
    %s3152 = scalar_lea.sflag [#allocation4], 1
    %3153 = vsyncpa %s3152, 1

</llo_original>
